<compile_context>
chip_gen: v7x
topology: tpu7x:2x2x1
jax: 0.10.0
libtpu: 0.0.40
codegen_flags: <defaults>
</compile_context>

<pallas_src>
import functools

import jax
import jax.numpy as jnp
from jax.experimental import pallas as pl
from jax.experimental.pallas import tpu as pltpu

_BN_EPS = 1e-5

# (Cin, Cout, K) per layer — matches the PyTorch module.
_LAYER_CFG = ((1, 16, 5), (16, 16, 5), (16, 32, 3),
              (32, 32, 3), (32, 64, 3), (64, 64, 3))
_ROW_OFF = tuple(int(sum(c[1] for c in _LAYER_CFG[:i]))
                 for i in range(len(_LAYER_CFG)))        # (0, 16, 32, 64, 96, 160)
_TOTAL_ROWS = int(sum(c[1] for c in _LAYER_CFG))         # 224
_MAX_KCIN = int(max(c[0] * c[2] for c in _LAYER_CFG))    # 192


# ----------------------------------------------------------------------------
# Fused kernel: 6 x (conv1d + BatchNorm(batch stats) + SiLU) in one invocation.
# ----------------------------------------------------------------------------
def _fused_cnn1d_kernel(x_ref, w_ref, p_ref, o_ref, rhs_ref, *, B, T0, eps):
    """x_ref:  (1, B*T0) f32     — input, batch folded onto lanes.
    w_ref:   (224, 192) bf16    — packed weights; layer l occupies rows
             [_ROW_OFF[l], _ROW_OFF[l]+Cout), cols [0, K*Cin), k-major.
    p_ref:   (224, 2) f32       — col 0 = BN gamma, col 1 = BN beta.
    o_ref:   (64, B*T_last) f32 — lane-dense output slab.
    rhs_ref: (192, max(B*To)) f32 scratch — per-layer im2col buffer.
    """
    h = x_ref[...]                                    # (Cin, B*T) f32 slab
    T = T0
    for li, (Cin, Cout, K) in enumerate(_LAYER_CFG):
        To = T - K + 1
        KCin = K * Cin
        off = _ROW_OFF[li]

        # ---- im2col: taps -> contraction rows, batch -> lanes --------------
        for b in range(B):
            for k in range(K):
                rhs_ref[k * Cin:(k + 1) * Cin, b * To:(b + 1) * To] = (
                    h[:, b * T + k: b * T + k + To])

        w2 = w_ref[off:off + Cout, 0:KCin]            # (Cout, K*Cin) bf16
        if Cin == 1:
            # Degenerate 5-deep contraction (first layer): cheaper as a few
            # broadcast FMAs on the VPU; stays in f32.
            w2f = w2.astype(jnp.float32)
            y = w2f[:, 0:1] * rhs_ref[0:1, 0:B * To]
            for k in range(1, K):
                y = y + w2f[:, k:k + 1] * rhs_ref[k:k + 1, 0:B * To]
        else:
            # ONE MXU matmul per layer; lane dim = B*To >= 128.
            rhs = rhs_ref[0:KCin, 0:B * To].astype(jnp.bfloat16)
            y = jnp.dot(w2, rhs, preferred_element_type=jnp.float32)
        # Conv bias intentionally omitted: training-mode BatchNorm subtracts
        # the batch mean next, so a per-channel constant cancels exactly.

        # ---- BatchNorm1d (batch statistics, two-pass) + SiLU ---------------
        inv_n = 1.0 / float(B * To)
        mean = jnp.sum(y, axis=1, keepdims=True) * inv_n          # (Cout, 1)
        d = y - mean
        var = jnp.sum(d * d, axis=1, keepdims=True) * inv_n       # (Cout, 1)
        gamma = p_ref[off:off + Cout, 0:1]
        beta = p_ref[off:off + Cout, 1:2]
        z = d * (gamma * jax.lax.rsqrt(var + eps)) + beta
        h = z * jax.nn.sigmoid(z)                                 # SiLU (EUP)
        T = To

    o_ref[...] = h                      # (64, B*T_last): one dense full store


# ----------------------------------------------------------------------------
# Wrapper: pack params once, call the fused kernel, unfold batch afterwards.
# ----------------------------------------------------------------------------
def pack_params(params):
    """Pack all conv weights (bf16) and BN gamma/beta (f32) into 2 buffers."""
    wbuf = jnp.zeros((_TOTAL_ROWS, _MAX_KCIN), jnp.bfloat16)
    pbuf = jnp.zeros((_TOTAL_ROWS, 2), jnp.float32)
    for lp, (cin, cout, k), off in zip(params, _LAYER_CFG, _ROW_OFF):
        # PyTorch conv weight (Cout, Cin, K) -> (Cout, K*Cin), k-major rows.
        w2 = jnp.transpose(lp["w"], (0, 2, 1)).reshape(cout, k * cin)
        wbuf = wbuf.at[off:off + cout, :k * cin].set(w2.astype(jnp.bfloat16))
        pbuf = pbuf.at[off:off + cout, 0].set(lp["gamma"])
        pbuf = pbuf.at[off:off + cout, 1].set(lp["beta"])
    return wbuf, pbuf


@jax.jit
def cnn1d_low_forward(x, wbuf, pbuf):
    """x: (B, 1, T0) f32 -> (B, 64, T0 - 16) f32, as one fused pallas_call."""
    B, cin0, T0 = x.shape
    assert cin0 == 1
    T_last = T0 - sum(k - 1 for (_, _, k) in _LAYER_CFG)
    C_last = _LAYER_CFG[-1][1]

    t, max_cols = T0, 0
    for (_, _, k) in _LAYER_CFG:
        t -= k - 1
        max_cols = max(max_cols, B * t)

    kernel = functools.partial(_fused_cnn1d_kernel, B=B, T0=T0, eps=_BN_EPS)
    out = pl.pallas_call(
        kernel,
        out_shape=jax.ShapeDtypeStruct((C_last, B * T_last), jnp.float32),
        in_specs=[pl.BlockSpec(memory_space=pltpu.MemorySpace.VMEM)] * 3,
        out_specs=pl.BlockSpec(memory_space=pltpu.MemorySpace.VMEM),
        scratch_shapes=[pltpu.VMEM((_MAX_KCIN, max_cols), jnp.float32)],
    )(x.reshape(1, B * T0).astype(jnp.float32), wbuf, pbuf)
    # (C, B*T_last) -> (B, C, T_last) layout plumbing done by XLA.
    return out.reshape(C_last, B, T_last).transpose(1, 0, 2)


# ----------------------------------------------------------------------------
# Pure-JAX reference (mirrors the kernel's bf16 MXU path; keeps the conv bias
# to validate that training-mode BN cancels it).
# ----------------------------------------------------------------------------
def _reference_forward(x, params, eps=_BN_EPS):
    h = x.astype(jnp.float32)
    for lp in params:
        w = lp["w"]                                    # (Cout, Cin, K)
        Cout, Cin, K = w.shape
        B = h.shape[0]
        To = h.shape[2] - K + 1
        acc = jnp.zeros((B, Cout, To), jnp.float32)
        for k in range(K):
            wk = w[:, :, k]
            xk = h[:, :, k:k + To]
            if Cin == 1:
                acc = acc + jnp.einsum(
                    "oc,bct->bot",
                    wk.astype(jnp.bfloat16).astype(jnp.float32), xk)
            else:
                acc = acc + jnp.einsum(
                    "oc,bct->bot",
                    wk.astype(jnp.bfloat16), xk.astype(jnp.bfloat16),
                    preferred_element_type=jnp.float32)
        y = acc + lp["b"].reshape(1, Cout, 1)
        mean = jnp.mean(y, axis=(0, 2), keepdims=True)
        var = jnp.mean((y - mean) ** 2, axis=(0, 2), keepdims=True)
        z = ((y - mean) * (lp["gamma"].reshape(1, Cout, 1)
                           * jax.lax.rsqrt(var + eps))
             + lp["beta"].reshape(1, Cout, 1))
        h = z * jax.nn.sigmoid(z)
    return h


# ----------------------------------------------------------------------------
# Deterministic parameter init (PyTorch-style conv init, default BN params).
# ----------------------------------------------------------------------------
def init_params(key):
    params = []
    keys = jax.random.split(key, len(_LAYER_CFG))
    for (cin, cout, k), kk in zip(_LAYER_CFG, keys):
        k1, k2 = jax.random.split(kk)
        bound = 1.0 / (cin * k) ** 0.5
        params.append(dict(
            w=jax.random.uniform(k1, (cout, cin, k), jnp.float32,
                                 -bound, bound),
            b=jax.random.uniform(k2, (cout,), jnp.float32, -bound, bound),
            gamma=jnp.ones((cout,), jnp.float32),   # nn.BatchNorm1d defaults
            beta=jnp.zeros((cout,), jnp.float32),
        ))
    return params


# ----------------------------------------------------------------------------
if __name__ == "__main__":
    key = jax.random.PRNGKey(0)
    kx, kp = jax.random.split(key)
    B, L = 2, 80                        # "low" branch slice length
    x = jax.random.normal(kx, (B, 1, L), jnp.float32)
    params = init_params(kp)
    wbuf, pbuf = pack_params(params)    # one-time packing (outside the kernel)

    out = jax.block_until_ready(cnn1d_low_forward(x, wbuf, pbuf))
    assert out.shape == (B, 64, L - 16), out.shape
    assert bool(jnp.all(jnp.isfinite(out)))

    ref = jax.block_until_ready(_reference_forward(x, params))
    err = float(jnp.max(jnp.abs(out - ref)))
    assert bool(jnp.allclose(out, ref, atol=5e-2, rtol=5e-2)), err

    print("KERNEL_OK")
</pallas_src>

<mosaic_0001>
module attributes {stable_mosaic.version = 11 : i64} {
  func.func @_fused_cnn1d_kernel(%arg0: memref<1x160xf32, #tpu.memory_space<vmem>>, %arg1: memref<224x192xbf16, #tpu.memory_space<vmem>>, %arg2: memref<224x2xf32, #tpu.memory_space<vmem>>, %arg3: memref<64x128xf32, #tpu.memory_space<vmem>>, %arg4: memref<192x152xf32, #tpu.memory_space<vmem>>) attributes {dimension_semantics = [], scalar_prefetch = 0 : i64, scratch_operands = 1 : i64, tpu.core_type = #tpu.core_type<tc>} {
    %c0 = arith.constant 0 : index
    %c0_0 = arith.constant 0 : index
    %0 = vector.load %arg0[%c0, %c0_0] : memref<1x160xf32, #tpu.memory_space<vmem>>, vector<1x160xf32>
    %1 = vector.extract_strided_slice %0 {offsets = [0, 0], sizes = [1, 76], strides = [1, 1]} : vector<1x160xf32> to vector<1x76xf32>
    %c0_1 = arith.constant 0 : index
    %c0_2 = arith.constant 0 : index
    %2 = vector.load %arg4[%c0_1, %c0_2] : memref<192x152xf32, #tpu.memory_space<vmem>>, vector<1x76xf32>
    tpu.vector_store %arg4[%c0_1, %c0_2], %1 {strides = array<i32>} : memref<192x152xf32, #tpu.memory_space<vmem>>, vector<1x76xf32>,
    %3 = vector.extract_strided_slice %0 {offsets = [0, 1], sizes = [1, 76], strides = [1, 1]} : vector<1x160xf32> to vector<1x76xf32>
    %c1 = arith.constant 1 : index
    %c0_3 = arith.constant 0 : index
    %4 = vector.load %arg4[%c1, %c0_3] : memref<192x152xf32, #tpu.memory_space<vmem>>, vector<1x76xf32>
    tpu.vector_store %arg4[%c1, %c0_3], %3 {strides = array<i32>} : memref<192x152xf32, #tpu.memory_space<vmem>>, vector<1x76xf32>,
    %5 = vector.extract_strided_slice %0 {offsets = [0, 2], sizes = [1, 76], strides = [1, 1]} : vector<1x160xf32> to vector<1x76xf32>
    %c2 = arith.constant 2 : index
    %c0_4 = arith.constant 0 : index
    %6 = vector.load %arg4[%c2, %c0_4] : memref<192x152xf32, #tpu.memory_space<vmem>>, vector<1x76xf32>
    tpu.vector_store %arg4[%c2, %c0_4], %5 {strides = array<i32>} : memref<192x152xf32, #tpu.memory_space<vmem>>, vector<1x76xf32>,
    %7 = vector.extract_strided_slice %0 {offsets = [0, 3], sizes = [1, 76], strides = [1, 1]} : vector<1x160xf32> to vector<1x76xf32>
    %c3 = arith.constant 3 : index
    %c0_5 = arith.constant 0 : index
    %8 = vector.load %arg4[%c3, %c0_5] : memref<192x152xf32, #tpu.memory_space<vmem>>, vector<1x76xf32>
    tpu.vector_store %arg4[%c3, %c0_5], %7 {strides = array<i32>} : memref<192x152xf32, #tpu.memory_space<vmem>>, vector<1x76xf32>,
    %9 = vector.extract_strided_slice %0 {offsets = [0, 4], sizes = [1, 76], strides = [1, 1]} : vector<1x160xf32> to vector<1x76xf32>
    %c4 = arith.constant 4 : index
    %c0_6 = arith.constant 0 : index
    %10 = vector.load %arg4[%c4, %c0_6] : memref<192x152xf32, #tpu.memory_space<vmem>>, vector<1x76xf32>
    tpu.vector_store %arg4[%c4, %c0_6], %9 {strides = array<i32>} : memref<192x152xf32, #tpu.memory_space<vmem>>, vector<1x76xf32>,
    %11 = vector.extract_strided_slice %0 {offsets = [0, 80], sizes = [1, 76], strides = [1, 1]} : vector<1x160xf32> to vector<1x76xf32>
    %c0_7 = arith.constant 0 : index
    %c76 = arith.constant 76 : index
    %12 = vector.load %arg4[%c0_7, %c76] : memref<192x152xf32, #tpu.memory_space<vmem>>, vector<1x76xf32>
    tpu.vector_store %arg4[%c0_7, %c76], %11 {strides = array<i32>} : memref<192x152xf32, #tpu.memory_space<vmem>>, vector<1x76xf32>,
    %13 = vector.extract_strided_slice %0 {offsets = [0, 81], sizes = [1, 76], strides = [1, 1]} : vector<1x160xf32> to vector<1x76xf32>
    %c1_8 = arith.constant 1 : index
    %c76_9 = arith.constant 76 : index
    %14 = vector.load %arg4[%c1_8, %c76_9] : memref<192x152xf32, #tpu.memory_space<vmem>>, vector<1x76xf32>
    tpu.vector_store %arg4[%c1_8, %c76_9], %13 {strides = array<i32>} : memref<192x152xf32, #tpu.memory_space<vmem>>, vector<1x76xf32>,
    %15 = vector.extract_strided_slice %0 {offsets = [0, 82], sizes = [1, 76], strides = [1, 1]} : vector<1x160xf32> to vector<1x76xf32>
    %c2_10 = arith.constant 2 : index
    %c76_11 = arith.constant 76 : index
    %16 = vector.load %arg4[%c2_10, %c76_11] : memref<192x152xf32, #tpu.memory_space<vmem>>, vector<1x76xf32>
    tpu.vector_store %arg4[%c2_10, %c76_11], %15 {strides = array<i32>} : memref<192x152xf32, #tpu.memory_space<vmem>>, vector<1x76xf32>,
    %17 = vector.extract_strided_slice %0 {offsets = [0, 83], sizes = [1, 76], strides = [1, 1]} : vector<1x160xf32> to vector<1x76xf32>
    %c3_12 = arith.constant 3 : index
    %c76_13 = arith.constant 76 : index
    %18 = vector.load %arg4[%c3_12, %c76_13] : memref<192x152xf32, #tpu.memory_space<vmem>>, vector<1x76xf32>
    tpu.vector_store %arg4[%c3_12, %c76_13], %17 {strides = array<i32>} : memref<192x152xf32, #tpu.memory_space<vmem>>, vector<1x76xf32>,
    %19 = vector.extract_strided_slice %0 {offsets = [0, 84], sizes = [1, 76], strides = [1, 1]} : vector<1x160xf32> to vector<1x76xf32>
    %c4_14 = arith.constant 4 : index
    %c76_15 = arith.constant 76 : index
    %20 = vector.load %arg4[%c4_14, %c76_15] : memref<192x152xf32, #tpu.memory_space<vmem>>, vector<1x76xf32>
    tpu.vector_store %arg4[%c4_14, %c76_15], %19 {strides = array<i32>} : memref<192x152xf32, #tpu.memory_space<vmem>>, vector<1x76xf32>,
    %c0_16 = arith.constant 0 : index
    %c0_17 = arith.constant 0 : index
    %21 = vector.load %arg1[%c0_16, %c0_17] : memref<224x192xbf16, #tpu.memory_space<vmem>>, vector<16x5xbf16>
    %22 = arith.extf %21 : vector<16x5xbf16> to vector<16x5xf32>
    %23 = vector.extract_strided_slice %22 {offsets = [0, 0], sizes = [16, 1], strides = [1, 1]} : vector<16x5xf32> to vector<16x1xf32>
    %c0_18 = arith.constant 0 : index
    %c0_19 = arith.constant 0 : index
    %24 = vector.load %arg4[%c0_18, %c0_19] : memref<192x152xf32, #tpu.memory_space<vmem>>, vector<1x152xf32>
    %25 = vector.broadcast %23 : vector<16x1xf32> to vector<16x152xf32>
    %26 = vector.broadcast %24 : vector<1x152xf32> to vector<16x152xf32>
    %27 = arith.mulf %25, %26 : vector<16x152xf32>
    %28 = vector.extract_strided_slice %22 {offsets = [0, 1], sizes = [16, 1], strides = [1, 1]} : vector<16x5xf32> to vector<16x1xf32>
    %c1_20 = arith.constant 1 : index
    %c0_21 = arith.constant 0 : index
    %29 = vector.load %arg4[%c1_20, %c0_21] : memref<192x152xf32, #tpu.memory_space<vmem>>, vector<1x152xf32>
    %30 = vector.broadcast %28 : vector<16x1xf32> to vector<16x152xf32>
    %31 = vector.broadcast %29 : vector<1x152xf32> to vector<16x152xf32>
    %32 = arith.mulf %30, %31 : vector<16x152xf32>
    %33 = arith.addf %27, %32 : vector<16x152xf32>
    %34 = vector.extract_strided_slice %22 {offsets = [0, 2], sizes = [16, 1], strides = [1, 1]} : vector<16x5xf32> to vector<16x1xf32>
    %c2_22 = arith.constant 2 : index
    %c0_23 = arith.constant 0 : index
    %35 = vector.load %arg4[%c2_22, %c0_23] : memref<192x152xf32, #tpu.memory_space<vmem>>, vector<1x152xf32>
    %36 = vector.broadcast %34 : vector<16x1xf32> to vector<16x152xf32>
    %37 = vector.broadcast %35 : vector<1x152xf32> to vector<16x152xf32>
    %38 = arith.mulf %36, %37 : vector<16x152xf32>
    %39 = arith.addf %33, %38 : vector<16x152xf32>
    %40 = vector.extract_strided_slice %22 {offsets = [0, 3], sizes = [16, 1], strides = [1, 1]} : vector<16x5xf32> to vector<16x1xf32>
    %c3_24 = arith.constant 3 : index
    %c0_25 = arith.constant 0 : index
    %41 = vector.load %arg4[%c3_24, %c0_25] : memref<192x152xf32, #tpu.memory_space<vmem>>, vector<1x152xf32>
    %42 = vector.broadcast %40 : vector<16x1xf32> to vector<16x152xf32>
    %43 = vector.broadcast %41 : vector<1x152xf32> to vector<16x152xf32>
    %44 = arith.mulf %42, %43 : vector<16x152xf32>
    %45 = arith.addf %39, %44 : vector<16x152xf32>
    %46 = vector.extract_strided_slice %22 {offsets = [0, 4], sizes = [16, 1], strides = [1, 1]} : vector<16x5xf32> to vector<16x1xf32>
    %c4_26 = arith.constant 4 : index
    %c0_27 = arith.constant 0 : index
    %47 = vector.load %arg4[%c4_26, %c0_27] : memref<192x152xf32, #tpu.memory_space<vmem>>, vector<1x152xf32>
    %48 = vector.broadcast %46 : vector<16x1xf32> to vector<16x152xf32>
    %49 = vector.broadcast %47 : vector<1x152xf32> to vector<16x152xf32>
    %50 = arith.mulf %48, %49 : vector<16x152xf32>
    %51 = arith.addf %45, %50 : vector<16x152xf32>
    %cst = arith.constant dense<0.000000e+00> : vector<16xf32>
    %52 = vector.multi_reduction <add>, %51, %cst [1] : vector<16x152xf32> to vector<16xf32>
    %53 = vector.shape_cast %52 : vector<16xf32> to vector<16x1xf32>
    %cst_28 = arith.constant 0.00657894742 : f32
    %54 = vector.broadcast %cst_28 : f32 to vector<16x1xf32>
    %55 = arith.mulf %53, %54 : vector<16x1xf32>
    %56 = vector.broadcast %55 : vector<16x1xf32> to vector<16x152xf32>
    %57 = arith.subf %51, %56 : vector<16x152xf32>
    %58 = arith.mulf %57, %57 : vector<16x152xf32>
    %cst_29 = arith.constant dense<0.000000e+00> : vector<16xf32>
    %59 = vector.multi_reduction <add>, %58, %cst_29 [1] : vector<16x152xf32> to vector<16xf32>
    %60 = vector.shape_cast %59 : vector<16xf32> to vector<16x1xf32>
    %cst_30 = arith.constant 0.00657894742 : f32
    %61 = vector.broadcast %cst_30 : f32 to vector<16x1xf32>
    %62 = arith.mulf %60, %61 : vector<16x1xf32>
    %c0_31 = arith.constant 0 : index
    %c0_32 = arith.constant 0 : index
    %63 = vector.load %arg2[%c0_31, %c0_32] : memref<224x2xf32, #tpu.memory_space<vmem>>, vector<16x1xf32>
    %c0_33 = arith.constant 0 : index
    %c1_34 = arith.constant 1 : index
    %64 = vector.load %arg2[%c0_33, %c1_34] : memref<224x2xf32, #tpu.memory_space<vmem>>, vector<16x1xf32>
    %cst_35 = arith.constant 9.99999974E-6 : f32
    %65 = vector.broadcast %cst_35 : f32 to vector<16x1xf32>
    %66 = arith.addf %62, %65 : vector<16x1xf32>
    %67 = math.rsqrt %66 : vector<16x1xf32>
    %68 = arith.mulf %63, %67 : vector<16x1xf32>
    %69 = vector.broadcast %68 : vector<16x1xf32> to vector<16x152xf32>
    %70 = arith.mulf %57, %69 : vector<16x152xf32>
    %71 = vector.broadcast %64 : vector<16x1xf32> to vector<16x152xf32>
    %72 = arith.addf %70, %71 : vector<16x152xf32>
    %73 = arith.negf %72 : vector<16x152xf32>
    %74 = math.exp %73 : vector<16x152xf32>
    %cst_36 = arith.constant 1.000000e+00 : f32
    %75 = vector.broadcast %cst_36 : f32 to vector<16x152xf32>
    %76 = arith.addf %75, %74 : vector<16x152xf32>
    %77 = arith.divf %75, %76 : vector<16x152xf32>
    %78 = arith.mulf %72, %77 : vector<16x152xf32>
    %79 = vector.extract_strided_slice %78 {offsets = [0, 0], sizes = [16, 72], strides = [1, 1]} : vector<16x152xf32> to vector<16x72xf32>
    %c0_37 = arith.constant 0 : index
    %c0_38 = arith.constant 0 : index
    %80 = vector.load %arg4[%c0_37, %c0_38] : memref<192x152xf32, #tpu.memory_space<vmem>>, vector<16x72xf32>
    tpu.vector_store %arg4[%c0_37, %c0_38], %79 {strides = array<i32>} : memref<192x152xf32, #tpu.memory_space<vmem>>, vector<16x72xf32>,
    %81 = vector.extract_strided_slice %78 {offsets = [0, 1], sizes = [16, 72], strides = [1, 1]} : vector<16x152xf32> to vector<16x72xf32>
    %c16 = arith.constant 16 : index
    %c0_39 = arith.constant 0 : index
    %82 = vector.load %arg4[%c16, %c0_39] : memref<192x152xf32, #tpu.memory_space<vmem>>, vector<16x72xf32>
    tpu.vector_store %arg4[%c16, %c0_39], %81 {strides = array<i32>} : memref<192x152xf32, #tpu.memory_space<vmem>>, vector<16x72xf32>,
    %83 = vector.extract_strided_slice %78 {offsets = [0, 2], sizes = [16, 72], strides = [1, 1]} : vector<16x152xf32> to vector<16x72xf32>
    %c32 = arith.constant 32 : index
    %c0_40 = arith.constant 0 : index
    %84 = vector.load %arg4[%c32, %c0_40] : memref<192x152xf32, #tpu.memory_space<vmem>>, vector<16x72xf32>
    tpu.vector_store %arg4[%c32, %c0_40], %83 {strides = array<i32>} : memref<192x152xf32, #tpu.memory_space<vmem>>, vector<16x72xf32>,
    %85 = vector.extract_strided_slice %78 {offsets = [0, 3], sizes = [16, 72], strides = [1, 1]} : vector<16x152xf32> to vector<16x72xf32>
    %c48 = arith.constant 48 : index
    %c0_41 = arith.constant 0 : index
    %86 = vector.load %arg4[%c48, %c0_41] : memref<192x152xf32, #tpu.memory_space<vmem>>, vector<16x72xf32>
    tpu.vector_store %arg4[%c48, %c0_41], %85 {strides = array<i32>} : memref<192x152xf32, #tpu.memory_space<vmem>>, vector<16x72xf32>,
    %87 = vector.extract_strided_slice %78 {offsets = [0, 4], sizes = [16, 72], strides = [1, 1]} : vector<16x152xf32> to vector<16x72xf32>
    %c64 = arith.constant 64 : index
    %c0_42 = arith.constant 0 : index
    %88 = vector.load %arg4[%c64, %c0_42] : memref<192x152xf32, #tpu.memory_space<vmem>>, vector<16x72xf32>
    tpu.vector_store %arg4[%c64, %c0_42], %87 {strides = array<i32>} : memref<192x152xf32, #tpu.memory_space<vmem>>, vector<16x72xf32>,
    %89 = vector.extract_strided_slice %78 {offsets = [0, 76], sizes = [16, 72], strides = [1, 1]} : vector<16x152xf32> to vector<16x72xf32>
    %c0_43 = arith.constant 0 : index
    %c72 = arith.constant 72 : index
    %90 = vector.load %arg4[%c0_43, %c72] : memref<192x152xf32, #tpu.memory_space<vmem>>, vector<16x72xf32>
    tpu.vector_store %arg4[%c0_43, %c72], %89 {strides = array<i32>} : memref<192x152xf32, #tpu.memory_space<vmem>>, vector<16x72xf32>,
    %91 = vector.extract_strided_slice %78 {offsets = [0, 77], sizes = [16, 72], strides = [1, 1]} : vector<16x152xf32> to vector<16x72xf32>
    %c16_44 = arith.constant 16 : index
    %c72_45 = arith.constant 72 : index
    %92 = vector.load %arg4[%c16_44, %c72_45] : memref<192x152xf32, #tpu.memory_space<vmem>>, vector<16x72xf32>
    tpu.vector_store %arg4[%c16_44, %c72_45], %91 {strides = array<i32>} : memref<192x152xf32, #tpu.memory_space<vmem>>, vector<16x72xf32>,
    %93 = vector.extract_strided_slice %78 {offsets = [0, 78], sizes = [16, 72], strides = [1, 1]} : vector<16x152xf32> to vector<16x72xf32>
    %c32_46 = arith.constant 32 : index
    %c72_47 = arith.constant 72 : index
    %94 = vector.load %arg4[%c32_46, %c72_47] : memref<192x152xf32, #tpu.memory_space<vmem>>, vector<16x72xf32>
    tpu.vector_store %arg4[%c32_46, %c72_47], %93 {strides = array<i32>} : memref<192x152xf32, #tpu.memory_space<vmem>>, vector<16x72xf32>,
    %95 = vector.extract_strided_slice %78 {offsets = [0, 79], sizes = [16, 72], strides = [1, 1]} : vector<16x152xf32> to vector<16x72xf32>
    %c48_48 = arith.constant 48 : index
    %c72_49 = arith.constant 72 : index
    %96 = vector.load %arg4[%c48_48, %c72_49] : memref<192x152xf32, #tpu.memory_space<vmem>>, vector<16x72xf32>
    tpu.vector_store %arg4[%c48_48, %c72_49], %95 {strides = array<i32>} : memref<192x152xf32, #tpu.memory_space<vmem>>, vector<16x72xf32>,
    %97 = vector.extract_strided_slice %78 {offsets = [0, 80], sizes = [16, 72], strides = [1, 1]} : vector<16x152xf32> to vector<16x72xf32>
    %c64_50 = arith.constant 64 : index
    %c72_51 = arith.constant 72 : index
    %98 = vector.load %arg4[%c64_50, %c72_51] : memref<192x152xf32, #tpu.memory_space<vmem>>, vector<16x72xf32>
    tpu.vector_store %arg4[%c64_50, %c72_51], %97 {strides = array<i32>} : memref<192x152xf32, #tpu.memory_space<vmem>>, vector<16x72xf32>,
    %c16_52 = arith.constant 16 : index
    %c0_53 = arith.constant 0 : index
    %99 = vector.load %arg1[%c16_52, %c0_53] : memref<224x192xbf16, #tpu.memory_space<vmem>>, vector<16x80xbf16>
    %c0_54 = arith.constant 0 : index
    %c0_55 = arith.constant 0 : index
    %100 = vector.load %arg4[%c0_54, %c0_55] : memref<192x152xf32, #tpu.memory_space<vmem>>, vector<80x144xf32>
    %101 = arith.truncf %100 : vector<80x144xf32> to vector<80x144xbf16>
    %cst_56 = arith.constant dense<0.000000e+00> : vector<16x144xf32>
    %102 = tpu.matmul %99, %101, %cst_56 {dimension_numbers = #tpu.dot_dimension_numbers<[1], [0], [0], [1], [0, 0, 1, 1], [], []>} : vector<16x80xbf16>, vector<80x144xbf16>, vector<16x144xf32> -> vector<16x144xf32>
    %cst_57 = arith.constant dense<0.000000e+00> : vector<16xf32>
    %103 = vector.multi_reduction <add>, %102, %cst_57 [1] : vector<16x144xf32> to vector<16xf32>
    %104 = vector.shape_cast %103 : vector<16xf32> to vector<16x1xf32>
    %cst_58 = arith.constant 0.0069444445 : f32
    %105 = vector.broadcast %cst_58 : f32 to vector<16x1xf32>
    %106 = arith.mulf %104, %105 : vector<16x1xf32>
    %107 = vector.broadcast %106 : vector<16x1xf32> to vector<16x144xf32>
    %108 = arith.subf %102, %107 : vector<16x144xf32>
    %109 = arith.mulf %108, %108 : vector<16x144xf32>
    %cst_59 = arith.constant dense<0.000000e+00> : vector<16xf32>
    %110 = vector.multi_reduction <add>, %109, %cst_59 [1] : vector<16x144xf32> to vector<16xf32>
    %111 = vector.shape_cast %110 : vector<16xf32> to vector<16x1xf32>
    %cst_60 = arith.constant 0.0069444445 : f32
    %112 = vector.broadcast %cst_60 : f32 to vector<16x1xf32>
    %113 = arith.mulf %111, %112 : vector<16x1xf32>
    %c16_61 = arith.constant 16 : index
    %c0_62 = arith.constant 0 : index
    %114 = vector.load %arg2[%c16_61, %c0_62] : memref<224x2xf32, #tpu.memory_space<vmem>>, vector<16x1xf32>
    %c16_63 = arith.constant 16 : index
    %c1_64 = arith.constant 1 : index
    %115 = vector.load %arg2[%c16_63, %c1_64] : memref<224x2xf32, #tpu.memory_space<vmem>>, vector<16x1xf32>
    %cst_65 = arith.constant 9.99999974E-6 : f32
    %116 = vector.broadcast %cst_65 : f32 to vector<16x1xf32>
    %117 = arith.addf %113, %116 : vector<16x1xf32>
    %118 = math.rsqrt %117 : vector<16x1xf32>
    %119 = arith.mulf %114, %118 : vector<16x1xf32>
    %120 = vector.broadcast %119 : vector<16x1xf32> to vector<16x144xf32>
    %121 = arith.mulf %108, %120 : vector<16x144xf32>
    %122 = vector.broadcast %115 : vector<16x1xf32> to vector<16x144xf32>
    %123 = arith.addf %121, %122 : vector<16x144xf32>
    %124 = arith.negf %123 : vector<16x144xf32>
    %125 = math.exp %124 : vector<16x144xf32>
    %cst_66 = arith.constant 1.000000e+00 : f32
    %126 = vector.broadcast %cst_66 : f32 to vector<16x144xf32>
    %127 = arith.addf %126, %125 : vector<16x144xf32>
    %128 = arith.divf %126, %127 : vector<16x144xf32>
    %129 = arith.mulf %123, %128 : vector<16x144xf32>
    %130 = vector.extract_strided_slice %129 {offsets = [0, 0], sizes = [16, 70], strides = [1, 1]} : vector<16x144xf32> to vector<16x70xf32>
    %c0_67 = arith.constant 0 : index
    %c0_68 = arith.constant 0 : index
    %131 = vector.load %arg4[%c0_67, %c0_68] : memref<192x152xf32, #tpu.memory_space<vmem>>, vector<16x70xf32>
    tpu.vector_store %arg4[%c0_67, %c0_68], %130 {strides = array<i32>} : memref<192x152xf32, #tpu.memory_space<vmem>>, vector<16x70xf32>,
    %132 = vector.extract_strided_slice %129 {offsets = [0, 1], sizes = [16, 70], strides = [1, 1]} : vector<16x144xf32> to vector<16x70xf32>
    %c16_69 = arith.constant 16 : index
    %c0_70 = arith.constant 0 : index
    %133 = vector.load %arg4[%c16_69, %c0_70] : memref<192x152xf32, #tpu.memory_space<vmem>>, vector<16x70xf32>
    tpu.vector_store %arg4[%c16_69, %c0_70], %132 {strides = array<i32>} : memref<192x152xf32, #tpu.memory_space<vmem>>, vector<16x70xf32>,
    %134 = vector.extract_strided_slice %129 {offsets = [0, 2], sizes = [16, 70], strides = [1, 1]} : vector<16x144xf32> to vector<16x70xf32>
    %c32_71 = arith.constant 32 : index
    %c0_72 = arith.constant 0 : index
    %135 = vector.load %arg4[%c32_71, %c0_72] : memref<192x152xf32, #tpu.memory_space<vmem>>, vector<16x70xf32>
    tpu.vector_store %arg4[%c32_71, %c0_72], %134 {strides = array<i32>} : memref<192x152xf32, #tpu.memory_space<vmem>>, vector<16x70xf32>,
    %136 = vector.extract_strided_slice %129 {offsets = [0, 72], sizes = [16, 70], strides = [1, 1]} : vector<16x144xf32> to vector<16x70xf32>
    %c0_73 = arith.constant 0 : index
    %c70 = arith.constant 70 : index
    %137 = vector.load %arg4[%c0_73, %c70] : memref<192x152xf32, #tpu.memory_space<vmem>>, vector<16x70xf32>
    tpu.vector_store %arg4[%c0_73, %c70], %136 {strides = array<i32>} : memref<192x152xf32, #tpu.memory_space<vmem>>, vector<16x70xf32>,
    %138 = vector.extract_strided_slice %129 {offsets = [0, 73], sizes = [16, 70], strides = [1, 1]} : vector<16x144xf32> to vector<16x70xf32>
    %c16_74 = arith.constant 16 : index
    %c70_75 = arith.constant 70 : index
    %139 = vector.load %arg4[%c16_74, %c70_75] : memref<192x152xf32, #tpu.memory_space<vmem>>, vector<16x70xf32>
    tpu.vector_store %arg4[%c16_74, %c70_75], %138 {strides = array<i32>} : memref<192x152xf32, #tpu.memory_space<vmem>>, vector<16x70xf32>,
    %140 = vector.extract_strided_slice %129 {offsets = [0, 74], sizes = [16, 70], strides = [1, 1]} : vector<16x144xf32> to vector<16x70xf32>
    %c32_76 = arith.constant 32 : index
    %c70_77 = arith.constant 70 : index
    %141 = vector.load %arg4[%c32_76, %c70_77] : memref<192x152xf32, #tpu.memory_space<vmem>>, vector<16x70xf32>
    tpu.vector_store %arg4[%c32_76, %c70_77], %140 {strides = array<i32>} : memref<192x152xf32, #tpu.memory_space<vmem>>, vector<16x70xf32>,
    %c32_78 = arith.constant 32 : index
    %c0_79 = arith.constant 0 : index
    %142 = vector.load %arg1[%c32_78, %c0_79] : memref<224x192xbf16, #tpu.memory_space<vmem>>, vector<32x48xbf16>
    %c0_80 = arith.constant 0 : index
    %c0_81 = arith.constant 0 : index
    %143 = vector.load %arg4[%c0_80, %c0_81] : memref<192x152xf32, #tpu.memory_space<vmem>>, vector<48x140xf32>
    %144 = arith.truncf %143 : vector<48x140xf32> to vector<48x140xbf16>
    %cst_82 = arith.constant dense<0.000000e+00> : vector<32x140xf32>
    %145 = tpu.matmul %142, %144, %cst_82 {dimension_numbers = #tpu.dot_dimension_numbers<[1], [0], [0], [1], [0, 0, 1, 1], [], []>} : vector<32x48xbf16>, vector<48x140xbf16>, vector<32x140xf32> -> vector<32x140xf32>
    %cst_83 = arith.constant dense<0.000000e+00> : vector<32xf32>
    %146 = vector.multi_reduction <add>, %145, %cst_83 [1] : vector<32x140xf32> to vector<32xf32>
    %147 = vector.shape_cast %146 : vector<32xf32> to vector<32x1xf32>
    %cst_84 = arith.constant 0.00714285718 : f32
    %148 = vector.broadcast %cst_84 : f32 to vector<32x1xf32>
    %149 = arith.mulf %147, %148 : vector<32x1xf32>
    %150 = vector.broadcast %149 : vector<32x1xf32> to vector<32x140xf32>
    %151 = arith.subf %145, %150 : vector<32x140xf32>
    %152 = arith.mulf %151, %151 : vector<32x140xf32>
    %cst_85 = arith.constant dense<0.000000e+00> : vector<32xf32>
    %153 = vector.multi_reduction <add>, %152, %cst_85 [1] : vector<32x140xf32> to vector<32xf32>
    %154 = vector.shape_cast %153 : vector<32xf32> to vector<32x1xf32>
    %cst_86 = arith.constant 0.00714285718 : f32
    %155 = vector.broadcast %cst_86 : f32 to vector<32x1xf32>
    %156 = arith.mulf %154, %155 : vector<32x1xf32>
    %c32_87 = arith.constant 32 : index
    %c0_88 = arith.constant 0 : index
    %157 = vector.load %arg2[%c32_87, %c0_88] : memref<224x2xf32, #tpu.memory_space<vmem>>, vector<32x1xf32>
    %c32_89 = arith.constant 32 : index
    %c1_90 = arith.constant 1 : index
    %158 = vector.load %arg2[%c32_89, %c1_90] : memref<224x2xf32, #tpu.memory_space<vmem>>, vector<32x1xf32>
    %cst_91 = arith.constant 9.99999974E-6 : f32
    %159 = vector.broadcast %cst_91 : f32 to vector<32x1xf32>
    %160 = arith.addf %156, %159 : vector<32x1xf32>
    %161 = math.rsqrt %160 : vector<32x1xf32>
    %162 = arith.mulf %157, %161 : vector<32x1xf32>
    %163 = vector.broadcast %162 : vector<32x1xf32> to vector<32x140xf32>
    %164 = arith.mulf %151, %163 : vector<32x140xf32>
    %165 = vector.broadcast %158 : vector<32x1xf32> to vector<32x140xf32>
    %166 = arith.addf %164, %165 : vector<32x140xf32>
    %167 = arith.negf %166 : vector<32x140xf32>
    %168 = math.exp %167 : vector<32x140xf32>
    %cst_92 = arith.constant 1.000000e+00 : f32
    %169 = vector.broadcast %cst_92 : f32 to vector<32x140xf32>
    %170 = arith.addf %169, %168 : vector<32x140xf32>
    %171 = arith.divf %169, %170 : vector<32x140xf32>
    %172 = arith.mulf %166, %171 : vector<32x140xf32>
    %173 = vector.extract_strided_slice %172 {offsets = [0, 0], sizes = [32, 68], strides = [1, 1]} : vector<32x140xf32> to vector<32x68xf32>
    %c0_93 = arith.constant 0 : index
    %c0_94 = arith.constant 0 : index
    %174 = vector.load %arg4[%c0_93, %c0_94] : memref<192x152xf32, #tpu.memory_space<vmem>>, vector<32x68xf32>
    tpu.vector_store %arg4[%c0_93, %c0_94], %173 {strides = array<i32>} : memref<192x152xf32, #tpu.memory_space<vmem>>, vector<32x68xf32>,
    %175 = vector.extract_strided_slice %172 {offsets = [0, 1], sizes = [32, 68], strides = [1, 1]} : vector<32x140xf32> to vector<32x68xf32>
    %c32_95 = arith.constant 32 : index
    %c0_96 = arith.constant 0 : index
    %176 = vector.load %arg4[%c32_95, %c0_96] : memref<192x152xf32, #tpu.memory_space<vmem>>, vector<32x68xf32>
    tpu.vector_store %arg4[%c32_95, %c0_96], %175 {strides = array<i32>} : memref<192x152xf32, #tpu.memory_space<vmem>>, vector<32x68xf32>,
    %177 = vector.extract_strided_slice %172 {offsets = [0, 2], sizes = [32, 68], strides = [1, 1]} : vector<32x140xf32> to vector<32x68xf32>
    %c64_97 = arith.constant 64 : index
    %c0_98 = arith.constant 0 : index
    %178 = vector.load %arg4[%c64_97, %c0_98] : memref<192x152xf32, #tpu.memory_space<vmem>>, vector<32x68xf32>
    tpu.vector_store %arg4[%c64_97, %c0_98], %177 {strides = array<i32>} : memref<192x152xf32, #tpu.memory_space<vmem>>, vector<32x68xf32>,
    %179 = vector.extract_strided_slice %172 {offsets = [0, 70], sizes = [32, 68], strides = [1, 1]} : vector<32x140xf32> to vector<32x68xf32>
    %c0_99 = arith.constant 0 : index
    %c68 = arith.constant 68 : index
    %180 = vector.load %arg4[%c0_99, %c68] : memref<192x152xf32, #tpu.memory_space<vmem>>, vector<32x68xf32>
    tpu.vector_store %arg4[%c0_99, %c68], %179 {strides = array<i32>} : memref<192x152xf32, #tpu.memory_space<vmem>>, vector<32x68xf32>,
    %181 = vector.extract_strided_slice %172 {offsets = [0, 71], sizes = [32, 68], strides = [1, 1]} : vector<32x140xf32> to vector<32x68xf32>
    %c32_100 = arith.constant 32 : index
    %c68_101 = arith.constant 68 : index
    %182 = vector.load %arg4[%c32_100, %c68_101] : memref<192x152xf32, #tpu.memory_space<vmem>>, vector<32x68xf32>
    tpu.vector_store %arg4[%c32_100, %c68_101], %181 {strides = array<i32>} : memref<192x152xf32, #tpu.memory_space<vmem>>, vector<32x68xf32>,
    %183 = vector.extract_strided_slice %172 {offsets = [0, 72], sizes = [32, 68], strides = [1, 1]} : vector<32x140xf32> to vector<32x68xf32>
    %c64_102 = arith.constant 64 : index
    %c68_103 = arith.constant 68 : index
    %184 = vector.load %arg4[%c64_102, %c68_103] : memref<192x152xf32, #tpu.memory_space<vmem>>, vector<32x68xf32>
    tpu.vector_store %arg4[%c64_102, %c68_103], %183 {strides = array<i32>} : memref<192x152xf32, #tpu.memory_space<vmem>>, vector<32x68xf32>,
    %c64_104 = arith.constant 64 : index
    %c0_105 = arith.constant 0 : index
    %185 = vector.load %arg1[%c64_104, %c0_105] : memref<224x192xbf16, #tpu.memory_space<vmem>>, vector<32x96xbf16>
    %c0_106 = arith.constant 0 : index
    %c0_107 = arith.constant 0 : index
    %186 = vector.load %arg4[%c0_106, %c0_107] : memref<192x152xf32, #tpu.memory_space<vmem>>, vector<96x136xf32>
    %187 = arith.truncf %186 : vector<96x136xf32> to vector<96x136xbf16>
    %cst_108 = arith.constant dense<0.000000e+00> : vector<32x136xf32>
    %188 = tpu.matmul %185, %187, %cst_108 {dimension_numbers = #tpu.dot_dimension_numbers<[1], [0], [0], [1], [0, 0, 1, 1], [], []>} : vector<32x96xbf16>, vector<96x136xbf16>, vector<32x136xf32> -> vector<32x136xf32>
    %cst_109 = arith.constant dense<0.000000e+00> : vector<32xf32>
    %189 = vector.multi_reduction <add>, %188, %cst_109 [1] : vector<32x136xf32> to vector<32xf32>
    %190 = vector.shape_cast %189 : vector<32xf32> to vector<32x1xf32>
    %cst_110 = arith.constant 0.0073529412 : f32
    %191 = vector.broadcast %cst_110 : f32 to vector<32x1xf32>
    %192 = arith.mulf %190, %191 : vector<32x1xf32>
    %193 = vector.broadcast %192 : vector<32x1xf32> to vector<32x136xf32>
    %194 = arith.subf %188, %193 : vector<32x136xf32>
    %195 = arith.mulf %194, %194 : vector<32x136xf32>
    %cst_111 = arith.constant dense<0.000000e+00> : vector<32xf32>
    %196 = vector.multi_reduction <add>, %195, %cst_111 [1] : vector<32x136xf32> to vector<32xf32>
    %197 = vector.shape_cast %196 : vector<32xf32> to vector<32x1xf32>
    %cst_112 = arith.constant 0.0073529412 : f32
    %198 = vector.broadcast %cst_112 : f32 to vector<32x1xf32>
    %199 = arith.mulf %197, %198 : vector<32x1xf32>
    %c64_113 = arith.constant 64 : index
    %c0_114 = arith.constant 0 : index
    %200 = vector.load %arg2[%c64_113, %c0_114] : memref<224x2xf32, #tpu.memory_space<vmem>>, vector<32x1xf32>
    %c64_115 = arith.constant 64 : index
    %c1_116 = arith.constant 1 : index
    %201 = vector.load %arg2[%c64_115, %c1_116] : memref<224x2xf32, #tpu.memory_space<vmem>>, vector<32x1xf32>
    %cst_117 = arith.constant 9.99999974E-6 : f32
    %202 = vector.broadcast %cst_117 : f32 to vector<32x1xf32>
    %203 = arith.addf %199, %202 : vector<32x1xf32>
    %204 = math.rsqrt %203 : vector<32x1xf32>
    %205 = arith.mulf %200, %204 : vector<32x1xf32>
    %206 = vector.broadcast %205 : vector<32x1xf32> to vector<32x136xf32>
    %207 = arith.mulf %194, %206 : vector<32x136xf32>
    %208 = vector.broadcast %201 : vector<32x1xf32> to vector<32x136xf32>
    %209 = arith.addf %207, %208 : vector<32x136xf32>
    %210 = arith.negf %209 : vector<32x136xf32>
    %211 = math.exp %210 : vector<32x136xf32>
    %cst_118 = arith.constant 1.000000e+00 : f32
    %212 = vector.broadcast %cst_118 : f32 to vector<32x136xf32>
    %213 = arith.addf %212, %211 : vector<32x136xf32>
    %214 = arith.divf %212, %213 : vector<32x136xf32>
    %215 = arith.mulf %209, %214 : vector<32x136xf32>
    %216 = vector.extract_strided_slice %215 {offsets = [0, 0], sizes = [32, 66], strides = [1, 1]} : vector<32x136xf32> to vector<32x66xf32>
    %c0_119 = arith.constant 0 : index
    %c0_120 = arith.constant 0 : index
    %217 = vector.load %arg4[%c0_119, %c0_120] : memref<192x152xf32, #tpu.memory_space<vmem>>, vector<32x66xf32>
    tpu.vector_store %arg4[%c0_119, %c0_120], %216 {strides = array<i32>} : memref<192x152xf32, #tpu.memory_space<vmem>>, vector<32x66xf32>,
    %218 = vector.extract_strided_slice %215 {offsets = [0, 1], sizes = [32, 66], strides = [1, 1]} : vector<32x136xf32> to vector<32x66xf32>
    %c32_121 = arith.constant 32 : index
    %c0_122 = arith.constant 0 : index
    %219 = vector.load %arg4[%c32_121, %c0_122] : memref<192x152xf32, #tpu.memory_space<vmem>>, vector<32x66xf32>
    tpu.vector_store %arg4[%c32_121, %c0_122], %218 {strides = array<i32>} : memref<192x152xf32, #tpu.memory_space<vmem>>, vector<32x66xf32>,
    %220 = vector.extract_strided_slice %215 {offsets = [0, 2], sizes = [32, 66], strides = [1, 1]} : vector<32x136xf32> to vector<32x66xf32>
    %c64_123 = arith.constant 64 : index
    %c0_124 = arith.constant 0 : index
    %221 = vector.load %arg4[%c64_123, %c0_124] : memref<192x152xf32, #tpu.memory_space<vmem>>, vector<32x66xf32>
    tpu.vector_store %arg4[%c64_123, %c0_124], %220 {strides = array<i32>} : memref<192x152xf32, #tpu.memory_space<vmem>>, vector<32x66xf32>,
    %222 = vector.extract_strided_slice %215 {offsets = [0, 68], sizes = [32, 66], strides = [1, 1]} : vector<32x136xf32> to vector<32x66xf32>
    %c0_125 = arith.constant 0 : index
    %c66 = arith.constant 66 : index
    %223 = vector.load %arg4[%c0_125, %c66] : memref<192x152xf32, #tpu.memory_space<vmem>>, vector<32x66xf32>
    tpu.vector_store %arg4[%c0_125, %c66], %222 {strides = array<i32>} : memref<192x152xf32, #tpu.memory_space<vmem>>, vector<32x66xf32>,
    %224 = vector.extract_strided_slice %215 {offsets = [0, 69], sizes = [32, 66], strides = [1, 1]} : vector<32x136xf32> to vector<32x66xf32>
    %c32_126 = arith.constant 32 : index
    %c66_127 = arith.constant 66 : index
    %225 = vector.load %arg4[%c32_126, %c66_127] : memref<192x152xf32, #tpu.memory_space<vmem>>, vector<32x66xf32>
    tpu.vector_store %arg4[%c32_126, %c66_127], %224 {strides = array<i32>} : memref<192x152xf32, #tpu.memory_space<vmem>>, vector<32x66xf32>,
    %226 = vector.extract_strided_slice %215 {offsets = [0, 70], sizes = [32, 66], strides = [1, 1]} : vector<32x136xf32> to vector<32x66xf32>
    %c64_128 = arith.constant 64 : index
    %c66_129 = arith.constant 66 : index
    %227 = vector.load %arg4[%c64_128, %c66_129] : memref<192x152xf32, #tpu.memory_space<vmem>>, vector<32x66xf32>
    tpu.vector_store %arg4[%c64_128, %c66_129], %226 {strides = array<i32>} : memref<192x152xf32, #tpu.memory_space<vmem>>, vector<32x66xf32>,
    %c96 = arith.constant 96 : index
    %c0_130 = arith.constant 0 : index
    %228 = vector.load %arg1[%c96, %c0_130] : memref<224x192xbf16, #tpu.memory_space<vmem>>, vector<64x96xbf16>
    %c0_131 = arith.constant 0 : index
    %c0_132 = arith.constant 0 : index
    %229 = vector.load %arg4[%c0_131, %c0_132] : memref<192x152xf32, #tpu.memory_space<vmem>>, vector<96x132xf32>
    %230 = arith.truncf %229 : vector<96x132xf32> to vector<96x132xbf16>
    %cst_133 = arith.constant dense<0.000000e+00> : vector<64x132xf32>
    %231 = tpu.matmul %228, %230, %cst_133 {dimension_numbers = #tpu.dot_dimension_numbers<[1], [0], [0], [1], [0, 0, 1, 1], [], []>} : vector<64x96xbf16>, vector<96x132xbf16>, vector<64x132xf32> -> vector<64x132xf32>
    %cst_134 = arith.constant dense<0.000000e+00> : vector<64xf32>
    %232 = vector.multi_reduction <add>, %231, %cst_134 [1] : vector<64x132xf32> to vector<64xf32>
    %233 = vector.shape_cast %232 : vector<64xf32> to vector<64x1xf32>
    %cst_135 = arith.constant 0.0075757578 : f32
    %234 = vector.broadcast %cst_135 : f32 to vector<64x1xf32>
    %235 = arith.mulf %233, %234 : vector<64x1xf32>
    %236 = vector.broadcast %235 : vector<64x1xf32> to vector<64x132xf32>
    %237 = arith.subf %231, %236 : vector<64x132xf32>
    %238 = arith.mulf %237, %237 : vector<64x132xf32>
    %cst_136 = arith.constant dense<0.000000e+00> : vector<64xf32>
    %239 = vector.multi_reduction <add>, %238, %cst_136 [1] : vector<64x132xf32> to vector<64xf32>
    %240 = vector.shape_cast %239 : vector<64xf32> to vector<64x1xf32>
    %cst_137 = arith.constant 0.0075757578 : f32
    %241 = vector.broadcast %cst_137 : f32 to vector<64x1xf32>
    %242 = arith.mulf %240, %241 : vector<64x1xf32>
    %c96_138 = arith.constant 96 : index
    %c0_139 = arith.constant 0 : index
    %243 = vector.load %arg2[%c96_138, %c0_139] : memref<224x2xf32, #tpu.memory_space<vmem>>, vector<64x1xf32>
    %c96_140 = arith.constant 96 : index
    %c1_141 = arith.constant 1 : index
    %244 = vector.load %arg2[%c96_140, %c1_141] : memref<224x2xf32, #tpu.memory_space<vmem>>, vector<64x1xf32>
    %cst_142 = arith.constant 9.99999974E-6 : f32
    %245 = vector.broadcast %cst_142 : f32 to vector<64x1xf32>
    %246 = arith.addf %242, %245 : vector<64x1xf32>
    %247 = math.rsqrt %246 : vector<64x1xf32>
    %248 = arith.mulf %243, %247 : vector<64x1xf32>
    %249 = vector.broadcast %248 : vector<64x1xf32> to vector<64x132xf32>
    %250 = arith.mulf %237, %249 : vector<64x132xf32>
    %251 = vector.broadcast %244 : vector<64x1xf32> to vector<64x132xf32>
    %252 = arith.addf %250, %251 : vector<64x132xf32>
    %253 = arith.negf %252 : vector<64x132xf32>
    %254 = math.exp %253 : vector<64x132xf32>
    %cst_143 = arith.constant 1.000000e+00 : f32
    %255 = vector.broadcast %cst_143 : f32 to vector<64x132xf32>
    %256 = arith.addf %255, %254 : vector<64x132xf32>
    %257 = arith.divf %255, %256 : vector<64x132xf32>
    %258 = arith.mulf %252, %257 : vector<64x132xf32>
    %259 = vector.extract_strided_slice %258 {offsets = [0, 0], sizes = [64, 64], strides = [1, 1]} : vector<64x132xf32> to vector<64x64xf32>
    %c0_144 = arith.constant 0 : index
    %c0_145 = arith.constant 0 : index
    %260 = vector.load %arg4[%c0_144, %c0_145] : memref<192x152xf32, #tpu.memory_space<vmem>>, vector<64x64xf32>
    tpu.vector_store %arg4[%c0_144, %c0_145], %259 {strides = array<i32>} : memref<192x152xf32, #tpu.memory_space<vmem>>, vector<64x64xf32>,
    %261 = vector.extract_strided_slice %258 {offsets = [0, 1], sizes = [64, 64], strides = [1, 1]} : vector<64x132xf32> to vector<64x64xf32>
    %c64_146 = arith.constant 64 : index
    %c0_147 = arith.constant 0 : index
    %262 = vector.load %arg4[%c64_146, %c0_147] : memref<192x152xf32, #tpu.memory_space<vmem>>, vector<64x64xf32>
    tpu.vector_store %arg4[%c64_146, %c0_147], %261 {strides = array<i32>} : memref<192x152xf32, #tpu.memory_space<vmem>>, vector<64x64xf32>,
    %263 = vector.extract_strided_slice %258 {offsets = [0, 2], sizes = [64, 64], strides = [1, 1]} : vector<64x132xf32> to vector<64x64xf32>
    %c128 = arith.constant 128 : index
    %c0_148 = arith.constant 0 : index
    %264 = vector.load %arg4[%c128, %c0_148] : memref<192x152xf32, #tpu.memory_space<vmem>>, vector<64x64xf32>
    tpu.vector_store %arg4[%c128, %c0_148], %263 {strides = array<i32>} : memref<192x152xf32, #tpu.memory_space<vmem>>, vector<64x64xf32>,
    %265 = vector.extract_strided_slice %258 {offsets = [0, 66], sizes = [64, 64], strides = [1, 1]} : vector<64x132xf32> to vector<64x64xf32>
    %c0_149 = arith.constant 0 : index
    %c64_150 = arith.constant 64 : index
    %266 = vector.load %arg4[%c0_149, %c64_150] : memref<192x152xf32, #tpu.memory_space<vmem>>, vector<64x64xf32>
    tpu.vector_store %arg4[%c0_149, %c64_150], %265 {strides = array<i32>} : memref<192x152xf32, #tpu.memory_space<vmem>>, vector<64x64xf32>,
    %267 = vector.extract_strided_slice %258 {offsets = [0, 67], sizes = [64, 64], strides = [1, 1]} : vector<64x132xf32> to vector<64x64xf32>
    %c64_151 = arith.constant 64 : index
    %c64_152 = arith.constant 64 : index
    %268 = vector.load %arg4[%c64_151, %c64_152] : memref<192x152xf32, #tpu.memory_space<vmem>>, vector<64x64xf32>
    tpu.vector_store %arg4[%c64_151, %c64_152], %267 {strides = array<i32>} : memref<192x152xf32, #tpu.memory_space<vmem>>, vector<64x64xf32>,
    %269 = vector.extract_strided_slice %258 {offsets = [0, 68], sizes = [64, 64], strides = [1, 1]} : vector<64x132xf32> to vector<64x64xf32>
    %c128_153 = arith.constant 128 : index
    %c64_154 = arith.constant 64 : index
    %270 = vector.load %arg4[%c128_153, %c64_154] : memref<192x152xf32, #tpu.memory_space<vmem>>, vector<64x64xf32>
    tpu.vector_store %arg4[%c128_153, %c64_154], %269 {strides = array<i32>} : memref<192x152xf32, #tpu.memory_space<vmem>>, vector<64x64xf32>,
    %c160 = arith.constant 160 : index
    %c0_155 = arith.constant 0 : index
    %271 = vector.load %arg1[%c160, %c0_155] : memref<224x192xbf16, #tpu.memory_space<vmem>>, vector<64x192xbf16>
    %c0_156 = arith.constant 0 : index
    %c0_157 = arith.constant 0 : index
    %272 = vector.load %arg4[%c0_156, %c0_157] : memref<192x152xf32, #tpu.memory_space<vmem>>, vector<192x128xf32>
    %273 = arith.truncf %272 : vector<192x128xf32> to vector<192x128xbf16>
    %cst_158 = arith.constant dense<0.000000e+00> : vector<64x128xf32>
    %274 = tpu.matmul %271, %273, %cst_158 {dimension_numbers = #tpu.dot_dimension_numbers<[1], [0], [0], [1], [0, 0, 1, 1], [], []>} : vector<64x192xbf16>, vector<192x128xbf16>, vector<64x128xf32> -> vector<64x128xf32>
    %cst_159 = arith.constant dense<0.000000e+00> : vector<64xf32>
    %275 = vector.multi_reduction <add>, %274, %cst_159 [1] : vector<64x128xf32> to vector<64xf32>
    %276 = vector.shape_cast %275 : vector<64xf32> to vector<64x1xf32>
    %cst_160 = arith.constant 7.812500e-03 : f32
    %277 = vector.broadcast %cst_160 : f32 to vector<64x1xf32>
    %278 = arith.mulf %276, %277 : vector<64x1xf32>
    %279 = vector.broadcast %278 : vector<64x1xf32> to vector<64x128xf32>
    %280 = arith.subf %274, %279 : vector<64x128xf32>
    %281 = arith.mulf %280, %280 : vector<64x128xf32>
    %cst_161 = arith.constant dense<0.000000e+00> : vector<64xf32>
    %282 = vector.multi_reduction <add>, %281, %cst_161 [1] : vector<64x128xf32> to vector<64xf32>
    %283 = vector.shape_cast %282 : vector<64xf32> to vector<64x1xf32>
    %cst_162 = arith.constant 7.812500e-03 : f32
    %284 = vector.broadcast %cst_162 : f32 to vector<64x1xf32>
    %285 = arith.mulf %283, %284 : vector<64x1xf32>
    %c160_163 = arith.constant 160 : index
    %c0_164 = arith.constant 0 : index
    %286 = vector.load %arg2[%c160_163, %c0_164] : memref<224x2xf32, #tpu.memory_space<vmem>>, vector<64x1xf32>
    %c160_165 = arith.constant 160 : index
    %c1_166 = arith.constant 1 : index
    %287 = vector.load %arg2[%c160_165, %c1_166] : memref<224x2xf32, #tpu.memory_space<vmem>>, vector<64x1xf32>
    %cst_167 = arith.constant 9.99999974E-6 : f32
    %288 = vector.broadcast %cst_167 : f32 to vector<64x1xf32>
    %289 = arith.addf %285, %288 : vector<64x1xf32>
    %290 = math.rsqrt %289 : vector<64x1xf32>
    %291 = arith.mulf %286, %290 : vector<64x1xf32>
    %292 = vector.broadcast %291 : vector<64x1xf32> to vector<64x128xf32>
    %293 = arith.mulf %280, %292 : vector<64x128xf32>
    %294 = vector.broadcast %287 : vector<64x1xf32> to vector<64x128xf32>
    %295 = arith.addf %293, %294 : vector<64x128xf32>
    %296 = arith.negf %295 : vector<64x128xf32>
    %297 = math.exp %296 : vector<64x128xf32>
    %cst_168 = arith.constant 1.000000e+00 : f32
    %298 = vector.broadcast %cst_168 : f32 to vector<64x128xf32>
    %299 = arith.addf %298, %297 : vector<64x128xf32>
    %300 = arith.divf %298, %299 : vector<64x128xf32>
    %301 = arith.mulf %295, %300 : vector<64x128xf32>
    %c0_169 = arith.constant 0 : index
    %c0_170 = arith.constant 0 : index
    %302 = vector.load %arg3[%c0_169, %c0_170] : memref<64x128xf32, #tpu.memory_space<vmem>>, vector<64x128xf32>
    tpu.vector_store %arg3[%c0_169, %c0_170], %301 {strides = array<i32>} : memref<64x128xf32, #tpu.memory_space<vmem>>, vector<64x128xf32>,
    return
  }
}

</mosaic_0001>

<llo_original>
// kernel: cnn1d_low_forward.1
$region0: #{cnn1d_low_forward.1}
  #allocation0 [shape = 'u32[]', space=smem, size = 0x4, offset = 0x4, fixed_abs, tag = 'smem constant byte address 0x4 - core index']
  #allocation1 [shape = 'u32[144,128]{1,0:T(1,128)}', space=vmem, size = 0x12000, scoped, tag = 'internal scratch']
  #allocation2 [shape = 'f32[192,152]{1,0:T(8,128)}', space=vmem, size = 0x30000, scoped, tag = 'scratch operand']
  %s0 = inlined_call_operand.vmem [shape: f32[1,160], index: 0, kind: input, shape index: {}]
  %s1 = inlined_call_operand.vmem [shape: bf16[224,192], index: 1, kind: input, shape index: {}]
  %s2 = inlined_call_operand.vmem [shape: f32[224,2], index: 2, kind: input, shape index: {}]
  %s3 = inlined_call_operand.vmem [shape: f32[64,128], index: 3, kind: output, shape index: {}]
  %s4 = sld [smem:[#allocation0]]
  $region22: #{cnn1d_low_forward.1} parent=0
    _
  %s6 = ssub.s32 1, %s4
  %s7 = scalar_select 0, %s6, %s4
  // Predicated region
  $region2: #{cnn1d_low_forward.1} parent=0 // pred_check
    _
  $region3: #{cnn1d_low_forward.1} parent=0 // pred_check_branch
    %9 = sbr.rel (0) target = $region5
  $region4: #{cnn1d_low_forward.1} parent=0 // pred_region
    _
  $region5: #{cnn1d_low_forward.1} parent=0 // pred_fallthru
    _
  // Predicated region
  $region6: #{cnn1d_low_forward.1} parent=0 // pred_check
    _
  $region7: #{cnn1d_low_forward.1} parent=0 // pred_check_branch
    %11 = sbr.rel (0) target = $region9
  $region8: #{cnn1d_low_forward.1} parent=0 // pred_region
    _
  $region9: #{cnn1d_low_forward.1} parent=0 // pred_fallthru
    _
  // Predicated region
  $region10: #{cnn1d_low_forward.1} parent=0 // pred_check
    _
  $region11: #{cnn1d_low_forward.1} parent=0 // pred_check_branch
    %13 = sbr.rel (0) target = $region13
  $region12: #{cnn1d_low_forward.1} parent=0 // pred_region
    _
  $region13: #{cnn1d_low_forward.1} parent=0 // pred_fallthru
    _
  %v15 = vld [vmem:[%s0] sm:$0x3]
  %vm16 = vcmask 614400
  %17 = vst.msk [vmem:[#allocation2] sm:$0x1] %vm16, %v15
  %v19 = vlaneseq
  %v20 = vshrl.u32 %v19, 7
  %v21 = vsub.s32 0, %v20
  %v22 = vrot.slane %v15, %v21
  %23 = vrot.lane.b32.xlu0 %v22, 127
  %v24 = vpop.permute.xlu0 %23
  %26 = vst.msk [vmem:[#allocation2 + $0x1] sm:$0x1] %vm16, %v24
  %27 = vrot.lane.b32.xlu0 %v22, 126
  %v28 = vpop.permute.xlu0 %27
  %30 = vst.msk [vmem:[#allocation2 + $0x2] sm:$0x1] %vm16, %v28
  %31 = vrot.lane.b32.xlu0 %v22, 125
  %v32 = vpop.permute.xlu0 %31
  %34 = vst.msk [vmem:[#allocation2 + $0x3] sm:$0x1] %vm16, %v32
  %35 = vrot.lane.b32.xlu0 %v22, 124
  %v36 = vpop.permute.xlu0 %35
  %38 = vst.msk [vmem:[#allocation2 + $0x4] sm:$0x1] %vm16, %v36
  %v39 = vlaneseq
  %v40 = vshrl.u32 %v39, 7
  %v41 = vsub.s32 1, %v40
  %v42 = vrot.slane %v15, %v41
  %43 = vrot.lane.b32.xlu0 %v42, 124
  %v44 = vpop.permute.xlu0 %43
  %vm45 = vcmask 1014784
  %v46 = vsel %vm45, %v36, %v44
  %vm49 = vcmask 1040992
  %50 = vst.msk [vmem:[#allocation2] sm:$0x1] %vm49, %v46
  %vm51 = vcmask 188416
  %52 = vst.msk [vmem:[#allocation2 + $0x8] sm:$0x1] %vm51, %v44
  %53 = vrot.lane.b32.xlu0 %v22, 123
  %v54 = vpop.permute.xlu0 %53
  %55 = vrot.lane.b32.xlu0 %v42, 123
  %v56 = vpop.permute.xlu0 %55
  %vm57 = vcmask 1006592
  %v58 = vsel %vm57, %v54, %v56
  %61 = vst.msk [vmem:[#allocation2 + $0x1] sm:$0x1] %vm49, %v58
  %62 = vst.msk [vmem:[#allocation2 + $0x9] sm:$0x1] %vm51, %v56
  %63 = vrot.lane.b32.xlu0 %v22, 122
  %v64 = vpop.permute.xlu0 %63
  %65 = vrot.lane.b32.xlu0 %v42, 122
  %v66 = vpop.permute.xlu0 %65
  %vm67 = vcmask 998400
  %v68 = vsel %vm67, %v64, %v66
  %71 = vst.msk [vmem:[#allocation2 + $0x2] sm:$0x1] %vm49, %v68
  %72 = vst.msk [vmem:[#allocation2 + $0xa] sm:$0x1] %vm51, %v66
  %73 = vrot.lane.b32.xlu0 %v22, 121
  %v74 = vpop.permute.xlu0 %73
  %75 = vrot.lane.b32.xlu0 %v42, 121
  %v76 = vpop.permute.xlu0 %75
  %vm77 = vcmask 990208
  %v78 = vsel %vm77, %v74, %v76
  %81 = vst.msk [vmem:[#allocation2 + $0x3] sm:$0x1] %vm49, %v78
  %82 = vst.msk [vmem:[#allocation2 + $0xb] sm:$0x1] %vm51, %v76
  %83 = vrot.lane.b32.xlu0 %v22, 120
  %v84 = vpop.permute.xlu0 %83
  %85 = vrot.lane.b32.xlu0 %v42, 120
  %v86 = vpop.permute.xlu0 %85
  %vm87 = vcmask 982016
  %v88 = vsel %vm87, %v84, %v86
  %91 = vst.msk [vmem:[#allocation2 + $0x4] sm:$0x1] %vm49, %v88
  %92 = vst.msk [vmem:[#allocation2 + $0xc] sm:$0x1] %vm51, %v86
  %v93 = vld [vmem:[%s1] sm:$0xf]
  %v94 = vld [vmem:[%s1 + $0x8] sm:$0xf]
  %v95 = vunpack.c.l.bf16 %v93
  %v96 = vunpack.c.l.bf16 %v94
  %v97 = vld [vmem:[#allocation2] ss:$8 sm:$0x3]
  %99 = vset.pattern.permute.xlu0 0
  %100 = vperm.xlu0 %99, %v95
  %v101 = vpop.permute.xlu0 %100
  %104 = vset.pattern.permute.xlu0 0
  %105 = vperm.xlu0 %104, %v96
  %v106 = vpop.permute.xlu0 %105
  %v109 = vlaneseq
  %v110 = vshrl.u32 %v109, 7
  %v111 = vsub.s32 0, %v110
  %v112 = vrot.slane %v97, %v111
  %v113 = vlaneseq
  %v114 = vshrl.u32 %v113, 7
  %v115 = vsub.s32 1, %v114
  %v116 = vrot.slane %v97, %v115
  %v119 = vmul.f32 %v101, %v112
  %v120 = vmul.f32 %v101, %v116
  %v121 = vmul.f32 %v106, %v112
  %v122 = vmul.f32 %v106, %v116
  %s123 = scalar_lea.vmem [#allocation2], 1
  %v124 = vld [vmem:[%s123] ss:$8 sm:$0x3]
  %125 = vset.pattern.permute.xlu0 1
  %126 = vperm.xlu0 %125, %v95
  %v127 = vpop.permute.xlu0 %126
  %129 = vset.pattern.permute.xlu0 1
  %130 = vperm.xlu0 %129, %v96
  %v131 = vpop.permute.xlu0 %130
  %v134 = vlaneseq
  %v135 = vshrl.u32 %v134, 7
  %v136 = vsub.s32 0, %v135
  %v137 = vrot.slane %v124, %v136
  %v138 = vlaneseq
  %v139 = vshrl.u32 %v138, 7
  %v140 = vsub.s32 1, %v139
  %v141 = vrot.slane %v124, %v140
  %v144 = vmul.f32 %v127, %v137
  %v145 = vmul.f32 %v127, %v141
  %v146 = vmul.f32 %v131, %v137
  %v147 = vmul.f32 %v131, %v141
  %v148 = vadd.f32 %v119, %v144
  %v149 = vadd.f32 %v120, %v145
  %v150 = vadd.f32 %v121, %v146
  %v151 = vadd.f32 %v122, %v147
  %s152 = scalar_lea.vmem [#allocation2], 2
  %v153 = vld [vmem:[%s152] ss:$8 sm:$0x3]
  %154 = vset.pattern.permute.xlu0 2
  %155 = vperm.xlu0 %154, %v95
  %v156 = vpop.permute.xlu0 %155
  %158 = vset.pattern.permute.xlu0 2
  %159 = vperm.xlu0 %158, %v96
  %v160 = vpop.permute.xlu0 %159
  %v163 = vlaneseq
  %v164 = vshrl.u32 %v163, 7
  %v165 = vsub.s32 0, %v164
  %v166 = vrot.slane %v153, %v165
  %v167 = vlaneseq
  %v168 = vshrl.u32 %v167, 7
  %v169 = vsub.s32 1, %v168
  %v170 = vrot.slane %v153, %v169
  %v173 = vmul.f32 %v156, %v166
  %v174 = vmul.f32 %v156, %v170
  %v175 = vmul.f32 %v160, %v166
  %v176 = vmul.f32 %v160, %v170
  %v177 = vadd.f32 %v148, %v173
  %v178 = vadd.f32 %v149, %v174
  %v179 = vadd.f32 %v150, %v175
  %v180 = vadd.f32 %v151, %v176
  %s181 = scalar_lea.vmem [#allocation2], 3
  %v182 = vld [vmem:[%s181] ss:$8 sm:$0x3]
  %183 = vset.pattern.permute.xlu0 3
  %184 = vperm.xlu0 %183, %v95
  %v185 = vpop.permute.xlu0 %184
  %187 = vset.pattern.permute.xlu0 3
  %188 = vperm.xlu0 %187, %v96
  %v189 = vpop.permute.xlu0 %188
  %v192 = vlaneseq
  %v193 = vshrl.u32 %v192, 7
  %v194 = vsub.s32 0, %v193
  %v195 = vrot.slane %v182, %v194
  %v196 = vlaneseq
  %v197 = vshrl.u32 %v196, 7
  %v198 = vsub.s32 1, %v197
  %v199 = vrot.slane %v182, %v198
  %v202 = vmul.f32 %v185, %v195
  %v203 = vmul.f32 %v185, %v199
  %v204 = vmul.f32 %v189, %v195
  %v205 = vmul.f32 %v189, %v199
  %v206 = vadd.f32 %v177, %v202
  %v207 = vadd.f32 %v178, %v203
  %v208 = vadd.f32 %v179, %v204
  %v209 = vadd.f32 %v180, %v205
  %s210 = scalar_lea.vmem [#allocation2], 4
  %v211 = vld [vmem:[%s210] ss:$8 sm:$0x3]
  %212 = vset.pattern.permute.xlu0 4
  %213 = vperm.xlu0 %212, %v95
  %v214 = vpop.permute.xlu0 %213
  %216 = vset.pattern.permute.xlu0 4
  %217 = vperm.xlu0 %216, %v96
  %v218 = vpop.permute.xlu0 %217
  %v221 = vlaneseq
  %v222 = vshrl.u32 %v221, 7
  %v223 = vsub.s32 0, %v222
  %v224 = vrot.slane %v211, %v223
  %v225 = vlaneseq
  %v226 = vshrl.u32 %v225, 7
  %v227 = vsub.s32 1, %v226
  %v228 = vrot.slane %v211, %v227
  %v231 = vmul.f32 %v214, %v224
  %v232 = vmul.f32 %v214, %v228
  %v233 = vmul.f32 %v218, %v224
  %v234 = vmul.f32 %v218, %v228
  %v235 = vadd.f32 %v206, %v231
  %v236 = vadd.f32 %v207, %v232
  %v237 = vadd.f32 %v208, %v233
  %v238 = vadd.f32 %v209, %v234
  %vm239 = vcmask 195584
  %v240 = vsel %vm239, %v236, 0.0
  %v241 = vadd.f32 %v235, %v240
  %242 = vadd.xlane.f32.xlu0 %v241
  %v243 = vpop.xlane.xlu0 %242
  %v244 = vsel %vm239, %v238, 0.0
  %v245 = vadd.f32 %v237, %v244
  %246 = vadd.xlane.f32.xlu0 %v245
  %v247 = vpop.xlane.xlu0 %246
  %v248 = vmul.f32 %v243, 0.0065789474
  %v249 = vmul.f32 %v247, 0.0065789474
  %v250 = vsub.f32 %v235, %v248
  %v251 = vsub.f32 %v236, %v248
  %v252 = vsub.f32 %v237, %v249
  %v253 = vsub.f32 %v238, %v249
  %v254 = vmul.f32 %v250, %v250
  %v255 = vmul.f32 %v251, %v251
  %v256 = vmul.f32 %v252, %v252
  %v257 = vmul.f32 %v253, %v253
  %v258 = vsel %vm239, %v255, 0.0
  %v259 = vadd.f32 %v254, %v258
  %260 = vadd.xlane.f32.xlu0 %v259
  %v261 = vpop.xlane.xlu0 %260
  %v262 = vsel %vm239, %v257, 0.0
  %v263 = vadd.f32 %v256, %v262
  %264 = vadd.xlane.f32.xlu0 %v263
  %v265 = vpop.xlane.xlu0 %264
  %v266 = vmul.f32 %v261, 0.0065789474
  %v267 = vmul.f32 %v265, 0.0065789474
  %v268 = vld [vmem:[%s2] sm:$0xff]
  %v269 = vld [vmem:[%s2 + $0x8] sm:$0xff]
  %v270 = vadd.f32 %v266, 1e-05
  %v271 = vadd.f32 %v267, 1e-05
  %v272 = vrsqrt.pop %v270
  %v273 = vrsqrt.pop %v271
  %v274 = vmul.f32 %v268, %v272
  %v275 = vmul.f32 %v269, %v273
  %277 = vset.pattern.permute.xlu0 0
  %278 = vperm.xlu0 %277, %v274
  %v279 = vpop.permute.xlu0 %278
  %282 = vset.pattern.permute.xlu0 0
  %283 = vperm.xlu0 %282, %v275
  %v284 = vpop.permute.xlu0 %283
  %v286 = vmul.f32 %v250, %v279
  %v287 = vmul.f32 %v251, %v279
  %v288 = vmul.f32 %v252, %v284
  %v289 = vmul.f32 %v253, %v284
  %291 = vset.pattern.permute.xlu0 1
  %292 = vperm.xlu0 %291, %v268
  %v293 = vpop.permute.xlu0 %292
  %296 = vset.pattern.permute.xlu0 1
  %297 = vperm.xlu0 %296, %v269
  %v298 = vpop.permute.xlu0 %297
  %v300 = vadd.f32 %v286, %v293
  %v301 = vadd.f32 %v287, %v293
  %v302 = vadd.f32 %v288, %v298
  %v303 = vadd.f32 %v289, %v298
  %v304 = vxor.u32 %v300, 2147483648
  %v305 = vxor.u32 %v301, 2147483648
  %v306 = vxor.u32 %v302, 2147483648
  %v307 = vxor.u32 %v303, 2147483648
  %v308 = vmul.f32 %v304, 1.442695
  %v309 = vpow.pop %v308
  %v310 = vmul.f32 %v305, 1.442695
  %v311 = vpow.pop %v310
  %v312 = vmul.f32 %v306, 1.442695
  %v313 = vpow.pop %v312
  %v314 = vmul.f32 %v307, 1.442695
  %v315 = vpow.pop %v314
  %v316 = vadd.f32 %v309, 1.0
  %v317 = vadd.f32 %v311, 1.0
  %v318 = vadd.f32 %v313, 1.0
  %v319 = vadd.f32 %v315, 1.0
  %v320 = vrcp.pop %v316
  %v321 = vmul.f32 1.0, %v320
  %v322 = vrcp.pop %v317
  %v323 = vmul.f32 1.0, %v322
  %v324 = vrcp.pop %v318
  %v325 = vmul.f32 1.0, %v324
  %v326 = vrcp.pop %v319
  %v327 = vmul.f32 1.0, %v326
  %v328 = vmul.f32 %v300, %v321
  %v329 = vmul.f32 %v301, %v323
  %v330 = vmul.f32 %v302, %v325
  %v331 = vmul.f32 %v303, %v327
  %vm332 = vcmask 588800
  %333 = vst.msk [vmem:[#allocation2] sm:$0xff] %vm332, %v328
  %334 = vst.msk [vmem:[#allocation2 + $0x10] sm:$0xff] %vm332, %v330
  %337 = vrot.lane.b32.xlu0 %v328, 127
  %v338 = vpop.permute.xlu0 %337
  %339 = vrot.lane.b32.xlu0 %v330, 127
  %v340 = vpop.permute.xlu0 %339
  %343 = vst.msk [vmem:[#allocation2 + $0x20] sm:$0xff] %vm332, %v338
  %344 = vst.msk [vmem:[#allocation2 + $0x30] sm:$0xff] %vm332, %v340
  %345 = vrot.lane.b32.xlu0 %v328, 126
  %v346 = vpop.permute.xlu0 %345
  %347 = vrot.lane.b32.xlu0 %v330, 126
  %v348 = vpop.permute.xlu0 %347
  %351 = vst.msk [vmem:[#allocation2 + $0x40] sm:$0xff] %vm332, %v346
  %352 = vst.msk [vmem:[#allocation2 + $0x50] sm:$0xff] %vm332, %v348
  %353 = vrot.lane.b32.xlu0 %v328, 125
  %v354 = vpop.permute.xlu0 %353
  %355 = vrot.lane.b32.xlu0 %v330, 125
  %v356 = vpop.permute.xlu0 %355
  %359 = vst.msk [vmem:[#allocation2 + $0x60] sm:$0xff] %vm332, %v354
  %360 = vst.msk [vmem:[#allocation2 + $0x70] sm:$0xff] %vm332, %v356
  %361 = vrot.lane.b32.xlu0 %v328, 124
  %v362 = vpop.permute.xlu0 %361
  %363 = vrot.lane.b32.xlu0 %v330, 124
  %v364 = vpop.permute.xlu0 %363
  %367 = vst.msk [vmem:[#allocation2 + $0x80] sm:$0xff] %vm332, %v362
  %368 = vst.msk [vmem:[#allocation2 + $0x90] sm:$0xff] %vm332, %v364
  %371 = vrot.lane.b32.xlu0 %v329, 124
  %v372 = vpop.permute.xlu0 %371
  %373 = vrot.lane.b32.xlu0 %v331, 124
  %v374 = vpop.permute.xlu0 %373
  %v375 = vsel %vm45, %v362, %v372
  %v376 = vsel %vm45, %v364, %v374
  %vm381 = vcmask 1048128
  %382 = vst.msk [vmem:[#allocation2] sm:$0xff] %vm381, %v375
  %vm383 = vcmask 130048
  %384 = vst.msk [vmem:[#allocation2 + $0x8] sm:$0xff] %vm383, %v372
  %385 = vst.msk [vmem:[#allocation2 + $0x10] sm:$0xff] %vm381, %v376
  %386 = vst.msk [vmem:[#allocation2 + $0x18] sm:$0xff] %vm383, %v374
  %387 = vrot.lane.b32.xlu0 %v328, 123
  %v388 = vpop.permute.xlu0 %387
  %389 = vrot.lane.b32.xlu0 %v329, 123
  %v390 = vpop.permute.xlu0 %389
  %391 = vrot.lane.b32.xlu0 %v330, 123
  %v392 = vpop.permute.xlu0 %391
  %393 = vrot.lane.b32.xlu0 %v331, 123
  %v394 = vpop.permute.xlu0 %393
  %v395 = vsel %vm57, %v388, %v390
  %v396 = vsel %vm57, %v392, %v394
  %401 = vst.msk [vmem:[#allocation2 + $0x20] sm:$0xff] %vm381, %v395
  %402 = vst.msk [vmem:[#allocation2 + $0x28] sm:$0xff] %vm383, %v390
  %403 = vst.msk [vmem:[#allocation2 + $0x30] sm:$0xff] %vm381, %v396
  %404 = vst.msk [vmem:[#allocation2 + $0x38] sm:$0xff] %vm383, %v394
  %405 = vrot.lane.b32.xlu0 %v328, 122
  %v406 = vpop.permute.xlu0 %405
  %407 = vrot.lane.b32.xlu0 %v329, 122
  %v408 = vpop.permute.xlu0 %407
  %409 = vrot.lane.b32.xlu0 %v330, 122
  %v410 = vpop.permute.xlu0 %409
  %411 = vrot.lane.b32.xlu0 %v331, 122
  %v412 = vpop.permute.xlu0 %411
  %v413 = vsel %vm67, %v406, %v408
  %v414 = vsel %vm67, %v410, %v412
  %419 = vst.msk [vmem:[#allocation2 + $0x40] sm:$0xff] %vm381, %v413
  %420 = vst.msk [vmem:[#allocation2 + $0x48] sm:$0xff] %vm383, %v408
  %421 = vst.msk [vmem:[#allocation2 + $0x50] sm:$0xff] %vm381, %v414
  %422 = vst.msk [vmem:[#allocation2 + $0x58] sm:$0xff] %vm383, %v412
  %423 = vrot.lane.b32.xlu0 %v328, 121
  %v424 = vpop.permute.xlu0 %423
  %425 = vrot.lane.b32.xlu0 %v329, 121
  %v426 = vpop.permute.xlu0 %425
  %427 = vrot.lane.b32.xlu0 %v330, 121
  %v428 = vpop.permute.xlu0 %427
  %429 = vrot.lane.b32.xlu0 %v331, 121
  %v430 = vpop.permute.xlu0 %429
  %v431 = vsel %vm77, %v424, %v426
  %v432 = vsel %vm77, %v428, %v430
  %437 = vst.msk [vmem:[#allocation2 + $0x60] sm:$0xff] %vm381, %v431
  %438 = vst.msk [vmem:[#allocation2 + $0x68] sm:$0xff] %vm383, %v426
  %439 = vst.msk [vmem:[#allocation2 + $0x70] sm:$0xff] %vm381, %v432
  %440 = vst.msk [vmem:[#allocation2 + $0x78] sm:$0xff] %vm383, %v430
  %441 = vrot.lane.b32.xlu0 %v328, 120
  %v442 = vpop.permute.xlu0 %441
  %443 = vrot.lane.b32.xlu0 %v329, 120
  %v444 = vpop.permute.xlu0 %443
  %445 = vrot.lane.b32.xlu0 %v330, 120
  %v446 = vpop.permute.xlu0 %445
  %447 = vrot.lane.b32.xlu0 %v331, 120
  %v448 = vpop.permute.xlu0 %447
  %v449 = vsel %vm87, %v442, %v444
  %v450 = vsel %vm87, %v446, %v448
  %455 = vst.msk [vmem:[#allocation2 + $0x80] sm:$0xff] %vm381, %v449
  %456 = vst.msk [vmem:[#allocation2 + $0x88] sm:$0xff] %vm383, %v444
  %457 = vst.msk [vmem:[#allocation2 + $0x90] sm:$0xff] %vm381, %v450
  %458 = vst.msk [vmem:[#allocation2 + $0x98] sm:$0xff] %vm383, %v448
  %v459 = vld [vmem:[%s1 + $0x10] sm:$0xf]
  %v460 = vld [vmem:[%s1 + $0x18] sm:$0xf]
  %v461 = vld [vmem:[#allocation2] sm:$0xff]
  %v462 = vld [vmem:[#allocation2 + $0x8] sm:$0xff]
  %v463 = vld [vmem:[#allocation2 + $0x10] sm:$0xff]
  %v464 = vld [vmem:[#allocation2 + $0x18] sm:$0xff]
  %v465 = vld [vmem:[#allocation2 + $0x20] sm:$0xff]
  %v466 = vld [vmem:[#allocation2 + $0x28] sm:$0xff]
  %v467 = vld [vmem:[#allocation2 + $0x30] sm:$0xff]
  %v468 = vld [vmem:[#allocation2 + $0x38] sm:$0xff]
  %v469 = vld [vmem:[#allocation2 + $0x40] sm:$0xff]
  %v470 = vld [vmem:[#allocation2 + $0x48] sm:$0xff]
  %v471 = vld [vmem:[#allocation2 + $0x50] sm:$0xff]
  %v472 = vld [vmem:[#allocation2 + $0x58] sm:$0xff]
  %v473 = vld [vmem:[#allocation2 + $0x60] sm:$0xff]
  %v474 = vld [vmem:[#allocation2 + $0x68] sm:$0xff]
  %v475 = vld [vmem:[#allocation2 + $0x70] sm:$0xff]
  %v476 = vld [vmem:[#allocation2 + $0x78] sm:$0xff]
  %v477 = vld [vmem:[#allocation2 + $0x80] sm:$0xff]
  %v478 = vld [vmem:[#allocation2 + $0x88] sm:$0xff]
  %v479 = vld [vmem:[#allocation2 + $0x90] sm:$0xff]
  %v480 = vld [vmem:[#allocation2 + $0x98] sm:$0xff]
  %v481 = vpack.c.bf16 %v463, %v461
  %v482 = vpack.c.bf16 %v464, %v462
  %v483 = vpack.c.bf16 %v467, %v465
  %v484 = vpack.c.bf16 %v468, %v466
  %v485 = vpack.c.bf16 %v471, %v469
  %v486 = vpack.c.bf16 %v472, %v470
  %v487 = vpack.c.bf16 %v475, %v473
  %v488 = vpack.c.bf16 %v476, %v474
  %v489 = vpack.c.bf16 %v479, %v477
  %v490 = vpack.c.bf16 %v480, %v478
  %v493 = vunpack.c.l.b16 %v459
  %v494 = vunpack.c.l.b16 %v460
  %v495 = vpack.c.b16 %v494, %v493
  %vm496 = vcmask 654336
  %v498 = vsel %vm496, %v495, 0
  %500 = vmatprep.subr.bf16.mxu0 %v482
  %501 = vmatpush1.bf16.msra.mxu0 %v481
  %502 = vmatprep.subr.bf16.mxu0 %v484
  %503 = vmatpush1.bf16.msra.mxu0 %v483
  %504 = vmatprep.subr.bf16.mxu0 %v486
  %505 = vmatpush1.bf16.msra.mxu0 %v485
  %506 = vmatprep.subr.bf16.mxu0 %v488
  %507 = vmatpush1.bf16.msra.mxu0 %v487
  %508 = vmatprep.subr.bf16.mxu0 %v490
  %509 = vmatpush1.bf16.msra.mxu0 %v489
  %510 = vmatprep.subr.bf16.mxu0 0
  %511 = vmatpush1.bf16.msra.mxu0 0
  %512 = vmatprep.subr.bf16.mxu0 0
  %513 = vmatpush1.bf16.msra.mxu0 0
  %514 = vmatprep.subr.bf16.mxu0 0
  %515 = vmatpush1.bf16.msra.mxu0 0
  %516 = vmatprep.subr.bf16.mxu0 0
  %517 = vmatpush1.bf16.msra.mxu0 0
  %518 = vmatprep.subr.bf16.mxu0 0
  %519 = vmatpush1.bf16.msra.mxu0 0
  %520 = vmatprep.subr.bf16.mxu0 0
  %521 = vmatpush1.bf16.msra.mxu0 0
  %522 = vmatprep.subr.bf16.mxu0 0
  %523 = vmatpush1.bf16.msra.mxu0 0
  %524 = vmatprep.subr.bf16.mxu0 0
  %525 = vmatpush1.bf16.msra.mxu0 0
  %526 = vmatprep.subr.bf16.mxu0 0
  %527 = vmatpush1.bf16.msra.mxu0 0
  %528 = vmatprep.subr.bf16.mxu0 0
  %529 = vmatpush1.bf16.msra.mxu0 0
  %530 = vmatprep.subr.bf16.mxu0 0
  %531 = vmatpush1.bf16.msra.mxu0 0
  %532 = vmatprep.mubr.bf16.mxu0 0
  %533 = vmatmul.mubr.bf16.gmra.mrb[0].mxu0 %v498
  %v534 = vpop.f32.mrb[0].mxu0
  %v535 = vadd.f32 0.0, %v534
  %v536 = vpop.f32.mrb[0].mxu0
  %v537 = vadd.f32 0.0, %v536
  %v538 = vpop.f32.mrb[0].mxu0
  %v539 = vadd.f32 0.0, %v538
  %v540 = vpop.f32.mrb[0].mxu0
  %v541 = vadd.f32 0.0, %v540
  %542 = vdwg.mxu0
  %v543 = vsel %vm383, %v537, 0.0
  %v544 = vadd.f32 %v535, %v543
  %545 = vadd.xlane.f32.xlu0 %v544
  %v546 = vpop.xlane.xlu0 %545
  %v547 = vsel %vm383, %v541, 0.0
  %v548 = vadd.f32 %v539, %v547
  %549 = vadd.xlane.f32.xlu0 %v548
  %v550 = vpop.xlane.xlu0 %549
  %v551 = vmul.f32 %v546, 0.0069444445
  %v552 = vmul.f32 %v550, 0.0069444445
  %v553 = vsub.f32 %v535, %v551
  %v554 = vsub.f32 %v537, %v551
  %v555 = vsub.f32 %v539, %v552
  %v556 = vsub.f32 %v541, %v552
  %v557 = vmul.f32 %v553, %v553
  %v558 = vmul.f32 %v554, %v554
  %v559 = vmul.f32 %v555, %v555
  %v560 = vmul.f32 %v556, %v556
  %v561 = vsel %vm383, %v558, 0.0
  %v562 = vadd.f32 %v557, %v561
  %563 = vadd.xlane.f32.xlu0 %v562
  %v564 = vpop.xlane.xlu0 %563
  %v565 = vsel %vm383, %v560, 0.0
  %v566 = vadd.f32 %v559, %v565
  %567 = vadd.xlane.f32.xlu0 %v566
  %v568 = vpop.xlane.xlu0 %567
  %v569 = vmul.f32 %v564, 0.0069444445
  %v570 = vmul.f32 %v568, 0.0069444445
  %v571 = vld [vmem:[%s2 + $0x10] sm:$0xff]
  %v572 = vld [vmem:[%s2 + $0x18] sm:$0xff]
  %v573 = vadd.f32 %v569, 1e-05
  %v574 = vadd.f32 %v570, 1e-05
  %v575 = vrsqrt.pop %v573
  %v576 = vrsqrt.pop %v574
  %v577 = vmul.f32 %v571, %v575
  %v578 = vmul.f32 %v572, %v576
  %580 = vset.pattern.permute.xlu0 0
  %581 = vperm.xlu0 %580, %v577
  %v582 = vpop.permute.xlu0 %581
  %585 = vset.pattern.permute.xlu0 0
  %586 = vperm.xlu0 %585, %v578
  %v587 = vpop.permute.xlu0 %586
  %v589 = vmul.f32 %v553, %v582
  %v590 = vmul.f32 %v554, %v582
  %v591 = vmul.f32 %v555, %v587
  %v592 = vmul.f32 %v556, %v587
  %594 = vset.pattern.permute.xlu0 1
  %595 = vperm.xlu0 %594, %v571
  %v596 = vpop.permute.xlu0 %595
  %599 = vset.pattern.permute.xlu0 1
  %600 = vperm.xlu0 %599, %v572
  %v601 = vpop.permute.xlu0 %600
  %v603 = vadd.f32 %v589, %v596
  %v604 = vadd.f32 %v590, %v596
  %v605 = vadd.f32 %v591, %v601
  %v606 = vadd.f32 %v592, %v601
  %v607 = vxor.u32 %v603, 2147483648
  %v608 = vxor.u32 %v604, 2147483648
  %v609 = vxor.u32 %v605, 2147483648
  %v610 = vxor.u32 %v606, 2147483648
  %v611 = vmul.f32 %v607, 1.442695
  %v612 = vpow.pop %v611
  %v613 = vmul.f32 %v608, 1.442695
  %v614 = vpow.pop %v613
  %v615 = vmul.f32 %v609, 1.442695
  %v616 = vpow.pop %v615
  %v617 = vmul.f32 %v610, 1.442695
  %v618 = vpow.pop %v617
  %v619 = vadd.f32 %v612, 1.0
  %v620 = vadd.f32 %v614, 1.0
  %v621 = vadd.f32 %v616, 1.0
  %v622 = vadd.f32 %v618, 1.0
  %v623 = vrcp.pop %v619
  %v624 = vmul.f32 1.0, %v623
  %v625 = vrcp.pop %v620
  %v626 = vmul.f32 1.0, %v625
  %v627 = vrcp.pop %v621
  %v628 = vmul.f32 1.0, %v627
  %v629 = vrcp.pop %v622
  %v630 = vmul.f32 1.0, %v629
  %v631 = vmul.f32 %v603, %v624
  %v632 = vmul.f32 %v604, %v626
  %v633 = vmul.f32 %v605, %v628
  %v634 = vmul.f32 %v606, %v630
  %vm635 = vcmask 572416
  %636 = vst.msk [vmem:[#allocation2] sm:$0xff] %vm635, %v631
  %637 = vst.msk [vmem:[#allocation2 + $0x10] sm:$0xff] %vm635, %v633
  %640 = vrot.lane.b32.xlu0 %v631, 127
  %v641 = vpop.permute.xlu0 %640
  %642 = vrot.lane.b32.xlu0 %v633, 127
  %v643 = vpop.permute.xlu0 %642
  %646 = vst.msk [vmem:[#allocation2 + $0x20] sm:$0xff] %vm635, %v641
  %647 = vst.msk [vmem:[#allocation2 + $0x30] sm:$0xff] %vm635, %v643
  %648 = vrot.lane.b32.xlu0 %v631, 126
  %v649 = vpop.permute.xlu0 %648
  %650 = vrot.lane.b32.xlu0 %v633, 126
  %v651 = vpop.permute.xlu0 %650
  %654 = vst.msk [vmem:[#allocation2 + $0x40] sm:$0xff] %vm635, %v649
  %655 = vst.msk [vmem:[#allocation2 + $0x50] sm:$0xff] %vm635, %v651
  %658 = vrot.lane.b32.xlu0 %v632, 126
  %v659 = vpop.permute.xlu0 %658
  %660 = vrot.lane.b32.xlu0 %v634, 126
  %v661 = vpop.permute.xlu0 %660
  %vm662 = vcmask 1031168
  %v663 = vsel %vm662, %v649, %v659
  %v664 = vsel %vm662, %v651, %v661
  %vm669 = vcmask 1048112
  %670 = vst.msk [vmem:[#allocation2] sm:$0xff] %vm669, %v663
  %vm671 = vcmask 97280
  %672 = vst.msk [vmem:[#allocation2 + $0x8] sm:$0xff] %vm671, %v659
  %673 = vst.msk [vmem:[#allocation2 + $0x10] sm:$0xff] %vm669, %v664
  %674 = vst.msk [vmem:[#allocation2 + $0x18] sm:$0xff] %vm671, %v661
  %675 = vrot.lane.b32.xlu0 %v631, 125
  %v676 = vpop.permute.xlu0 %675
  %677 = vrot.lane.b32.xlu0 %v632, 125
  %v678 = vpop.permute.xlu0 %677
  %679 = vrot.lane.b32.xlu0 %v633, 125
  %v680 = vpop.permute.xlu0 %679
  %681 = vrot.lane.b32.xlu0 %v634, 125
  %v682 = vpop.permute.xlu0 %681
  %vm683 = vcmask 1022976
  %v684 = vsel %vm683, %v676, %v678
  %v685 = vsel %vm683, %v680, %v682
  %690 = vst.msk [vmem:[#allocation2 + $0x20] sm:$0xff] %vm669, %v684
  %691 = vst.msk [vmem:[#allocation2 + $0x28] sm:$0xff] %vm671, %v678
  %692 = vst.msk [vmem:[#allocation2 + $0x30] sm:$0xff] %vm669, %v685
  %693 = vst.msk [vmem:[#allocation2 + $0x38] sm:$0xff] %vm671, %v682
  %694 = vrot.lane.b32.xlu0 %v631, 124
  %v695 = vpop.permute.xlu0 %694
  %696 = vrot.lane.b32.xlu0 %v632, 124
  %v697 = vpop.permute.xlu0 %696
  %698 = vrot.lane.b32.xlu0 %v633, 124
  %v699 = vpop.permute.xlu0 %698
  %700 = vrot.lane.b32.xlu0 %v634, 124
  %v701 = vpop.permute.xlu0 %700
  %v702 = vsel %vm45, %v695, %v697
  %v703 = vsel %vm45, %v699, %v701
  %708 = vst.msk [vmem:[#allocation2 + $0x40] sm:$0xff] %vm669, %v702
  %709 = vst.msk [vmem:[#allocation2 + $0x48] sm:$0xff] %vm671, %v697
  %710 = vst.msk [vmem:[#allocation2 + $0x50] sm:$0xff] %vm669, %v703
  %711 = vst.msk [vmem:[#allocation2 + $0x58] sm:$0xff] %vm671, %v701
  %v712 = vld [vmem:[%s1 + $0x20] sm:$0xf]
  %v713 = vld [vmem:[%s1 + $0x28] sm:$0xf]
  %v714 = vld [vmem:[%s1 + $0x30] sm:$0xf]
  %v715 = vld [vmem:[%s1 + $0x38] sm:$0xf]
  %v716 = vld [vmem:[#allocation2] sm:$0xff]
  %v717 = vld [vmem:[#allocation2 + $0x8] sm:$0xff]
  %v718 = vld [vmem:[#allocation2 + $0x10] sm:$0xff]
  %v719 = vld [vmem:[#allocation2 + $0x18] sm:$0xff]
  %v720 = vld [vmem:[#allocation2 + $0x20] sm:$0xff]
  %v721 = vld [vmem:[#allocation2 + $0x28] sm:$0xff]
  %v722 = vld [vmem:[#allocation2 + $0x30] sm:$0xff]
  %v723 = vld [vmem:[#allocation2 + $0x38] sm:$0xff]
  %v724 = vld [vmem:[#allocation2 + $0x40] sm:$0xff]
  %v725 = vld [vmem:[#allocation2 + $0x48] sm:$0xff]
  %v726 = vld [vmem:[#allocation2 + $0x50] sm:$0xff]
  %v727 = vld [vmem:[#allocation2 + $0x58] sm:$0xff]
  %v728 = vpack.c.bf16 %v718, %v716
  %v729 = vpack.c.bf16 %v719, %v717
  %v730 = vpack.c.bf16 %v722, %v720
  %v731 = vpack.c.bf16 %v723, %v721
  %v732 = vpack.c.bf16 %v726, %v724
  %v733 = vpack.c.bf16 %v727, %v725
  %v738 = vunpack.c.l.b16 %v712
  %v739 = vunpack.c.l.b16 %v713
  %v740 = vunpack.c.l.b16 %v714
  %v741 = vunpack.c.l.b16 %v715
  %v742 = vpack.c.b16 %v739, %v738
  %v743 = vpack.c.b16 %v741, %v740
  %vm744 = vcmask 392192
  %v746 = vsel %vm744, %v742, 0
  %v749 = vsel %vm744, %v743, 0
  %751 = vmatprep.subr.bf16.mxu0 %v729
  %752 = vmatpush1.bf16.msra.mxu0 %v728
  %753 = vmatprep.subr.bf16.mxu0 %v731
  %754 = vmatpush1.bf16.msra.mxu0 %v730
  %755 = vmatprep.subr.bf16.mxu0 %v733
  %756 = vmatpush1.bf16.msra.mxu0 %v732
  %757 = vmatprep.subr.bf16.mxu0 0
  %758 = vmatpush1.bf16.msra.mxu0 0
  %759 = vmatprep.subr.bf16.mxu0 0
  %760 = vmatpush1.bf16.msra.mxu0 0
  %761 = vmatprep.subr.bf16.mxu0 0
  %762 = vmatpush1.bf16.msra.mxu0 0
  %763 = vmatprep.subr.bf16.mxu0 0
  %764 = vmatpush1.bf16.msra.mxu0 0
  %765 = vmatprep.subr.bf16.mxu0 0
  %766 = vmatpush1.bf16.msra.mxu0 0
  %767 = vmatprep.subr.bf16.mxu0 0
  %768 = vmatpush1.bf16.msra.mxu0 0
  %769 = vmatprep.subr.bf16.mxu0 0
  %770 = vmatpush1.bf16.msra.mxu0 0
  %771 = vmatprep.subr.bf16.mxu0 0
  %772 = vmatpush1.bf16.msra.mxu0 0
  %773 = vmatprep.subr.bf16.mxu0 0
  %774 = vmatpush1.bf16.msra.mxu0 0
  %775 = vmatprep.subr.bf16.mxu0 0
  %776 = vmatpush1.bf16.msra.mxu0 0
  %777 = vmatprep.subr.bf16.mxu0 0
  %778 = vmatpush1.bf16.msra.mxu0 0
  %779 = vmatprep.subr.bf16.mxu0 0
  %780 = vmatpush1.bf16.msra.mxu0 0
  %781 = vmatprep.subr.bf16.mxu0 0
  %782 = vmatpush1.bf16.msra.mxu0 0
  %783 = vmatprep.mubr.bf16.mxu0 0
  %784 = vmatmul.mubr.bf16.gmra.mrb[0].mxu0 %v746
  %v785 = vpop.f32.mrb[0].mxu0
  %v786 = vadd.f32 0.0, %v785
  %v787 = vpop.f32.mrb[0].mxu0
  %v788 = vadd.f32 0.0, %v787
  %v789 = vpop.f32.mrb[0].mxu0
  %v790 = vadd.f32 0.0, %v789
  %v791 = vpop.f32.mrb[0].mxu0
  %v792 = vadd.f32 0.0, %v791
  %793 = vmatprep.mubr.bf16.mxu0 0
  %794 = vmatmul.mubr.bf16.gmra.mrb[0].mxu0 %v749
  %v795 = vpop.f32.mrb[0].mxu0
  %v796 = vadd.f32 0.0, %v795
  %v797 = vpop.f32.mrb[0].mxu0
  %v798 = vadd.f32 0.0, %v797
  %v799 = vpop.f32.mrb[0].mxu0
  %v800 = vadd.f32 0.0, %v799
  %v801 = vpop.f32.mrb[0].mxu0
  %v802 = vadd.f32 0.0, %v801
  %803 = vdwg.mxu0
  %v804 = vsel %vm671, %v788, 0.0
  %v805 = vadd.f32 %v786, %v804
  %806 = vadd.xlane.f32.xlu0 %v805
  %v807 = vpop.xlane.xlu0 %806
  %v808 = vsel %vm671, %v792, 0.0
  %v809 = vadd.f32 %v790, %v808
  %810 = vadd.xlane.f32.xlu0 %v809
  %v811 = vpop.xlane.xlu0 %810
  %v812 = vsel %vm671, %v798, 0.0
  %v813 = vadd.f32 %v796, %v812
  %814 = vadd.xlane.f32.xlu0 %v813
  %v815 = vpop.xlane.xlu0 %814
  %v816 = vsel %vm671, %v802, 0.0
  %v817 = vadd.f32 %v800, %v816
  %818 = vadd.xlane.f32.xlu0 %v817
  %v819 = vpop.xlane.xlu0 %818
  %v820 = vmul.f32 %v807, 0.007142857
  %v821 = vmul.f32 %v811, 0.007142857
  %v822 = vmul.f32 %v815, 0.007142857
  %v823 = vmul.f32 %v819, 0.007142857
  %v824 = vsub.f32 %v786, %v820
  %v825 = vsub.f32 %v788, %v820
  %v826 = vsub.f32 %v790, %v821
  %v827 = vsub.f32 %v792, %v821
  %v828 = vsub.f32 %v796, %v822
  %v829 = vsub.f32 %v798, %v822
  %v830 = vsub.f32 %v800, %v823
  %v831 = vsub.f32 %v802, %v823
  %v832 = vmul.f32 %v824, %v824
  %v833 = vmul.f32 %v825, %v825
  %v834 = vmul.f32 %v826, %v826
  %v835 = vmul.f32 %v827, %v827
  %v836 = vmul.f32 %v828, %v828
  %v837 = vmul.f32 %v829, %v829
  %v838 = vmul.f32 %v830, %v830
  %v839 = vmul.f32 %v831, %v831
  %v840 = vsel %vm671, %v833, 0.0
  %v841 = vadd.f32 %v832, %v840
  %842 = vadd.xlane.f32.xlu0 %v841
  %v843 = vpop.xlane.xlu0 %842
  %v844 = vsel %vm671, %v835, 0.0
  %v845 = vadd.f32 %v834, %v844
  %846 = vadd.xlane.f32.xlu0 %v845
  %v847 = vpop.xlane.xlu0 %846
  %v848 = vsel %vm671, %v837, 0.0
  %v849 = vadd.f32 %v836, %v848
  %850 = vadd.xlane.f32.xlu0 %v849
  %v851 = vpop.xlane.xlu0 %850
  %v852 = vsel %vm671, %v839, 0.0
  %v853 = vadd.f32 %v838, %v852
  %854 = vadd.xlane.f32.xlu0 %v853
  %v855 = vpop.xlane.xlu0 %854
  %v856 = vmul.f32 %v843, 0.007142857
  %v857 = vmul.f32 %v847, 0.007142857
  %v858 = vmul.f32 %v851, 0.007142857
  %v859 = vmul.f32 %v855, 0.007142857
  %v860 = vld [vmem:[%s2 + $0x20] sm:$0xff]
  %v861 = vld [vmem:[%s2 + $0x28] sm:$0xff]
  %v862 = vld [vmem:[%s2 + $0x30] sm:$0xff]
  %v863 = vld [vmem:[%s2 + $0x38] sm:$0xff]
  %v864 = vadd.f32 %v856, 1e-05
  %v865 = vadd.f32 %v857, 1e-05
  %v866 = vadd.f32 %v858, 1e-05
  %v867 = vadd.f32 %v859, 1e-05
  %v868 = vrsqrt.pop %v864
  %v869 = vrsqrt.pop %v865
  %v870 = vrsqrt.pop %v866
  %v871 = vrsqrt.pop %v867
  %v872 = vmul.f32 %v860, %v868
  %v873 = vmul.f32 %v861, %v869
  %v874 = vmul.f32 %v862, %v870
  %v875 = vmul.f32 %v863, %v871
  %877 = vset.pattern.permute.xlu0 0
  %878 = vperm.xlu0 %877, %v872
  %v879 = vpop.permute.xlu0 %878
  %882 = vset.pattern.permute.xlu0 0
  %883 = vperm.xlu0 %882, %v873
  %v884 = vpop.permute.xlu0 %883
  %887 = vset.pattern.permute.xlu0 0
  %888 = vperm.xlu0 %887, %v874
  %v889 = vpop.permute.xlu0 %888
  %892 = vset.pattern.permute.xlu0 0
  %893 = vperm.xlu0 %892, %v875
  %v894 = vpop.permute.xlu0 %893
  %v896 = vmul.f32 %v824, %v879
  %v897 = vmul.f32 %v825, %v879
  %v898 = vmul.f32 %v826, %v884
  %v899 = vmul.f32 %v827, %v884
  %v900 = vmul.f32 %v828, %v889
  %v901 = vmul.f32 %v829, %v889
  %v902 = vmul.f32 %v830, %v894
  %v903 = vmul.f32 %v831, %v894
  %905 = vset.pattern.permute.xlu0 1
  %906 = vperm.xlu0 %905, %v860
  %v907 = vpop.permute.xlu0 %906
  %910 = vset.pattern.permute.xlu0 1
  %911 = vperm.xlu0 %910, %v861
  %v912 = vpop.permute.xlu0 %911
  %915 = vset.pattern.permute.xlu0 1
  %916 = vperm.xlu0 %915, %v862
  %v917 = vpop.permute.xlu0 %916
  %920 = vset.pattern.permute.xlu0 1
  %921 = vperm.xlu0 %920, %v863
  %v922 = vpop.permute.xlu0 %921
  %v924 = vadd.f32 %v896, %v907
  %v925 = vadd.f32 %v897, %v907
  %v926 = vadd.f32 %v898, %v912
  %v927 = vadd.f32 %v899, %v912
  %v928 = vadd.f32 %v900, %v917
  %v929 = vadd.f32 %v901, %v917
  %v930 = vadd.f32 %v902, %v922
  %v931 = vadd.f32 %v903, %v922
  %v932 = vxor.u32 %v924, 2147483648
  %v933 = vxor.u32 %v925, 2147483648
  %v934 = vxor.u32 %v926, 2147483648
  %v935 = vxor.u32 %v927, 2147483648
  %v936 = vxor.u32 %v928, 2147483648
  %v937 = vxor.u32 %v929, 2147483648
  %v938 = vxor.u32 %v930, 2147483648
  %v939 = vxor.u32 %v931, 2147483648
  %v940 = vmul.f32 %v932, 1.442695
  %v941 = vpow.pop %v940
  %v942 = vmul.f32 %v933, 1.442695
  %v943 = vpow.pop %v942
  %v944 = vmul.f32 %v934, 1.442695
  %v945 = vpow.pop %v944
  %v946 = vmul.f32 %v935, 1.442695
  %v947 = vpow.pop %v946
  %v948 = vmul.f32 %v936, 1.442695
  %v949 = vpow.pop %v948
  %v950 = vmul.f32 %v937, 1.442695
  %v951 = vpow.pop %v950
  %v952 = vmul.f32 %v938, 1.442695
  %v953 = vpow.pop %v952
  %v954 = vmul.f32 %v939, 1.442695
  %v955 = vpow.pop %v954
  %v956 = vadd.f32 %v941, 1.0
  %v957 = vadd.f32 %v943, 1.0
  %v958 = vadd.f32 %v945, 1.0
  %v959 = vadd.f32 %v947, 1.0
  %v960 = vadd.f32 %v949, 1.0
  %v961 = vadd.f32 %v951, 1.0
  %v962 = vadd.f32 %v953, 1.0
  %v963 = vadd.f32 %v955, 1.0
  %v964 = vrcp.pop %v956
  %v965 = vmul.f32 1.0, %v964
  %v966 = vrcp.pop %v957
  %v967 = vmul.f32 1.0, %v966
  %v968 = vrcp.pop %v958
  %v969 = vmul.f32 1.0, %v968
  %v970 = vrcp.pop %v959
  %v971 = vmul.f32 1.0, %v970
  %v972 = vrcp.pop %v960
  %v973 = vmul.f32 1.0, %v972
  %v974 = vrcp.pop %v961
  %v975 = vmul.f32 1.0, %v974
  %v976 = vrcp.pop %v962
  %v977 = vmul.f32 1.0, %v976
  %v978 = vrcp.pop %v963
  %v979 = vmul.f32 1.0, %v978
  %v980 = vmul.f32 %v924, %v965
  %v981 = vmul.f32 %v925, %v967
  %v982 = vmul.f32 %v926, %v969
  %v983 = vmul.f32 %v927, %v971
  %v984 = vmul.f32 %v928, %v973
  %v985 = vmul.f32 %v929, %v975
  %v986 = vmul.f32 %v930, %v977
  %v987 = vmul.f32 %v931, %v979
  %vm988 = vcmask 556032
  %989 = vst.msk [vmem:[#allocation2] sm:$0xff] %vm988, %v980
  %990 = vst.msk [vmem:[#allocation2 + $0x10] sm:$0xff] %vm988, %v982
  %991 = vst.msk [vmem:[#allocation2 + $0x20] sm:$0xff] %vm988, %v984
  %992 = vst.msk [vmem:[#allocation2 + $0x30] sm:$0xff] %vm988, %v986
  %997 = vrot.lane.b32.xlu0 %v980, 127
  %v998 = vpop.permute.xlu0 %997
  %999 = vrot.lane.b32.xlu0 %v982, 127
  %v1000 = vpop.permute.xlu0 %999
  %1001 = vrot.lane.b32.xlu0 %v984, 127
  %v1002 = vpop.permute.xlu0 %1001
  %1003 = vrot.lane.b32.xlu0 %v986, 127
  %v1004 = vpop.permute.xlu0 %1003
  %1009 = vst.msk [vmem:[#allocation2 + $0x40] sm:$0xff] %vm988, %v998
  %1010 = vst.msk [vmem:[#allocation2 + $0x50] sm:$0xff] %vm988, %v1000
  %1011 = vst.msk [vmem:[#allocation2 + $0x60] sm:$0xff] %vm988, %v1002
  %1012 = vst.msk [vmem:[#allocation2 + $0x70] sm:$0xff] %vm988, %v1004
  %1013 = vrot.lane.b32.xlu0 %v980, 126
  %v1014 = vpop.permute.xlu0 %1013
  %1015 = vrot.lane.b32.xlu0 %v982, 126
  %v1016 = vpop.permute.xlu0 %1015
  %1017 = vrot.lane.b32.xlu0 %v984, 126
  %v1018 = vpop.permute.xlu0 %1017
  %1019 = vrot.lane.b32.xlu0 %v986, 126
  %v1020 = vpop.permute.xlu0 %1019
  %1025 = vst.msk [vmem:[#allocation2 + $0x80] sm:$0xff] %vm988, %v1014
  %1026 = vst.msk [vmem:[#allocation2 + $0x90] sm:$0xff] %vm988, %v1016
  %1027 = vst.msk [vmem:[#allocation2 + $0xa0] sm:$0xff] %vm988, %v1018
  %1028 = vst.msk [vmem:[#allocation2 + $0xb0] sm:$0xff] %vm988, %v1020
  %1033 = vrot.lane.b32.xlu0 %v981, 126
  %v1034 = vpop.permute.xlu0 %1033
  %1035 = vrot.lane.b32.xlu0 %v983, 126
  %v1036 = vpop.permute.xlu0 %1035
  %1037 = vrot.lane.b32.xlu0 %v985, 126
  %v1038 = vpop.permute.xlu0 %1037
  %1039 = vrot.lane.b32.xlu0 %v987, 126
  %v1040 = vpop.permute.xlu0 %1039
  %v1041 = vsel %vm662, %v1014, %v1034
  %v1042 = vsel %vm662, %v1016, %v1036
  %v1043 = vsel %vm662, %v1018, %v1038
  %v1044 = vsel %vm662, %v1020, %v1040
  %vm1053 = vcmask 1048096
  %1054 = vst.msk [vmem:[#allocation2] sm:$0xff] %vm1053, %v1041
  %vm1055 = vcmask 64512
  %1056 = vst.msk [vmem:[#allocation2 + $0x8] sm:$0xff] %vm1055, %v1034
  %1057 = vst.msk [vmem:[#allocation2 + $0x10] sm:$0xff] %vm1053, %v1042
  %1058 = vst.msk [vmem:[#allocation2 + $0x18] sm:$0xff] %vm1055, %v1036
  %1059 = vst.msk [vmem:[#allocation2 + $0x20] sm:$0xff] %vm1053, %v1043
  %1060 = vst.msk [vmem:[#allocation2 + $0x28] sm:$0xff] %vm1055, %v1038
  %1061 = vst.msk [vmem:[#allocation2 + $0x30] sm:$0xff] %vm1053, %v1044
  %1062 = vst.msk [vmem:[#allocation2 + $0x38] sm:$0xff] %vm1055, %v1040
  %1063 = vrot.lane.b32.xlu0 %v980, 125
  %v1064 = vpop.permute.xlu0 %1063
  %1065 = vrot.lane.b32.xlu0 %v981, 125
  %v1066 = vpop.permute.xlu0 %1065
  %1067 = vrot.lane.b32.xlu0 %v982, 125
  %v1068 = vpop.permute.xlu0 %1067
  %1069 = vrot.lane.b32.xlu0 %v983, 125
  %v1070 = vpop.permute.xlu0 %1069
  %1071 = vrot.lane.b32.xlu0 %v984, 125
  %v1072 = vpop.permute.xlu0 %1071
  %1073 = vrot.lane.b32.xlu0 %v985, 125
  %v1074 = vpop.permute.xlu0 %1073
  %1075 = vrot.lane.b32.xlu0 %v986, 125
  %v1076 = vpop.permute.xlu0 %1075
  %1077 = vrot.lane.b32.xlu0 %v987, 125
  %v1078 = vpop.permute.xlu0 %1077
  %v1079 = vsel %vm683, %v1064, %v1066
  %v1080 = vsel %vm683, %v1068, %v1070
  %v1081 = vsel %vm683, %v1072, %v1074
  %v1082 = vsel %vm683, %v1076, %v1078
  %1091 = vst.msk [vmem:[#allocation2 + $0x40] sm:$0xff] %vm1053, %v1079
  %1092 = vst.msk [vmem:[#allocation2 + $0x48] sm:$0xff] %vm1055, %v1066
  %1093 = vst.msk [vmem:[#allocation2 + $0x50] sm:$0xff] %vm1053, %v1080
  %1094 = vst.msk [vmem:[#allocation2 + $0x58] sm:$0xff] %vm1055, %v1070
  %1095 = vst.msk [vmem:[#allocation2 + $0x60] sm:$0xff] %vm1053, %v1081
  %1096 = vst.msk [vmem:[#allocation2 + $0x68] sm:$0xff] %vm1055, %v1074
  %1097 = vst.msk [vmem:[#allocation2 + $0x70] sm:$0xff] %vm1053, %v1082
  %1098 = vst.msk [vmem:[#allocation2 + $0x78] sm:$0xff] %vm1055, %v1078
  %1099 = vrot.lane.b32.xlu0 %v980, 124
  %v1100 = vpop.permute.xlu0 %1099
  %1101 = vrot.lane.b32.xlu0 %v981, 124
  %v1102 = vpop.permute.xlu0 %1101
  %1103 = vrot.lane.b32.xlu0 %v982, 124
  %v1104 = vpop.permute.xlu0 %1103
  %1105 = vrot.lane.b32.xlu0 %v983, 124
  %v1106 = vpop.permute.xlu0 %1105
  %1107 = vrot.lane.b32.xlu0 %v984, 124
  %v1108 = vpop.permute.xlu0 %1107
  %1109 = vrot.lane.b32.xlu0 %v985, 124
  %v1110 = vpop.permute.xlu0 %1109
  %1111 = vrot.lane.b32.xlu0 %v986, 124
  %v1112 = vpop.permute.xlu0 %1111
  %1113 = vrot.lane.b32.xlu0 %v987, 124
  %v1114 = vpop.permute.xlu0 %1113
  %v1115 = vsel %vm45, %v1100, %v1102
  %v1116 = vsel %vm45, %v1104, %v1106
  %v1117 = vsel %vm45, %v1108, %v1110
  %v1118 = vsel %vm45, %v1112, %v1114
  %1127 = vst.msk [vmem:[#allocation2 + $0x80] sm:$0xff] %vm1053, %v1115
  %1128 = vst.msk [vmem:[#allocation2 + $0x88] sm:$0xff] %vm1055, %v1102
  %1129 = vst.msk [vmem:[#allocation2 + $0x90] sm:$0xff] %vm1053, %v1116
  %1130 = vst.msk [vmem:[#allocation2 + $0x98] sm:$0xff] %vm1055, %v1106
  %1131 = vst.msk [vmem:[#allocation2 + $0xa0] sm:$0xff] %vm1053, %v1117
  %1132 = vst.msk [vmem:[#allocation2 + $0xa8] sm:$0xff] %vm1055, %v1110
  %1133 = vst.msk [vmem:[#allocation2 + $0xb0] sm:$0xff] %vm1053, %v1118
  %1134 = vst.msk [vmem:[#allocation2 + $0xb8] sm:$0xff] %vm1055, %v1114
  %v1135 = vld [vmem:[%s1 + $0x40] sm:$0xf]
  %v1136 = vld [vmem:[%s1 + $0x48] sm:$0xf]
  %v1137 = vld [vmem:[%s1 + $0x50] sm:$0xf]
  %v1138 = vld [vmem:[%s1 + $0x58] sm:$0xf]
  %v1139 = vld [vmem:[#allocation2] sm:$0xff]
  %v1140 = vld [vmem:[#allocation2 + $0x8] sm:$0xff]
  %v1141 = vld [vmem:[#allocation2 + $0x10] sm:$0xff]
  %v1142 = vld [vmem:[#allocation2 + $0x18] sm:$0xff]
  %v1143 = vld [vmem:[#allocation2 + $0x20] sm:$0xff]
  %v1144 = vld [vmem:[#allocation2 + $0x28] sm:$0xff]
  %v1145 = vld [vmem:[#allocation2 + $0x30] sm:$0xff]
  %v1146 = vld [vmem:[#allocation2 + $0x38] sm:$0xff]
  %v1147 = vld [vmem:[#allocation2 + $0x40] sm:$0xff]
  %v1148 = vld [vmem:[#allocation2 + $0x48] sm:$0xff]
  %v1149 = vld [vmem:[#allocation2 + $0x50] sm:$0xff]
  %v1150 = vld [vmem:[#allocation2 + $0x58] sm:$0xff]
  %v1151 = vld [vmem:[#allocation2 + $0x60] sm:$0xff]
  %v1152 = vld [vmem:[#allocation2 + $0x68] sm:$0xff]
  %v1153 = vld [vmem:[#allocation2 + $0x70] sm:$0xff]
  %v1154 = vld [vmem:[#allocation2 + $0x78] sm:$0xff]
  %v1155 = vld [vmem:[#allocation2 + $0x80] sm:$0xff]
  %v1156 = vld [vmem:[#allocation2 + $0x88] sm:$0xff]
  %v1157 = vld [vmem:[#allocation2 + $0x90] sm:$0xff]
  %v1158 = vld [vmem:[#allocation2 + $0x98] sm:$0xff]
  %v1159 = vld [vmem:[#allocation2 + $0xa0] sm:$0xff]
  %v1160 = vld [vmem:[#allocation2 + $0xa8] sm:$0xff]
  %v1161 = vld [vmem:[#allocation2 + $0xb0] sm:$0xff]
  %v1162 = vld [vmem:[#allocation2 + $0xb8] sm:$0xff]
  %v1163 = vpack.c.bf16 %v1141, %v1139
  %v1164 = vpack.c.bf16 %v1142, %v1140
  %v1165 = vpack.c.bf16 %v1145, %v1143
  %v1166 = vpack.c.bf16 %v1146, %v1144
  %v1167 = vpack.c.bf16 %v1149, %v1147
  %v1168 = vpack.c.bf16 %v1150, %v1148
  %v1169 = vpack.c.bf16 %v1153, %v1151
  %v1170 = vpack.c.bf16 %v1154, %v1152
  %v1171 = vpack.c.bf16 %v1157, %v1155
  %v1172 = vpack.c.bf16 %v1158, %v1156
  %v1173 = vpack.c.bf16 %v1161, %v1159
  %v1174 = vpack.c.bf16 %v1162, %v1160
  %v1179 = vunpack.c.l.b16 %v1135
  %v1180 = vunpack.c.l.b16 %v1136
  %v1181 = vunpack.c.l.b16 %v1137
  %v1182 = vunpack.c.l.b16 %v1138
  %v1183 = vpack.c.b16 %v1180, %v1179
  %v1184 = vpack.c.b16 %v1182, %v1181
  %vm1185 = vcmask 785408
  %v1187 = vsel %vm1185, %v1183, 0
  %v1190 = vsel %vm1185, %v1184, 0
  %1192 = vmatprep.subr.bf16.mxu0 %v1164
  %1193 = vmatpush1.bf16.msra.mxu0 %v1163
  %1194 = vmatprep.subr.bf16.mxu0 %v1166
  %1195 = vmatpush1.bf16.msra.mxu0 %v1165
  %1196 = vmatprep.subr.bf16.mxu0 %v1168
  %1197 = vmatpush1.bf16.msra.mxu0 %v1167
  %1198 = vmatprep.subr.bf16.mxu0 %v1170
  %1199 = vmatpush1.bf16.msra.mxu0 %v1169
  %1200 = vmatprep.subr.bf16.mxu0 %v1172
  %1201 = vmatpush1.bf16.msra.mxu0 %v1171
  %1202 = vmatprep.subr.bf16.mxu0 %v1174
  %1203 = vmatpush1.bf16.msra.mxu0 %v1173
  %1204 = vmatprep.subr.bf16.mxu0 0
  %1205 = vmatpush1.bf16.msra.mxu0 0
  %1206 = vmatprep.subr.bf16.mxu0 0
  %1207 = vmatpush1.bf16.msra.mxu0 0
  %1208 = vmatprep.subr.bf16.mxu0 0
  %1209 = vmatpush1.bf16.msra.mxu0 0
  %1210 = vmatprep.subr.bf16.mxu0 0
  %1211 = vmatpush1.bf16.msra.mxu0 0
  %1212 = vmatprep.subr.bf16.mxu0 0
  %1213 = vmatpush1.bf16.msra.mxu0 0
  %1214 = vmatprep.subr.bf16.mxu0 0
  %1215 = vmatpush1.bf16.msra.mxu0 0
  %1216 = vmatprep.subr.bf16.mxu0 0
  %1217 = vmatpush1.bf16.msra.mxu0 0
  %1218 = vmatprep.subr.bf16.mxu0 0
  %1219 = vmatpush1.bf16.msra.mxu0 0
  %1220 = vmatprep.subr.bf16.mxu0 0
  %1221 = vmatpush1.bf16.msra.mxu0 0
  %1222 = vmatprep.subr.bf16.mxu0 0
  %1223 = vmatpush1.bf16.msra.mxu0 0
  %1224 = vmatprep.mubr.bf16.mxu0 0
  %1225 = vmatmul.mubr.bf16.gmra.mrb[0].mxu0 %v1187
  %v1226 = vpop.f32.mrb[0].mxu0
  %v1227 = vadd.f32 0.0, %v1226
  %v1228 = vpop.f32.mrb[0].mxu0
  %v1229 = vadd.f32 0.0, %v1228
  %v1230 = vpop.f32.mrb[0].mxu0
  %v1231 = vadd.f32 0.0, %v1230
  %v1232 = vpop.f32.mrb[0].mxu0
  %v1233 = vadd.f32 0.0, %v1232
  %1234 = vmatprep.mubr.bf16.mxu0 0
  %1235 = vmatmul.mubr.bf16.gmra.mrb[0].mxu0 %v1190
  %v1236 = vpop.f32.mrb[0].mxu0
  %v1237 = vadd.f32 0.0, %v1236
  %v1238 = vpop.f32.mrb[0].mxu0
  %v1239 = vadd.f32 0.0, %v1238
  %v1240 = vpop.f32.mrb[0].mxu0
  %v1241 = vadd.f32 0.0, %v1240
  %v1242 = vpop.f32.mrb[0].mxu0
  %v1243 = vadd.f32 0.0, %v1242
  %1244 = vdwg.mxu0
  %v1245 = vsel %vm1055, %v1229, 0.0
  %v1246 = vadd.f32 %v1227, %v1245
  %1247 = vadd.xlane.f32.xlu0 %v1246
  %v1248 = vpop.xlane.xlu0 %1247
  %v1249 = vsel %vm1055, %v1233, 0.0
  %v1250 = vadd.f32 %v1231, %v1249
  %1251 = vadd.xlane.f32.xlu0 %v1250
  %v1252 = vpop.xlane.xlu0 %1251
  %v1253 = vsel %vm1055, %v1239, 0.0
  %v1254 = vadd.f32 %v1237, %v1253
  %1255 = vadd.xlane.f32.xlu0 %v1254
  %v1256 = vpop.xlane.xlu0 %1255
  %v1257 = vsel %vm1055, %v1243, 0.0
  %v1258 = vadd.f32 %v1241, %v1257
  %1259 = vadd.xlane.f32.xlu0 %v1258
  %v1260 = vpop.xlane.xlu0 %1259
  %v1261 = vmul.f32 %v1248, 0.007352941
  %v1262 = vmul.f32 %v1252, 0.007352941
  %v1263 = vmul.f32 %v1256, 0.007352941
  %v1264 = vmul.f32 %v1260, 0.007352941
  %v1265 = vsub.f32 %v1227, %v1261
  %v1266 = vsub.f32 %v1229, %v1261
  %v1267 = vsub.f32 %v1231, %v1262
  %v1268 = vsub.f32 %v1233, %v1262
  %v1269 = vsub.f32 %v1237, %v1263
  %v1270 = vsub.f32 %v1239, %v1263
  %v1271 = vsub.f32 %v1241, %v1264
  %v1272 = vsub.f32 %v1243, %v1264
  %v1273 = vmul.f32 %v1265, %v1265
  %v1274 = vmul.f32 %v1266, %v1266
  %v1275 = vmul.f32 %v1267, %v1267
  %v1276 = vmul.f32 %v1268, %v1268
  %v1277 = vmul.f32 %v1269, %v1269
  %v1278 = vmul.f32 %v1270, %v1270
  %v1279 = vmul.f32 %v1271, %v1271
  %v1280 = vmul.f32 %v1272, %v1272
  %v1281 = vsel %vm1055, %v1274, 0.0
  %v1282 = vadd.f32 %v1273, %v1281
  %1283 = vadd.xlane.f32.xlu0 %v1282
  %v1284 = vpop.xlane.xlu0 %1283
  %v1285 = vsel %vm1055, %v1276, 0.0
  %v1286 = vadd.f32 %v1275, %v1285
  %1287 = vadd.xlane.f32.xlu0 %v1286
  %v1288 = vpop.xlane.xlu0 %1287
  %v1289 = vsel %vm1055, %v1278, 0.0
  %v1290 = vadd.f32 %v1277, %v1289
  %1291 = vadd.xlane.f32.xlu0 %v1290
  %v1292 = vpop.xlane.xlu0 %1291
  %v1293 = vsel %vm1055, %v1280, 0.0
  %v1294 = vadd.f32 %v1279, %v1293
  %1295 = vadd.xlane.f32.xlu0 %v1294
  %v1296 = vpop.xlane.xlu0 %1295
  %v1297 = vmul.f32 %v1284, 0.007352941
  %v1298 = vmul.f32 %v1288, 0.007352941
  %v1299 = vmul.f32 %v1292, 0.007352941
  %v1300 = vmul.f32 %v1296, 0.007352941
  %v1301 = vld [vmem:[%s2 + $0x40] sm:$0xff]
  %v1302 = vld [vmem:[%s2 + $0x48] sm:$0xff]
  %v1303 = vld [vmem:[%s2 + $0x50] sm:$0xff]
  %v1304 = vld [vmem:[%s2 + $0x58] sm:$0xff]
  %v1305 = vadd.f32 %v1297, 1e-05
  %v1306 = vadd.f32 %v1298, 1e-05
  %v1307 = vadd.f32 %v1299, 1e-05
  %v1308 = vadd.f32 %v1300, 1e-05
  %v1309 = vrsqrt.pop %v1305
  %v1310 = vrsqrt.pop %v1306
  %v1311 = vrsqrt.pop %v1307
  %v1312 = vrsqrt.pop %v1308
  %v1313 = vmul.f32 %v1301, %v1309
  %v1314 = vmul.f32 %v1302, %v1310
  %v1315 = vmul.f32 %v1303, %v1311
  %v1316 = vmul.f32 %v1304, %v1312
  %1318 = vset.pattern.permute.xlu0 0
  %1319 = vperm.xlu0 %1318, %v1313
  %v1320 = vpop.permute.xlu0 %1319
  %1323 = vset.pattern.permute.xlu0 0
  %1324 = vperm.xlu0 %1323, %v1314
  %v1325 = vpop.permute.xlu0 %1324
  %1328 = vset.pattern.permute.xlu0 0
  %1329 = vperm.xlu0 %1328, %v1315
  %v1330 = vpop.permute.xlu0 %1329
  %1333 = vset.pattern.permute.xlu0 0
  %1334 = vperm.xlu0 %1333, %v1316
  %v1335 = vpop.permute.xlu0 %1334
  %v1337 = vmul.f32 %v1265, %v1320
  %v1338 = vmul.f32 %v1266, %v1320
  %v1339 = vmul.f32 %v1267, %v1325
  %v1340 = vmul.f32 %v1268, %v1325
  %v1341 = vmul.f32 %v1269, %v1330
  %v1342 = vmul.f32 %v1270, %v1330
  %v1343 = vmul.f32 %v1271, %v1335
  %v1344 = vmul.f32 %v1272, %v1335
  %1346 = vset.pattern.permute.xlu0 1
  %1347 = vperm.xlu0 %1346, %v1301
  %v1348 = vpop.permute.xlu0 %1347
  %1351 = vset.pattern.permute.xlu0 1
  %1352 = vperm.xlu0 %1351, %v1302
  %v1353 = vpop.permute.xlu0 %1352
  %1356 = vset.pattern.permute.xlu0 1
  %1357 = vperm.xlu0 %1356, %v1303
  %v1358 = vpop.permute.xlu0 %1357
  %1361 = vset.pattern.permute.xlu0 1
  %1362 = vperm.xlu0 %1361, %v1304
  %v1363 = vpop.permute.xlu0 %1362
  %v1365 = vadd.f32 %v1337, %v1348
  %v1366 = vadd.f32 %v1338, %v1348
  %v1367 = vadd.f32 %v1339, %v1353
  %v1368 = vadd.f32 %v1340, %v1353
  %v1369 = vadd.f32 %v1341, %v1358
  %v1370 = vadd.f32 %v1342, %v1358
  %v1371 = vadd.f32 %v1343, %v1363
  %v1372 = vadd.f32 %v1344, %v1363
  %v1373 = vxor.u32 %v1365, 2147483648
  %v1374 = vxor.u32 %v1366, 2147483648
  %v1375 = vxor.u32 %v1367, 2147483648
  %v1376 = vxor.u32 %v1368, 2147483648
  %v1377 = vxor.u32 %v1369, 2147483648
  %v1378 = vxor.u32 %v1370, 2147483648
  %v1379 = vxor.u32 %v1371, 2147483648
  %v1380 = vxor.u32 %v1372, 2147483648
  %v1381 = vmul.f32 %v1373, 1.442695
  %v1382 = vpow.pop %v1381
  %v1383 = vmul.f32 %v1374, 1.442695
  %v1384 = vpow.pop %v1383
  %v1385 = vmul.f32 %v1375, 1.442695
  %v1386 = vpow.pop %v1385
  %v1387 = vmul.f32 %v1376, 1.442695
  %v1388 = vpow.pop %v1387
  %v1389 = vmul.f32 %v1377, 1.442695
  %v1390 = vpow.pop %v1389
  %v1391 = vmul.f32 %v1378, 1.442695
  %v1392 = vpow.pop %v1391
  %v1393 = vmul.f32 %v1379, 1.442695
  %v1394 = vpow.pop %v1393
  %v1395 = vmul.f32 %v1380, 1.442695
  %v1396 = vpow.pop %v1395
  %v1397 = vadd.f32 %v1382, 1.0
  %v1398 = vadd.f32 %v1384, 1.0
  %v1399 = vadd.f32 %v1386, 1.0
  %v1400 = vadd.f32 %v1388, 1.0
  %v1401 = vadd.f32 %v1390, 1.0
  %v1402 = vadd.f32 %v1392, 1.0
  %v1403 = vadd.f32 %v1394, 1.0
  %v1404 = vadd.f32 %v1396, 1.0
  %v1405 = vrcp.pop %v1397
  %v1406 = vmul.f32 1.0, %v1405
  %v1407 = vrcp.pop %v1398
  %v1408 = vmul.f32 1.0, %v1407
  %v1409 = vrcp.pop %v1399
  %v1410 = vmul.f32 1.0, %v1409
  %v1411 = vrcp.pop %v1400
  %v1412 = vmul.f32 1.0, %v1411
  %v1413 = vrcp.pop %v1401
  %v1414 = vmul.f32 1.0, %v1413
  %v1415 = vrcp.pop %v1402
  %v1416 = vmul.f32 1.0, %v1415
  %v1417 = vrcp.pop %v1403
  %v1418 = vmul.f32 1.0, %v1417
  %v1419 = vrcp.pop %v1404
  %v1420 = vmul.f32 1.0, %v1419
  %v1421 = vmul.f32 %v1365, %v1406
  %v1422 = vmul.f32 %v1366, %v1408
  %v1423 = vmul.f32 %v1367, %v1410
  %v1424 = vmul.f32 %v1368, %v1412
  %v1425 = vmul.f32 %v1369, %v1414
  %v1426 = vmul.f32 %v1370, %v1416
  %v1427 = vmul.f32 %v1371, %v1418
  %v1428 = vmul.f32 %v1372, %v1420
  %vm1429 = vcmask 539648
  %1430 = vst.msk [vmem:[#allocation2] sm:$0xff] %vm1429, %v1421
  %1431 = vst.msk [vmem:[#allocation2 + $0x10] sm:$0xff] %vm1429, %v1423
  %1432 = vst.msk [vmem:[#allocation2 + $0x20] sm:$0xff] %vm1429, %v1425
  %1433 = vst.msk [vmem:[#allocation2 + $0x30] sm:$0xff] %vm1429, %v1427
  %1438 = vrot.lane.b32.xlu0 %v1421, 127
  %v1439 = vpop.permute.xlu0 %1438
  %1440 = vrot.lane.b32.xlu0 %v1423, 127
  %v1441 = vpop.permute.xlu0 %1440
  %1442 = vrot.lane.b32.xlu0 %v1425, 127
  %v1443 = vpop.permute.xlu0 %1442
  %1444 = vrot.lane.b32.xlu0 %v1427, 127
  %v1445 = vpop.permute.xlu0 %1444
  %1450 = vst.msk [vmem:[#allocation2 + $0x40] sm:$0xff] %vm1429, %v1439
  %1451 = vst.msk [vmem:[#allocation2 + $0x50] sm:$0xff] %vm1429, %v1441
  %1452 = vst.msk [vmem:[#allocation2 + $0x60] sm:$0xff] %vm1429, %v1443
  %1453 = vst.msk [vmem:[#allocation2 + $0x70] sm:$0xff] %vm1429, %v1445
  %1454 = vrot.lane.b32.xlu0 %v1421, 126
  %v1455 = vpop.permute.xlu0 %1454
  %1456 = vrot.lane.b32.xlu0 %v1423, 126
  %v1457 = vpop.permute.xlu0 %1456
  %1458 = vrot.lane.b32.xlu0 %v1425, 126
  %v1459 = vpop.permute.xlu0 %1458
  %1460 = vrot.lane.b32.xlu0 %v1427, 126
  %v1461 = vpop.permute.xlu0 %1460
  %1466 = vst.msk [vmem:[#allocation2 + $0x80] sm:$0xff] %vm1429, %v1455
  %1467 = vst.msk [vmem:[#allocation2 + $0x90] sm:$0xff] %vm1429, %v1457
  %1468 = vst.msk [vmem:[#allocation2 + $0xa0] sm:$0xff] %vm1429, %v1459
  %1469 = vst.msk [vmem:[#allocation2 + $0xb0] sm:$0xff] %vm1429, %v1461
  %1474 = vrot.lane.b32.xlu0 %v1422, 126
  %v1475 = vpop.permute.xlu0 %1474
  %1476 = vrot.lane.b32.xlu0 %v1424, 126
  %v1477 = vpop.permute.xlu0 %1476
  %1478 = vrot.lane.b32.xlu0 %v1426, 126
  %v1479 = vpop.permute.xlu0 %1478
  %1480 = vrot.lane.b32.xlu0 %v1428, 126
  %v1481 = vpop.permute.xlu0 %1480
  %v1482 = vsel %vm662, %v1455, %v1475
  %v1483 = vsel %vm662, %v1457, %v1477
  %v1484 = vsel %vm662, %v1459, %v1479
  %v1485 = vsel %vm662, %v1461, %v1481
  %vm1494 = vcmask 1048080
  %1495 = vst.msk [vmem:[#allocation2] sm:$0xff] %vm1494, %v1482
  %vm1496 = vcmask 31744
  %1497 = vst.msk [vmem:[#allocation2 + $0x8] sm:$0xff] %vm1496, %v1475
  %1498 = vst.msk [vmem:[#allocation2 + $0x10] sm:$0xff] %vm1494, %v1483
  %1499 = vst.msk [vmem:[#allocation2 + $0x18] sm:$0xff] %vm1496, %v1477
  %1500 = vst.msk [vmem:[#allocation2 + $0x20] sm:$0xff] %vm1494, %v1484
  %1501 = vst.msk [vmem:[#allocation2 + $0x28] sm:$0xff] %vm1496, %v1479
  %1502 = vst.msk [vmem:[#allocation2 + $0x30] sm:$0xff] %vm1494, %v1485
  %1503 = vst.msk [vmem:[#allocation2 + $0x38] sm:$0xff] %vm1496, %v1481
  %1504 = vrot.lane.b32.xlu0 %v1421, 125
  %v1505 = vpop.permute.xlu0 %1504
  %1506 = vrot.lane.b32.xlu0 %v1422, 125
  %v1507 = vpop.permute.xlu0 %1506
  %1508 = vrot.lane.b32.xlu0 %v1423, 125
  %v1509 = vpop.permute.xlu0 %1508
  %1510 = vrot.lane.b32.xlu0 %v1424, 125
  %v1511 = vpop.permute.xlu0 %1510
  %1512 = vrot.lane.b32.xlu0 %v1425, 125
  %v1513 = vpop.permute.xlu0 %1512
  %1514 = vrot.lane.b32.xlu0 %v1426, 125
  %v1515 = vpop.permute.xlu0 %1514
  %1516 = vrot.lane.b32.xlu0 %v1427, 125
  %v1517 = vpop.permute.xlu0 %1516
  %1518 = vrot.lane.b32.xlu0 %v1428, 125
  %v1519 = vpop.permute.xlu0 %1518
  %v1520 = vsel %vm683, %v1505, %v1507
  %v1521 = vsel %vm683, %v1509, %v1511
  %v1522 = vsel %vm683, %v1513, %v1515
  %v1523 = vsel %vm683, %v1517, %v1519
  %1532 = vst.msk [vmem:[#allocation2 + $0x40] sm:$0xff] %vm1494, %v1520
  %1533 = vst.msk [vmem:[#allocation2 + $0x48] sm:$0xff] %vm1496, %v1507
  %1534 = vst.msk [vmem:[#allocation2 + $0x50] sm:$0xff] %vm1494, %v1521
  %1535 = vst.msk [vmem:[#allocation2 + $0x58] sm:$0xff] %vm1496, %v1511
  %1536 = vst.msk [vmem:[#allocation2 + $0x60] sm:$0xff] %vm1494, %v1522
  %1537 = vst.msk [vmem:[#allocation2 + $0x68] sm:$0xff] %vm1496, %v1515
  %1538 = vst.msk [vmem:[#allocation2 + $0x70] sm:$0xff] %vm1494, %v1523
  %1539 = vst.msk [vmem:[#allocation2 + $0x78] sm:$0xff] %vm1496, %v1519
  %1540 = vrot.lane.b32.xlu0 %v1421, 124
  %v1541 = vpop.permute.xlu0 %1540
  %1542 = vrot.lane.b32.xlu0 %v1422, 124
  %v1543 = vpop.permute.xlu0 %1542
  %1544 = vrot.lane.b32.xlu0 %v1423, 124
  %v1545 = vpop.permute.xlu0 %1544
  %1546 = vrot.lane.b32.xlu0 %v1424, 124
  %v1547 = vpop.permute.xlu0 %1546
  %1548 = vrot.lane.b32.xlu0 %v1425, 124
  %v1549 = vpop.permute.xlu0 %1548
  %1550 = vrot.lane.b32.xlu0 %v1426, 124
  %v1551 = vpop.permute.xlu0 %1550
  %1552 = vrot.lane.b32.xlu0 %v1427, 124
  %v1553 = vpop.permute.xlu0 %1552
  %1554 = vrot.lane.b32.xlu0 %v1428, 124
  %v1555 = vpop.permute.xlu0 %1554
  %v1556 = vsel %vm45, %v1541, %v1543
  %v1557 = vsel %vm45, %v1545, %v1547
  %v1558 = vsel %vm45, %v1549, %v1551
  %v1559 = vsel %vm45, %v1553, %v1555
  %1568 = vst.msk [vmem:[#allocation2 + $0x80] sm:$0xff] %vm1494, %v1556
  %1569 = vst.msk [vmem:[#allocation2 + $0x88] sm:$0xff] %vm1496, %v1543
  %1570 = vst.msk [vmem:[#allocation2 + $0x90] sm:$0xff] %vm1494, %v1557
  %1571 = vst.msk [vmem:[#allocation2 + $0x98] sm:$0xff] %vm1496, %v1547
  %1572 = vst.msk [vmem:[#allocation2 + $0xa0] sm:$0xff] %vm1494, %v1558
  %1573 = vst.msk [vmem:[#allocation2 + $0xa8] sm:$0xff] %vm1496, %v1551
  %1574 = vst.msk [vmem:[#allocation2 + $0xb0] sm:$0xff] %vm1494, %v1559
  %1575 = vst.msk [vmem:[#allocation2 + $0xb8] sm:$0xff] %vm1496, %v1555
  %v1576 = vld [vmem:[%s1 + $0x60] sm:$0xf]
  %v1577 = vld [vmem:[%s1 + $0x68] sm:$0xf]
  %v1578 = vld [vmem:[%s1 + $0x70] sm:$0xf]
  %v1579 = vld [vmem:[%s1 + $0x78] sm:$0xf]
  %v1580 = vld [vmem:[%s1 + $0x80] sm:$0xf]
  %v1581 = vld [vmem:[%s1 + $0x88] sm:$0xf]
  %v1582 = vld [vmem:[%s1 + $0x90] sm:$0xf]
  %v1583 = vld [vmem:[%s1 + $0x98] sm:$0xf]
  %v1584 = vld [vmem:[#allocation2] sm:$0xff]
  %v1585 = vld [vmem:[#allocation2 + $0x8] sm:$0xff]
  %v1586 = vld [vmem:[#allocation2 + $0x10] sm:$0xff]
  %v1587 = vld [vmem:[#allocation2 + $0x18] sm:$0xff]
  %v1588 = vld [vmem:[#allocation2 + $0x20] sm:$0xff]
  %v1589 = vld [vmem:[#allocation2 + $0x28] sm:$0xff]
  %v1590 = vld [vmem:[#allocation2 + $0x30] sm:$0xff]
  %v1591 = vld [vmem:[#allocation2 + $0x38] sm:$0xff]
  %v1592 = vld [vmem:[#allocation2 + $0x40] sm:$0xff]
  %v1593 = vld [vmem:[#allocation2 + $0x48] sm:$0xff]
  %v1594 = vld [vmem:[#allocation2 + $0x50] sm:$0xff]
  %v1595 = vld [vmem:[#allocation2 + $0x58] sm:$0xff]
  %v1596 = vld [vmem:[#allocation2 + $0x60] sm:$0xff]
  %v1597 = vld [vmem:[#allocation2 + $0x68] sm:$0xff]
  %v1598 = vld [vmem:[#allocation2 + $0x70] sm:$0xff]
  %v1599 = vld [vmem:[#allocation2 + $0x78] sm:$0xff]
  %v1600 = vld [vmem:[#allocation2 + $0x80] sm:$0xff]
  %v1601 = vld [vmem:[#allocation2 + $0x88] sm:$0xff]
  %v1602 = vld [vmem:[#allocation2 + $0x90] sm:$0xff]
  %v1603 = vld [vmem:[#allocation2 + $0x98] sm:$0xff]
  %v1604 = vld [vmem:[#allocation2 + $0xa0] sm:$0xff]
  %v1605 = vld [vmem:[#allocation2 + $0xa8] sm:$0xff]
  %v1606 = vld [vmem:[#allocation2 + $0xb0] sm:$0xff]
  %v1607 = vld [vmem:[#allocation2 + $0xb8] sm:$0xff]
  %v1608 = vpack.c.bf16 %v1586, %v1584
  %v1609 = vpack.c.bf16 %v1587, %v1585
  %v1610 = vpack.c.bf16 %v1590, %v1588
  %v1611 = vpack.c.bf16 %v1591, %v1589
  %v1612 = vpack.c.bf16 %v1594, %v1592
  %v1613 = vpack.c.bf16 %v1595, %v1593
  %v1614 = vpack.c.bf16 %v1598, %v1596
  %v1615 = vpack.c.bf16 %v1599, %v1597
  %v1616 = vpack.c.bf16 %v1602, %v1600
  %v1617 = vpack.c.bf16 %v1603, %v1601
  %v1618 = vpack.c.bf16 %v1606, %v1604
  %v1619 = vpack.c.bf16 %v1607, %v1605
  %v1628 = vunpack.c.l.b16 %v1576
  %v1629 = vunpack.c.l.b16 %v1577
  %v1630 = vunpack.c.l.b16 %v1578
  %v1631 = vunpack.c.l.b16 %v1579
  %v1632 = vunpack.c.l.b16 %v1580
  %v1633 = vunpack.c.l.b16 %v1581
  %v1634 = vunpack.c.l.b16 %v1582
  %v1635 = vunpack.c.l.b16 %v1583
  %v1636 = vpack.c.b16 %v1629, %v1628
  %v1637 = vpack.c.b16 %v1631, %v1630
  %v1638 = vpack.c.b16 %v1633, %v1632
  %v1639 = vpack.c.b16 %v1635, %v1634
  %v1641 = vsel %vm1185, %v1636, 0
  %v1644 = vsel %vm1185, %v1637, 0
  %v1647 = vsel %vm1185, %v1638, 0
  %v1650 = vsel %vm1185, %v1639, 0
  %1652 = vmatprep.subr.bf16.mxu0 %v1609
  %1653 = vmatpush1.bf16.msra.mxu0 %v1608
  %1654 = vmatprep.subr.bf16.mxu0 %v1611
  %1655 = vmatpush1.bf16.msra.mxu0 %v1610
  %1656 = vmatprep.subr.bf16.mxu0 %v1613
  %1657 = vmatpush1.bf16.msra.mxu0 %v1612
  %1658 = vmatprep.subr.bf16.mxu0 %v1615
  %1659 = vmatpush1.bf16.msra.mxu0 %v1614
  %1660 = vmatprep.subr.bf16.mxu0 %v1617
  %1661 = vmatpush1.bf16.msra.mxu0 %v1616
  %1662 = vmatprep.subr.bf16.mxu0 %v1619
  %1663 = vmatpush1.bf16.msra.mxu0 %v1618
  %1664 = vmatprep.subr.bf16.mxu0 0
  %1665 = vmatpush1.bf16.msra.mxu0 0
  %1666 = vmatprep.subr.bf16.mxu0 0
  %1667 = vmatpush1.bf16.msra.mxu0 0
  %1668 = vmatprep.subr.bf16.mxu0 0
  %1669 = vmatpush1.bf16.msra.mxu0 0
  %1670 = vmatprep.subr.bf16.mxu0 0
  %1671 = vmatpush1.bf16.msra.mxu0 0
  %1672 = vmatprep.subr.bf16.mxu0 0
  %1673 = vmatpush1.bf16.msra.mxu0 0
  %1674 = vmatprep.subr.bf16.mxu0 0
  %1675 = vmatpush1.bf16.msra.mxu0 0
  %1676 = vmatprep.subr.bf16.mxu0 0
  %1677 = vmatpush1.bf16.msra.mxu0 0
  %1678 = vmatprep.subr.bf16.mxu0 0
  %1679 = vmatpush1.bf16.msra.mxu0 0
  %1680 = vmatprep.subr.bf16.mxu0 0
  %1681 = vmatpush1.bf16.msra.mxu0 0
  %1682 = vmatprep.subr.bf16.mxu0 0
  %1683 = vmatpush1.bf16.msra.mxu0 0
  %1684 = vmatprep.mubr.bf16.mxu0 0
  %1685 = vmatmul.mubr.bf16.gmra.mrb[0].mxu0 %v1641
  %v1686 = vpop.f32.mrb[0].mxu0
  %v1687 = vadd.f32 0.0, %v1686
  %v1688 = vpop.f32.mrb[0].mxu0
  %v1689 = vadd.f32 0.0, %v1688
  %v1690 = vpop.f32.mrb[0].mxu0
  %v1691 = vadd.f32 0.0, %v1690
  %v1692 = vpop.f32.mrb[0].mxu0
  %v1693 = vadd.f32 0.0, %v1692
  %1694 = vmatprep.mubr.bf16.mxu0 0
  %1695 = vmatmul.mubr.bf16.gmra.mrb[0].mxu0 %v1644
  %v1696 = vpop.f32.mrb[0].mxu0
  %v1697 = vadd.f32 0.0, %v1696
  %v1698 = vpop.f32.mrb[0].mxu0
  %v1699 = vadd.f32 0.0, %v1698
  %v1700 = vpop.f32.mrb[0].mxu0
  %v1701 = vadd.f32 0.0, %v1700
  %v1702 = vpop.f32.mrb[0].mxu0
  %v1703 = vadd.f32 0.0, %v1702
  %1704 = vmatprep.mubr.bf16.mxu0 0
  %1705 = vmatmul.mubr.bf16.gmra.mrb[0].mxu0 %v1647
  %v1706 = vpop.f32.mrb[0].mxu0
  %v1707 = vadd.f32 0.0, %v1706
  %v1708 = vpop.f32.mrb[0].mxu0
  %v1709 = vadd.f32 0.0, %v1708
  %v1710 = vpop.f32.mrb[0].mxu0
  %v1711 = vadd.f32 0.0, %v1710
  %v1712 = vpop.f32.mrb[0].mxu0
  %v1713 = vadd.f32 0.0, %v1712
  %1714 = vmatprep.mubr.bf16.mxu0 0
  %1715 = vmatmul.mubr.bf16.gmra.mrb[0].mxu0 %v1650
  %v1716 = vpop.f32.mrb[0].mxu0
  %v1717 = vadd.f32 0.0, %v1716
  %v1718 = vpop.f32.mrb[0].mxu0
  %v1719 = vadd.f32 0.0, %v1718
  %v1720 = vpop.f32.mrb[0].mxu0
  %v1721 = vadd.f32 0.0, %v1720
  %v1722 = vpop.f32.mrb[0].mxu0
  %v1723 = vadd.f32 0.0, %v1722
  %1724 = vdwg.mxu0
  %v1725 = vsel %vm1496, %v1689, 0.0
  %v1726 = vadd.f32 %v1687, %v1725
  %1727 = vadd.xlane.f32.xlu0 %v1726
  %v1728 = vpop.xlane.xlu0 %1727
  %v1729 = vsel %vm1496, %v1693, 0.0
  %v1730 = vadd.f32 %v1691, %v1729
  %1731 = vadd.xlane.f32.xlu0 %v1730
  %v1732 = vpop.xlane.xlu0 %1731
  %v1733 = vsel %vm1496, %v1699, 0.0
  %v1734 = vadd.f32 %v1697, %v1733
  %1735 = vadd.xlane.f32.xlu0 %v1734
  %v1736 = vpop.xlane.xlu0 %1735
  %v1737 = vsel %vm1496, %v1703, 0.0
  %v1738 = vadd.f32 %v1701, %v1737
  %1739 = vadd.xlane.f32.xlu0 %v1738
  %v1740 = vpop.xlane.xlu0 %1739
  %v1741 = vsel %vm1496, %v1709, 0.0
  %v1742 = vadd.f32 %v1707, %v1741
  %1743 = vadd.xlane.f32.xlu0 %v1742
  %v1744 = vpop.xlane.xlu0 %1743
  %v1745 = vsel %vm1496, %v1713, 0.0
  %v1746 = vadd.f32 %v1711, %v1745
  %1747 = vadd.xlane.f32.xlu0 %v1746
  %v1748 = vpop.xlane.xlu0 %1747
  %v1749 = vsel %vm1496, %v1719, 0.0
  %v1750 = vadd.f32 %v1717, %v1749
  %1751 = vadd.xlane.f32.xlu0 %v1750
  %v1752 = vpop.xlane.xlu0 %1751
  %v1753 = vsel %vm1496, %v1723, 0.0
  %v1754 = vadd.f32 %v1721, %v1753
  %1755 = vadd.xlane.f32.xlu0 %v1754
  %v1756 = vpop.xlane.xlu0 %1755
  %v1757 = vmul.f32 %v1728, 0.007575758
  %v1758 = vmul.f32 %v1732, 0.007575758
  %v1759 = vmul.f32 %v1736, 0.007575758
  %v1760 = vmul.f32 %v1740, 0.007575758
  %v1761 = vmul.f32 %v1744, 0.007575758
  %v1762 = vmul.f32 %v1748, 0.007575758
  %v1763 = vmul.f32 %v1752, 0.007575758
  %v1764 = vmul.f32 %v1756, 0.007575758
  %v1765 = vsub.f32 %v1687, %v1757
  %v1766 = vsub.f32 %v1689, %v1757
  %v1767 = vsub.f32 %v1691, %v1758
  %v1768 = vsub.f32 %v1693, %v1758
  %v1769 = vsub.f32 %v1697, %v1759
  %v1770 = vsub.f32 %v1699, %v1759
  %v1771 = vsub.f32 %v1701, %v1760
  %v1772 = vsub.f32 %v1703, %v1760
  %v1773 = vsub.f32 %v1707, %v1761
  %v1774 = vsub.f32 %v1709, %v1761
  %v1775 = vsub.f32 %v1711, %v1762
  %v1776 = vsub.f32 %v1713, %v1762
  %v1777 = vsub.f32 %v1717, %v1763
  %v1778 = vsub.f32 %v1719, %v1763
  %v1779 = vsub.f32 %v1721, %v1764
  %v1780 = vsub.f32 %v1723, %v1764
  %v1781 = vmul.f32 %v1765, %v1765
  %v1782 = vmul.f32 %v1766, %v1766
  %v1783 = vmul.f32 %v1767, %v1767
  %v1784 = vmul.f32 %v1768, %v1768
  %v1785 = vmul.f32 %v1769, %v1769
  %v1786 = vmul.f32 %v1770, %v1770
  %v1787 = vmul.f32 %v1771, %v1771
  %v1788 = vmul.f32 %v1772, %v1772
  %v1789 = vmul.f32 %v1773, %v1773
  %v1790 = vmul.f32 %v1774, %v1774
  %v1791 = vmul.f32 %v1775, %v1775
  %v1792 = vmul.f32 %v1776, %v1776
  %v1793 = vmul.f32 %v1777, %v1777
  %v1794 = vmul.f32 %v1778, %v1778
  %v1795 = vmul.f32 %v1779, %v1779
  %v1796 = vmul.f32 %v1780, %v1780
  %v1797 = vsel %vm1496, %v1782, 0.0
  %v1798 = vadd.f32 %v1781, %v1797
  %1799 = vadd.xlane.f32.xlu0 %v1798
  %v1800 = vpop.xlane.xlu0 %1799
  %v1801 = vsel %vm1496, %v1784, 0.0
  %v1802 = vadd.f32 %v1783, %v1801
  %1803 = vadd.xlane.f32.xlu0 %v1802
  %v1804 = vpop.xlane.xlu0 %1803
  %v1805 = vsel %vm1496, %v1786, 0.0
  %v1806 = vadd.f32 %v1785, %v1805
  %1807 = vadd.xlane.f32.xlu0 %v1806
  %v1808 = vpop.xlane.xlu0 %1807
  %v1809 = vsel %vm1496, %v1788, 0.0
  %v1810 = vadd.f32 %v1787, %v1809
  %1811 = vadd.xlane.f32.xlu0 %v1810
  %v1812 = vpop.xlane.xlu0 %1811
  %v1813 = vsel %vm1496, %v1790, 0.0
  %v1814 = vadd.f32 %v1789, %v1813
  %1815 = vadd.xlane.f32.xlu0 %v1814
  %v1816 = vpop.xlane.xlu0 %1815
  %v1817 = vsel %vm1496, %v1792, 0.0
  %v1818 = vadd.f32 %v1791, %v1817
  %1819 = vadd.xlane.f32.xlu0 %v1818
  %v1820 = vpop.xlane.xlu0 %1819
  %v1821 = vsel %vm1496, %v1794, 0.0
  %v1822 = vadd.f32 %v1793, %v1821
  %1823 = vadd.xlane.f32.xlu0 %v1822
  %v1824 = vpop.xlane.xlu0 %1823
  %v1825 = vsel %vm1496, %v1796, 0.0
  %v1826 = vadd.f32 %v1795, %v1825
  %1827 = vadd.xlane.f32.xlu0 %v1826
  %v1828 = vpop.xlane.xlu0 %1827
  %v1829 = vmul.f32 %v1800, 0.007575758
  %v1830 = vmul.f32 %v1804, 0.007575758
  %v1831 = vmul.f32 %v1808, 0.007575758
  %v1832 = vmul.f32 %v1812, 0.007575758
  %v1833 = vmul.f32 %v1816, 0.007575758
  %v1834 = vmul.f32 %v1820, 0.007575758
  %v1835 = vmul.f32 %v1824, 0.007575758
  %v1836 = vmul.f32 %v1828, 0.007575758
  %v1837 = vld [vmem:[%s2 + $0x60] sm:$0xff]
  %v1838 = vld [vmem:[%s2 + $0x68] sm:$0xff]
  %v1839 = vld [vmem:[%s2 + $0x70] sm:$0xff]
  %v1840 = vld [vmem:[%s2 + $0x78] sm:$0xff]
  %v1841 = vld [vmem:[%s2 + $0x80] sm:$0xff]
  %v1842 = vld [vmem:[%s2 + $0x88] sm:$0xff]
  %v1843 = vld [vmem:[%s2 + $0x90] sm:$0xff]
  %v1844 = vld [vmem:[%s2 + $0x98] sm:$0xff]
  %v1845 = vadd.f32 %v1829, 1e-05
  %v1846 = vadd.f32 %v1830, 1e-05
  %v1847 = vadd.f32 %v1831, 1e-05
  %v1848 = vadd.f32 %v1832, 1e-05
  %v1849 = vadd.f32 %v1833, 1e-05
  %v1850 = vadd.f32 %v1834, 1e-05
  %v1851 = vadd.f32 %v1835, 1e-05
  %v1852 = vadd.f32 %v1836, 1e-05
  %v1853 = vrsqrt.pop %v1845
  %v1854 = vrsqrt.pop %v1846
  %v1855 = vrsqrt.pop %v1847
  %v1856 = vrsqrt.pop %v1848
  %v1857 = vrsqrt.pop %v1849
  %v1858 = vrsqrt.pop %v1850
  %v1859 = vrsqrt.pop %v1851
  %v1860 = vrsqrt.pop %v1852
  %v1861 = vmul.f32 %v1837, %v1853
  %v1862 = vmul.f32 %v1838, %v1854
  %v1863 = vmul.f32 %v1839, %v1855
  %v1864 = vmul.f32 %v1840, %v1856
  %v1865 = vmul.f32 %v1841, %v1857
  %v1866 = vmul.f32 %v1842, %v1858
  %v1867 = vmul.f32 %v1843, %v1859
  %v1868 = vmul.f32 %v1844, %v1860
  %1870 = vset.pattern.permute.xlu0 0
  %1871 = vperm.xlu0 %1870, %v1861
  %v1872 = vpop.permute.xlu0 %1871
  %1875 = vset.pattern.permute.xlu0 0
  %1876 = vperm.xlu0 %1875, %v1862
  %v1877 = vpop.permute.xlu0 %1876
  %1880 = vset.pattern.permute.xlu0 0
  %1881 = vperm.xlu0 %1880, %v1863
  %v1882 = vpop.permute.xlu0 %1881
  %1885 = vset.pattern.permute.xlu0 0
  %1886 = vperm.xlu0 %1885, %v1864
  %v1887 = vpop.permute.xlu0 %1886
  %1890 = vset.pattern.permute.xlu0 0
  %1891 = vperm.xlu0 %1890, %v1865
  %v1892 = vpop.permute.xlu0 %1891
  %1895 = vset.pattern.permute.xlu0 0
  %1896 = vperm.xlu0 %1895, %v1866
  %v1897 = vpop.permute.xlu0 %1896
  %1900 = vset.pattern.permute.xlu0 0
  %1901 = vperm.xlu0 %1900, %v1867
  %v1902 = vpop.permute.xlu0 %1901
  %1905 = vset.pattern.permute.xlu0 0
  %1906 = vperm.xlu0 %1905, %v1868
  %v1907 = vpop.permute.xlu0 %1906
  %v1909 = vmul.f32 %v1765, %v1872
  %v1910 = vmul.f32 %v1766, %v1872
  %v1911 = vmul.f32 %v1767, %v1877
  %v1912 = vmul.f32 %v1768, %v1877
  %v1913 = vmul.f32 %v1769, %v1882
  %v1914 = vmul.f32 %v1770, %v1882
  %v1915 = vmul.f32 %v1771, %v1887
  %v1916 = vmul.f32 %v1772, %v1887
  %v1917 = vmul.f32 %v1773, %v1892
  %v1918 = vmul.f32 %v1774, %v1892
  %v1919 = vmul.f32 %v1775, %v1897
  %v1920 = vmul.f32 %v1776, %v1897
  %v1921 = vmul.f32 %v1777, %v1902
  %v1922 = vmul.f32 %v1778, %v1902
  %v1923 = vmul.f32 %v1779, %v1907
  %v1924 = vmul.f32 %v1780, %v1907
  %1926 = vset.pattern.permute.xlu0 1
  %1927 = vperm.xlu0 %1926, %v1837
  %v1928 = vpop.permute.xlu0 %1927
  %1931 = vset.pattern.permute.xlu0 1
  %1932 = vperm.xlu0 %1931, %v1838
  %v1933 = vpop.permute.xlu0 %1932
  %1936 = vset.pattern.permute.xlu0 1
  %1937 = vperm.xlu0 %1936, %v1839
  %v1938 = vpop.permute.xlu0 %1937
  %1941 = vset.pattern.permute.xlu0 1
  %1942 = vperm.xlu0 %1941, %v1840
  %v1943 = vpop.permute.xlu0 %1942
  %1946 = vset.pattern.permute.xlu0 1
  %1947 = vperm.xlu0 %1946, %v1841
  %v1948 = vpop.permute.xlu0 %1947
  %1951 = vset.pattern.permute.xlu0 1
  %1952 = vperm.xlu0 %1951, %v1842
  %v1953 = vpop.permute.xlu0 %1952
  %1956 = vset.pattern.permute.xlu0 1
  %1957 = vperm.xlu0 %1956, %v1843
  %v1958 = vpop.permute.xlu0 %1957
  %1961 = vset.pattern.permute.xlu0 1
  %1962 = vperm.xlu0 %1961, %v1844
  %v1963 = vpop.permute.xlu0 %1962
  %v1965 = vadd.f32 %v1909, %v1928
  %v1966 = vadd.f32 %v1910, %v1928
  %v1967 = vadd.f32 %v1911, %v1933
  %v1968 = vadd.f32 %v1912, %v1933
  %v1969 = vadd.f32 %v1913, %v1938
  %v1970 = vadd.f32 %v1914, %v1938
  %v1971 = vadd.f32 %v1915, %v1943
  %v1972 = vadd.f32 %v1916, %v1943
  %v1973 = vadd.f32 %v1917, %v1948
  %v1974 = vadd.f32 %v1918, %v1948
  %v1975 = vadd.f32 %v1919, %v1953
  %v1976 = vadd.f32 %v1920, %v1953
  %v1977 = vadd.f32 %v1921, %v1958
  %v1978 = vadd.f32 %v1922, %v1958
  %v1979 = vadd.f32 %v1923, %v1963
  %v1980 = vadd.f32 %v1924, %v1963
  %v1981 = vxor.u32 %v1965, 2147483648
  %v1982 = vxor.u32 %v1966, 2147483648
  %v1983 = vxor.u32 %v1967, 2147483648
  %v1984 = vxor.u32 %v1968, 2147483648
  %v1985 = vxor.u32 %v1969, 2147483648
  %v1986 = vxor.u32 %v1970, 2147483648
  %v1987 = vxor.u32 %v1971, 2147483648
  %v1988 = vxor.u32 %v1972, 2147483648
  %v1989 = vxor.u32 %v1973, 2147483648
  %v1990 = vxor.u32 %v1974, 2147483648
  %v1991 = vxor.u32 %v1975, 2147483648
  %v1992 = vxor.u32 %v1976, 2147483648
  %v1993 = vxor.u32 %v1977, 2147483648
  %v1994 = vxor.u32 %v1978, 2147483648
  %v1995 = vxor.u32 %v1979, 2147483648
  %v1996 = vxor.u32 %v1980, 2147483648
  %v1997 = vmul.f32 %v1981, 1.442695
  %v1998 = vpow.pop %v1997
  %v1999 = vmul.f32 %v1982, 1.442695
  %v2000 = vpow.pop %v1999
  %v2001 = vmul.f32 %v1983, 1.442695
  %v2002 = vpow.pop %v2001
  %v2003 = vmul.f32 %v1984, 1.442695
  %v2004 = vpow.pop %v2003
  %v2005 = vmul.f32 %v1985, 1.442695
  %v2006 = vpow.pop %v2005
  %v2007 = vmul.f32 %v1986, 1.442695
  %v2008 = vpow.pop %v2007
  %v2009 = vmul.f32 %v1987, 1.442695
  %v2010 = vpow.pop %v2009
  %v2011 = vmul.f32 %v1988, 1.442695
  %v2012 = vpow.pop %v2011
  %v2013 = vmul.f32 %v1989, 1.442695
  %v2014 = vpow.pop %v2013
  %v2015 = vmul.f32 %v1990, 1.442695
  %v2016 = vpow.pop %v2015
  %v2017 = vmul.f32 %v1991, 1.442695
  %v2018 = vpow.pop %v2017
  %v2019 = vmul.f32 %v1992, 1.442695
  %v2020 = vpow.pop %v2019
  %v2021 = vmul.f32 %v1993, 1.442695
  %v2022 = vpow.pop %v2021
  %v2023 = vmul.f32 %v1994, 1.442695
  %v2024 = vpow.pop %v2023
  %v2025 = vmul.f32 %v1995, 1.442695
  %v2026 = vpow.pop %v2025
  %v2027 = vmul.f32 %v1996, 1.442695
  %v2028 = vpow.pop %v2027
  %v2029 = vadd.f32 %v1998, 1.0
  %v2030 = vadd.f32 %v2000, 1.0
  %v2031 = vadd.f32 %v2002, 1.0
  %v2032 = vadd.f32 %v2004, 1.0
  %v2033 = vadd.f32 %v2006, 1.0
  %v2034 = vadd.f32 %v2008, 1.0
  %v2035 = vadd.f32 %v2010, 1.0
  %v2036 = vadd.f32 %v2012, 1.0
  %v2037 = vadd.f32 %v2014, 1.0
  %v2038 = vadd.f32 %v2016, 1.0
  %v2039 = vadd.f32 %v2018, 1.0
  %v2040 = vadd.f32 %v2020, 1.0
  %v2041 = vadd.f32 %v2022, 1.0
  %v2042 = vadd.f32 %v2024, 1.0
  %v2043 = vadd.f32 %v2026, 1.0
  %v2044 = vadd.f32 %v2028, 1.0
  %v2045 = vrcp.pop %v2029
  %v2046 = vmul.f32 1.0, %v2045
  %v2047 = vrcp.pop %v2030
  %v2048 = vmul.f32 1.0, %v2047
  %v2049 = vrcp.pop %v2031
  %v2050 = vmul.f32 1.0, %v2049
  %v2051 = vrcp.pop %v2032
  %v2052 = vmul.f32 1.0, %v2051
  %v2053 = vrcp.pop %v2033
  %v2054 = vmul.f32 1.0, %v2053
  %v2055 = vrcp.pop %v2034
  %v2056 = vmul.f32 1.0, %v2055
  %v2057 = vrcp.pop %v2035
  %v2058 = vmul.f32 1.0, %v2057
  %v2059 = vrcp.pop %v2036
  %v2060 = vmul.f32 1.0, %v2059
  %v2061 = vrcp.pop %v2037
  %v2062 = vmul.f32 1.0, %v2061
  %v2063 = vrcp.pop %v2038
  %v2064 = vmul.f32 1.0, %v2063
  %v2065 = vrcp.pop %v2039
  %v2066 = vmul.f32 1.0, %v2065
  %v2067 = vrcp.pop %v2040
  %v2068 = vmul.f32 1.0, %v2067
  %v2069 = vrcp.pop %v2041
  %v2070 = vmul.f32 1.0, %v2069
  %v2071 = vrcp.pop %v2042
  %v2072 = vmul.f32 1.0, %v2071
  %v2073 = vrcp.pop %v2043
  %v2074 = vmul.f32 1.0, %v2073
  %v2075 = vrcp.pop %v2044
  %v2076 = vmul.f32 1.0, %v2075
  %v2077 = vmul.f32 %v1965, %v2046
  %v2078 = vmul.f32 %v1966, %v2048
  %v2079 = vmul.f32 %v1967, %v2050
  %v2080 = vmul.f32 %v1968, %v2052
  %v2081 = vmul.f32 %v1969, %v2054
  %v2082 = vmul.f32 %v1970, %v2056
  %v2083 = vmul.f32 %v1971, %v2058
  %v2084 = vmul.f32 %v1972, %v2060
  %v2085 = vmul.f32 %v1973, %v2062
  %v2086 = vmul.f32 %v1974, %v2064
  %v2087 = vmul.f32 %v1975, %v2066
  %v2088 = vmul.f32 %v1976, %v2068
  %v2089 = vmul.f32 %v1977, %v2070
  %v2090 = vmul.f32 %v1978, %v2072
  %v2091 = vmul.f32 %v1979, %v2074
  %v2092 = vmul.f32 %v1980, %v2076
  %vm2093 = vcmask 523264
  %2094 = vst.msk [vmem:[#allocation2] sm:$0xff] %vm2093, %v2077
  %2095 = vst.msk [vmem:[#allocation2 + $0x10] sm:$0xff] %vm2093, %v2079
  %2096 = vst.msk [vmem:[#allocation2 + $0x20] sm:$0xff] %vm2093, %v2081
  %2097 = vst.msk [vmem:[#allocation2 + $0x30] sm:$0xff] %vm2093, %v2083
  %2098 = vst.msk [vmem:[#allocation2 + $0x40] sm:$0xff] %vm2093, %v2085
  %2099 = vst.msk [vmem:[#allocation2 + $0x50] sm:$0xff] %vm2093, %v2087
  %2100 = vst.msk [vmem:[#allocation2 + $0x60] sm:$0xff] %vm2093, %v2089
  %2101 = vst.msk [vmem:[#allocation2 + $0x70] sm:$0xff] %vm2093, %v2091
  %2110 = vrot.lane.b32.xlu0 %v2077, 127
  %v2111 = vpop.permute.xlu0 %2110
  %2112 = vrot.lane.b32.xlu0 %v2079, 127
  %v2113 = vpop.permute.xlu0 %2112
  %2114 = vrot.lane.b32.xlu0 %v2081, 127
  %v2115 = vpop.permute.xlu0 %2114
  %2116 = vrot.lane.b32.xlu0 %v2083, 127
  %v2117 = vpop.permute.xlu0 %2116
  %2118 = vrot.lane.b32.xlu0 %v2085, 127
  %v2119 = vpop.permute.xlu0 %2118
  %2120 = vrot.lane.b32.xlu0 %v2087, 127
  %v2121 = vpop.permute.xlu0 %2120
  %2122 = vrot.lane.b32.xlu0 %v2089, 127
  %v2123 = vpop.permute.xlu0 %2122
  %2124 = vrot.lane.b32.xlu0 %v2091, 127
  %v2125 = vpop.permute.xlu0 %2124
  %2134 = vst.msk [vmem:[#allocation2 + $0x80] sm:$0xff] %vm2093, %v2111
  %2135 = vst.msk [vmem:[#allocation2 + $0x90] sm:$0xff] %vm2093, %v2113
  %2136 = vst.msk [vmem:[#allocation2 + $0xa0] sm:$0xff] %vm2093, %v2115
  %2137 = vst.msk [vmem:[#allocation2 + $0xb0] sm:$0xff] %vm2093, %v2117
  %2138 = vst.msk [vmem:[#allocation2 + $0xc0] sm:$0xff] %vm2093, %v2119
  %2139 = vst.msk [vmem:[#allocation2 + $0xd0] sm:$0xff] %vm2093, %v2121
  %2140 = vst.msk [vmem:[#allocation2 + $0xe0] sm:$0xff] %vm2093, %v2123
  %2141 = vst.msk [vmem:[#allocation2 + $0xf0] sm:$0xff] %vm2093, %v2125
  %2142 = vrot.lane.b32.xlu0 %v2077, 126
  %v2143 = vpop.permute.xlu0 %2142
  %2144 = vrot.lane.b32.xlu0 %v2079, 126
  %v2145 = vpop.permute.xlu0 %2144
  %2146 = vrot.lane.b32.xlu0 %v2081, 126
  %v2147 = vpop.permute.xlu0 %2146
  %2148 = vrot.lane.b32.xlu0 %v2083, 126
  %v2149 = vpop.permute.xlu0 %2148
  %2150 = vrot.lane.b32.xlu0 %v2085, 126
  %v2151 = vpop.permute.xlu0 %2150
  %2152 = vrot.lane.b32.xlu0 %v2087, 126
  %v2153 = vpop.permute.xlu0 %2152
  %2154 = vrot.lane.b32.xlu0 %v2089, 126
  %v2155 = vpop.permute.xlu0 %2154
  %2156 = vrot.lane.b32.xlu0 %v2091, 126
  %v2157 = vpop.permute.xlu0 %2156
  %2166 = vst.msk [vmem:[#allocation2 + $0x100] sm:$0xff] %vm2093, %v2143
  %2167 = vst.msk [vmem:[#allocation2 + $0x110] sm:$0xff] %vm2093, %v2145
  %2168 = vst.msk [vmem:[#allocation2 + $0x120] sm:$0xff] %vm2093, %v2147
  %2169 = vst.msk [vmem:[#allocation2 + $0x130] sm:$0xff] %vm2093, %v2149
  %2170 = vst.msk [vmem:[#allocation2 + $0x140] sm:$0xff] %vm2093, %v2151
  %2171 = vst.msk [vmem:[#allocation2 + $0x150] sm:$0xff] %vm2093, %v2153
  %2172 = vst.msk [vmem:[#allocation2 + $0x160] sm:$0xff] %vm2093, %v2155
  %2173 = vst.msk [vmem:[#allocation2 + $0x170] sm:$0xff] %vm2093, %v2157
  %2182 = vrot.lane.b32.xlu0 %v2078, 126
  %v2183 = vpop.permute.xlu0 %2182
  %2184 = vrot.lane.b32.xlu0 %v2080, 126
  %v2185 = vpop.permute.xlu0 %2184
  %2186 = vrot.lane.b32.xlu0 %v2082, 126
  %v2187 = vpop.permute.xlu0 %2186
  %2188 = vrot.lane.b32.xlu0 %v2084, 126
  %v2189 = vpop.permute.xlu0 %2188
  %2190 = vrot.lane.b32.xlu0 %v2086, 126
  %v2191 = vpop.permute.xlu0 %2190
  %2192 = vrot.lane.b32.xlu0 %v2088, 126
  %v2193 = vpop.permute.xlu0 %2192
  %2194 = vrot.lane.b32.xlu0 %v2090, 126
  %v2195 = vpop.permute.xlu0 %2194
  %2196 = vrot.lane.b32.xlu0 %v2092, 126
  %v2197 = vpop.permute.xlu0 %2196
  %v2198 = vsel %vm662, %v2143, %v2183
  %v2199 = vsel %vm662, %v2145, %v2185
  %v2200 = vsel %vm662, %v2147, %v2187
  %v2201 = vsel %vm662, %v2149, %v2189
  %v2202 = vsel %vm662, %v2151, %v2191
  %v2203 = vsel %vm662, %v2153, %v2193
  %v2204 = vsel %vm662, %v2155, %v2195
  %v2205 = vsel %vm662, %v2157, %v2197
  %vm2214 = vcmask 1048064
  %2215 = vst.msk [vmem:[#allocation2] sm:$0xff] %vm2214, %v2198
  %2216 = vst.msk [vmem:[#allocation2 + $0x10] sm:$0xff] %vm2214, %v2199
  %2217 = vst.msk [vmem:[#allocation2 + $0x20] sm:$0xff] %vm2214, %v2200
  %2218 = vst.msk [vmem:[#allocation2 + $0x30] sm:$0xff] %vm2214, %v2201
  %2219 = vst.msk [vmem:[#allocation2 + $0x40] sm:$0xff] %vm2214, %v2202
  %2220 = vst.msk [vmem:[#allocation2 + $0x50] sm:$0xff] %vm2214, %v2203
  %2221 = vst.msk [vmem:[#allocation2 + $0x60] sm:$0xff] %vm2214, %v2204
  %2222 = vst.msk [vmem:[#allocation2 + $0x70] sm:$0xff] %vm2214, %v2205
  %2223 = vrot.lane.b32.xlu0 %v2077, 125
  %v2224 = vpop.permute.xlu0 %2223
  %2225 = vrot.lane.b32.xlu0 %v2078, 125
  %v2226 = vpop.permute.xlu0 %2225
  %2227 = vrot.lane.b32.xlu0 %v2079, 125
  %v2228 = vpop.permute.xlu0 %2227
  %2229 = vrot.lane.b32.xlu0 %v2080, 125
  %v2230 = vpop.permute.xlu0 %2229
  %2231 = vrot.lane.b32.xlu0 %v2081, 125
  %v2232 = vpop.permute.xlu0 %2231
  %2233 = vrot.lane.b32.xlu0 %v2082, 125
  %v2234 = vpop.permute.xlu0 %2233
  %2235 = vrot.lane.b32.xlu0 %v2083, 125
  %v2236 = vpop.permute.xlu0 %2235
  %2237 = vrot.lane.b32.xlu0 %v2084, 125
  %v2238 = vpop.permute.xlu0 %2237
  %2239 = vrot.lane.b32.xlu0 %v2085, 125
  %v2240 = vpop.permute.xlu0 %2239
  %2241 = vrot.lane.b32.xlu0 %v2086, 125
  %v2242 = vpop.permute.xlu0 %2241
  %2243 = vrot.lane.b32.xlu0 %v2087, 125
  %v2244 = vpop.permute.xlu0 %2243
  %2245 = vrot.lane.b32.xlu0 %v2088, 125
  %v2246 = vpop.permute.xlu0 %2245
  %2247 = vrot.lane.b32.xlu0 %v2089, 125
  %v2248 = vpop.permute.xlu0 %2247
  %2249 = vrot.lane.b32.xlu0 %v2090, 125
  %v2250 = vpop.permute.xlu0 %2249
  %2251 = vrot.lane.b32.xlu0 %v2091, 125
  %v2252 = vpop.permute.xlu0 %2251
  %2253 = vrot.lane.b32.xlu0 %v2092, 125
  %v2254 = vpop.permute.xlu0 %2253
  %v2255 = vsel %vm683, %v2224, %v2226
  %v2256 = vsel %vm683, %v2228, %v2230
  %v2257 = vsel %vm683, %v2232, %v2234
  %v2258 = vsel %vm683, %v2236, %v2238
  %v2259 = vsel %vm683, %v2240, %v2242
  %v2260 = vsel %vm683, %v2244, %v2246
  %v2261 = vsel %vm683, %v2248, %v2250
  %v2262 = vsel %vm683, %v2252, %v2254
  %2271 = vst.msk [vmem:[#allocation2 + $0x80] sm:$0xff] %vm2214, %v2255
  %2272 = vst.msk [vmem:[#allocation2 + $0x90] sm:$0xff] %vm2214, %v2256
  %2273 = vst.msk [vmem:[#allocation2 + $0xa0] sm:$0xff] %vm2214, %v2257
  %2274 = vst.msk [vmem:[#allocation2 + $0xb0] sm:$0xff] %vm2214, %v2258
  %2275 = vst.msk [vmem:[#allocation2 + $0xc0] sm:$0xff] %vm2214, %v2259
  %2276 = vst.msk [vmem:[#allocation2 + $0xd0] sm:$0xff] %vm2214, %v2260
  %2277 = vst.msk [vmem:[#allocation2 + $0xe0] sm:$0xff] %vm2214, %v2261
  %2278 = vst.msk [vmem:[#allocation2 + $0xf0] sm:$0xff] %vm2214, %v2262
  %2279 = vrot.lane.b32.xlu0 %v2077, 124
  %v2280 = vpop.permute.xlu0 %2279
  %2281 = vrot.lane.b32.xlu0 %v2078, 124
  %v2282 = vpop.permute.xlu0 %2281
  %2283 = vrot.lane.b32.xlu0 %v2079, 124
  %v2284 = vpop.permute.xlu0 %2283
  %2285 = vrot.lane.b32.xlu0 %v2080, 124
  %v2286 = vpop.permute.xlu0 %2285
  %2287 = vrot.lane.b32.xlu0 %v2081, 124
  %v2288 = vpop.permute.xlu0 %2287
  %2289 = vrot.lane.b32.xlu0 %v2082, 124
  %v2290 = vpop.permute.xlu0 %2289
  %2291 = vrot.lane.b32.xlu0 %v2083, 124
  %v2292 = vpop.permute.xlu0 %2291
  %2293 = vrot.lane.b32.xlu0 %v2084, 124
  %v2294 = vpop.permute.xlu0 %2293
  %2295 = vrot.lane.b32.xlu0 %v2085, 124
  %v2296 = vpop.permute.xlu0 %2295
  %2297 = vrot.lane.b32.xlu0 %v2086, 124
  %v2298 = vpop.permute.xlu0 %2297
  %2299 = vrot.lane.b32.xlu0 %v2087, 124
  %v2300 = vpop.permute.xlu0 %2299
  %2301 = vrot.lane.b32.xlu0 %v2088, 124
  %v2302 = vpop.permute.xlu0 %2301
  %2303 = vrot.lane.b32.xlu0 %v2089, 124
  %v2304 = vpop.permute.xlu0 %2303
  %2305 = vrot.lane.b32.xlu0 %v2090, 124
  %v2306 = vpop.permute.xlu0 %2305
  %2307 = vrot.lane.b32.xlu0 %v2091, 124
  %v2308 = vpop.permute.xlu0 %2307
  %2309 = vrot.lane.b32.xlu0 %v2092, 124
  %v2310 = vpop.permute.xlu0 %2309
  %v2311 = vsel %vm45, %v2280, %v2282
  %v2312 = vsel %vm45, %v2284, %v2286
  %v2313 = vsel %vm45, %v2288, %v2290
  %v2314 = vsel %vm45, %v2292, %v2294
  %v2315 = vsel %vm45, %v2296, %v2298
  %v2316 = vsel %vm45, %v2300, %v2302
  %v2317 = vsel %vm45, %v2304, %v2306
  %v2318 = vsel %vm45, %v2308, %v2310
  %2327 = vst.msk [vmem:[#allocation2 + $0x100] sm:$0xff] %vm2214, %v2311
  %2328 = vst.msk [vmem:[#allocation2 + $0x110] sm:$0xff] %vm2214, %v2312
  %2329 = vst.msk [vmem:[#allocation2 + $0x120] sm:$0xff] %vm2214, %v2313
  %2330 = vst.msk [vmem:[#allocation2 + $0x130] sm:$0xff] %vm2214, %v2314
  %2331 = vst.msk [vmem:[#allocation2 + $0x140] sm:$0xff] %vm2214, %v2315
  %2332 = vst.msk [vmem:[#allocation2 + $0x150] sm:$0xff] %vm2214, %v2316
  %2333 = vst.msk [vmem:[#allocation2 + $0x160] sm:$0xff] %vm2214, %v2317
  %2334 = vst.msk [vmem:[#allocation2 + $0x170] sm:$0xff] %vm2214, %v2318
  %v2335 = vld [vmem:[%s1 + $0xa0] sm:$0xff]
  %v2336 = vld [vmem:[%s1 + $0xa8] sm:$0xff]
  %v2337 = vld [vmem:[%s1 + $0xb0] sm:$0xff]
  %v2338 = vld [vmem:[%s1 + $0xb8] sm:$0xff]
  %v2339 = vld [vmem:[%s1 + $0xc0] sm:$0xff]
  %v2340 = vld [vmem:[%s1 + $0xc8] sm:$0xff]
  %v2341 = vld [vmem:[%s1 + $0xd0] sm:$0xff]
  %v2342 = vld [vmem:[%s1 + $0xd8] sm:$0xff]
  %v2343 = vld [vmem:[#allocation2] sm:$0xff]
  %v2344 = vld [vmem:[#allocation2 + $0x10] sm:$0xff]
  %v2345 = vld [vmem:[#allocation2 + $0x20] sm:$0xff]
  %v2346 = vld [vmem:[#allocation2 + $0x30] sm:$0xff]
  %v2347 = vld [vmem:[#allocation2 + $0x40] sm:$0xff]
  %v2348 = vld [vmem:[#allocation2 + $0x50] sm:$0xff]
  %v2349 = vld [vmem:[#allocation2 + $0x60] sm:$0xff]
  %v2350 = vld [vmem:[#allocation2 + $0x70] sm:$0xff]
  %v2351 = vld [vmem:[#allocation2 + $0x80] sm:$0xff]
  %v2352 = vld [vmem:[#allocation2 + $0x90] sm:$0xff]
  %v2353 = vld [vmem:[#allocation2 + $0xa0] sm:$0xff]
  %v2354 = vld [vmem:[#allocation2 + $0xb0] sm:$0xff]
  %v2355 = vld [vmem:[#allocation2 + $0xc0] sm:$0xff]
  %v2356 = vld [vmem:[#allocation2 + $0xd0] sm:$0xff]
  %v2357 = vld [vmem:[#allocation2 + $0xe0] sm:$0xff]
  %v2358 = vld [vmem:[#allocation2 + $0xf0] sm:$0xff]
  %v2359 = vld [vmem:[#allocation2 + $0x100] sm:$0xff]
  %v2360 = vld [vmem:[#allocation2 + $0x110] sm:$0xff]
  %v2361 = vld [vmem:[#allocation2 + $0x120] sm:$0xff]
  %v2362 = vld [vmem:[#allocation2 + $0x130] sm:$0xff]
  %v2363 = vld [vmem:[#allocation2 + $0x140] sm:$0xff]
  %v2364 = vld [vmem:[#allocation2 + $0x150] sm:$0xff]
  %v2365 = vld [vmem:[#allocation2 + $0x160] sm:$0xff]
  %v2366 = vld [vmem:[#allocation2 + $0x170] sm:$0xff]
  %v2367 = vpack.c.bf16 %v2344, %v2343
  %v2368 = vpack.c.bf16 %v2346, %v2345
  %v2369 = vpack.c.bf16 %v2348, %v2347
  %v2370 = vpack.c.bf16 %v2350, %v2349
  %v2371 = vpack.c.bf16 %v2352, %v2351
  %v2372 = vpack.c.bf16 %v2354, %v2353
  %v2373 = vpack.c.bf16 %v2356, %v2355
  %v2374 = vpack.c.bf16 %v2358, %v2357
  %v2375 = vpack.c.bf16 %v2360, %v2359
  %v2376 = vpack.c.bf16 %v2362, %v2361
  %v2377 = vpack.c.bf16 %v2364, %v2363
  %v2378 = vpack.c.bf16 %v2366, %v2365
  %v2387 = vunpack.c.l.b16 %v2335
  %v2388 = vunpack.c.h.b16 %v2335
  %v2389 = vunpack.c.l.b16 %v2336
  %v2390 = vunpack.c.h.b16 %v2336
  %v2391 = vunpack.c.l.b16 %v2337
  %v2392 = vunpack.c.h.b16 %v2337
  %v2393 = vunpack.c.l.b16 %v2338
  %v2394 = vunpack.c.h.b16 %v2338
  %v2395 = vunpack.c.l.b16 %v2339
  %v2396 = vunpack.c.h.b16 %v2339
  %v2397 = vunpack.c.l.b16 %v2340
  %v2398 = vunpack.c.h.b16 %v2340
  %v2399 = vunpack.c.l.b16 %v2341
  %v2400 = vunpack.c.h.b16 %v2341
  %v2401 = vunpack.c.l.b16 %v2342
  %v2402 = vunpack.c.h.b16 %v2342
  %v2403 = vpack.c.b16 %v2389, %v2387
  %v2404 = vpack.c.b16 %v2390, %v2388
  %v2405 = vpack.c.b16 %v2393, %v2391
  %v2406 = vpack.c.b16 %v2394, %v2392
  %v2407 = vpack.c.b16 %v2397, %v2395
  %v2408 = vpack.c.b16 %v2398, %v2396
  %v2409 = vpack.c.b16 %v2401, %v2399
  %v2410 = vpack.c.b16 %v2402, %v2400
  %v2416 = vsel %vm2093, %v2404, 0
  %v2419 = vsel %vm2093, %v2406, 0
  %v2422 = vsel %vm2093, %v2408, 0
  %v2425 = vsel %vm2093, %v2410, 0
  %2427 = vmatprep.subr.bf16.mxu0 0
  %2428 = vmatpush1.bf16.msra.mxu0 %v2367
  %2429 = vmatprep.subr.bf16.mxu0 0
  %2430 = vmatpush1.bf16.msra.mxu0 %v2368
  %2431 = vmatprep.subr.bf16.mxu0 0
  %2432 = vmatpush1.bf16.msra.mxu0 %v2369
  %2433 = vmatprep.subr.bf16.mxu0 0
  %2434 = vmatpush1.bf16.msra.mxu0 %v2370
  %2435 = vmatprep.subr.bf16.mxu0 0
  %2436 = vmatpush1.bf16.msra.mxu0 %v2371
  %2437 = vmatprep.subr.bf16.mxu0 0
  %2438 = vmatpush1.bf16.msra.mxu0 %v2372
  %2439 = vmatprep.subr.bf16.mxu0 0
  %2440 = vmatpush1.bf16.msra.mxu0 %v2373
  %2441 = vmatprep.subr.bf16.mxu0 0
  %2442 = vmatpush1.bf16.msra.mxu0 %v2374
  %2443 = vmatprep.subr.bf16.mxu0 0
  %2444 = vmatpush1.bf16.msra.mxu0 %v2375
  %2445 = vmatprep.subr.bf16.mxu0 0
  %2446 = vmatpush1.bf16.msra.mxu0 %v2376
  %2447 = vmatprep.subr.bf16.mxu0 0
  %2448 = vmatpush1.bf16.msra.mxu0 %v2377
  %2449 = vmatprep.subr.bf16.mxu0 0
  %2450 = vmatpush1.bf16.msra.mxu0 %v2378
  %2451 = vmatprep.subr.bf16.mxu0 0
  %2452 = vmatpush1.bf16.msra.mxu0 0
  %2453 = vmatprep.subr.bf16.mxu0 0
  %2454 = vmatpush1.bf16.msra.mxu0 0
  %2455 = vmatprep.subr.bf16.mxu0 0
  %2456 = vmatpush1.bf16.msra.mxu0 0
  %2457 = vmatprep.subr.bf16.mxu0 0
  %2458 = vmatpush1.bf16.msra.mxu0 0
  %2459 = vmatprep.mubr.bf16.mxu0 %v2416
  %2460 = vmatmul.mubr.bf16.gmra.mrb[0].mxu0 %v2403
  %v2461 = vpop.f32.mrb[0].mxu0
  %v2462 = vadd.f32 0.0, %v2461
  %v2463 = vpop.f32.mrb[0].mxu0
  %v2464 = vpop.f32.mrb[0].mxu0
  %v2465 = vadd.f32 0.0, %v2464
  %v2466 = vpop.f32.mrb[0].mxu0
  %2467 = vmatprep.mubr.bf16.mxu0 %v2419
  %2468 = vmatmul.mubr.bf16.gmra.mrb[0].mxu0 %v2405
  %v2469 = vpop.f32.mrb[0].mxu0
  %v2470 = vadd.f32 0.0, %v2469
  %v2471 = vpop.f32.mrb[0].mxu0
  %v2472 = vpop.f32.mrb[0].mxu0
  %v2473 = vadd.f32 0.0, %v2472
  %v2474 = vpop.f32.mrb[0].mxu0
  %2475 = vmatprep.mubr.bf16.mxu0 %v2422
  %2476 = vmatmul.mubr.bf16.gmra.mrb[0].mxu0 %v2407
  %v2477 = vpop.f32.mrb[0].mxu0
  %v2478 = vadd.f32 0.0, %v2477
  %v2479 = vpop.f32.mrb[0].mxu0
  %v2480 = vpop.f32.mrb[0].mxu0
  %v2481 = vadd.f32 0.0, %v2480
  %v2482 = vpop.f32.mrb[0].mxu0
  %2483 = vmatprep.mubr.bf16.mxu0 %v2425
  %2484 = vmatmul.mubr.bf16.gmra.mrb[0].mxu0 %v2409
  %v2485 = vpop.f32.mrb[0].mxu0
  %v2486 = vadd.f32 0.0, %v2485
  %v2487 = vpop.f32.mrb[0].mxu0
  %v2488 = vpop.f32.mrb[0].mxu0
  %v2489 = vadd.f32 0.0, %v2488
  %v2490 = vpop.f32.mrb[0].mxu0
  %2491 = vdwg.mxu0
  %2492 = vadd.xlane.f32.xlu0 %v2462
  %v2493 = vpop.xlane.xlu0 %2492
  %2494 = vadd.xlane.f32.xlu0 %v2465
  %v2495 = vpop.xlane.xlu0 %2494
  %2496 = vadd.xlane.f32.xlu0 %v2470
  %v2497 = vpop.xlane.xlu0 %2496
  %2498 = vadd.xlane.f32.xlu0 %v2473
  %v2499 = vpop.xlane.xlu0 %2498
  %2500 = vadd.xlane.f32.xlu0 %v2478
  %v2501 = vpop.xlane.xlu0 %2500
  %2502 = vadd.xlane.f32.xlu0 %v2481
  %v2503 = vpop.xlane.xlu0 %2502
  %2504 = vadd.xlane.f32.xlu0 %v2486
  %v2505 = vpop.xlane.xlu0 %2504
  %2506 = vadd.xlane.f32.xlu0 %v2489
  %v2507 = vpop.xlane.xlu0 %2506
  %v2508 = vmul.f32 %v2493, 0.0078125
  %v2509 = vmul.f32 %v2495, 0.0078125
  %v2510 = vmul.f32 %v2497, 0.0078125
  %v2511 = vmul.f32 %v2499, 0.0078125
  %v2512 = vmul.f32 %v2501, 0.0078125
  %v2513 = vmul.f32 %v2503, 0.0078125
  %v2514 = vmul.f32 %v2505, 0.0078125
  %v2515 = vmul.f32 %v2507, 0.0078125
  %v2516 = vsub.f32 %v2462, %v2508
  %v2517 = vsub.f32 %v2465, %v2509
  %v2518 = vsub.f32 %v2470, %v2510
  %v2519 = vsub.f32 %v2473, %v2511
  %v2520 = vsub.f32 %v2478, %v2512
  %v2521 = vsub.f32 %v2481, %v2513
  %v2522 = vsub.f32 %v2486, %v2514
  %v2523 = vsub.f32 %v2489, %v2515
  %v2524 = vmul.f32 %v2516, %v2516
  %v2525 = vmul.f32 %v2517, %v2517
  %v2526 = vmul.f32 %v2518, %v2518
  %v2527 = vmul.f32 %v2519, %v2519
  %v2528 = vmul.f32 %v2520, %v2520
  %v2529 = vmul.f32 %v2521, %v2521
  %v2530 = vmul.f32 %v2522, %v2522
  %v2531 = vmul.f32 %v2523, %v2523
  %2532 = vadd.xlane.f32.xlu0 %v2524
  %v2533 = vpop.xlane.xlu0 %2532
  %2534 = vadd.xlane.f32.xlu0 %v2525
  %v2535 = vpop.xlane.xlu0 %2534
  %2536 = vadd.xlane.f32.xlu0 %v2526
  %v2537 = vpop.xlane.xlu0 %2536
  %2538 = vadd.xlane.f32.xlu0 %v2527
  %v2539 = vpop.xlane.xlu0 %2538
  %2540 = vadd.xlane.f32.xlu0 %v2528
  %v2541 = vpop.xlane.xlu0 %2540
  %2542 = vadd.xlane.f32.xlu0 %v2529
  %v2543 = vpop.xlane.xlu0 %2542
  %2544 = vadd.xlane.f32.xlu0 %v2530
  %v2545 = vpop.xlane.xlu0 %2544
  %2546 = vadd.xlane.f32.xlu0 %v2531
  %v2547 = vpop.xlane.xlu0 %2546
  %v2548 = vmul.f32 %v2533, 0.0078125
  %v2549 = vmul.f32 %v2535, 0.0078125
  %v2550 = vmul.f32 %v2537, 0.0078125
  %v2551 = vmul.f32 %v2539, 0.0078125
  %v2552 = vmul.f32 %v2541, 0.0078125
  %v2553 = vmul.f32 %v2543, 0.0078125
  %v2554 = vmul.f32 %v2545, 0.0078125
  %v2555 = vmul.f32 %v2547, 0.0078125
  %v2556 = vld [vmem:[%s2 + $0xa0] sm:$0xff]
  %v2557 = vld [vmem:[%s2 + $0xa8] sm:$0xff]
  %v2558 = vld [vmem:[%s2 + $0xb0] sm:$0xff]
  %v2559 = vld [vmem:[%s2 + $0xb8] sm:$0xff]
  %v2560 = vld [vmem:[%s2 + $0xc0] sm:$0xff]
  %v2561 = vld [vmem:[%s2 + $0xc8] sm:$0xff]
  %v2562 = vld [vmem:[%s2 + $0xd0] sm:$0xff]
  %v2563 = vld [vmem:[%s2 + $0xd8] sm:$0xff]
  %v2564 = vadd.f32 %v2548, 1e-05
  %v2565 = vadd.f32 %v2549, 1e-05
  %v2566 = vadd.f32 %v2550, 1e-05
  %v2567 = vadd.f32 %v2551, 1e-05
  %v2568 = vadd.f32 %v2552, 1e-05
  %v2569 = vadd.f32 %v2553, 1e-05
  %v2570 = vadd.f32 %v2554, 1e-05
  %v2571 = vadd.f32 %v2555, 1e-05
  %v2572 = vrsqrt.pop %v2564
  %v2573 = vrsqrt.pop %v2565
  %v2574 = vrsqrt.pop %v2566
  %v2575 = vrsqrt.pop %v2567
  %v2576 = vrsqrt.pop %v2568
  %v2577 = vrsqrt.pop %v2569
  %v2578 = vrsqrt.pop %v2570
  %v2579 = vrsqrt.pop %v2571
  %v2580 = vmul.f32 %v2556, %v2572
  %v2581 = vmul.f32 %v2557, %v2573
  %v2582 = vmul.f32 %v2558, %v2574
  %v2583 = vmul.f32 %v2559, %v2575
  %v2584 = vmul.f32 %v2560, %v2576
  %v2585 = vmul.f32 %v2561, %v2577
  %v2586 = vmul.f32 %v2562, %v2578
  %v2587 = vmul.f32 %v2563, %v2579
  %2589 = vset.pattern.permute.xlu0 0
  %2590 = vperm.xlu0 %2589, %v2580
  %v2591 = vpop.permute.xlu0 %2590
  %2594 = vset.pattern.permute.xlu0 0
  %2595 = vperm.xlu0 %2594, %v2581
  %v2596 = vpop.permute.xlu0 %2595
  %2599 = vset.pattern.permute.xlu0 0
  %2600 = vperm.xlu0 %2599, %v2582
  %v2601 = vpop.permute.xlu0 %2600
  %2604 = vset.pattern.permute.xlu0 0
  %2605 = vperm.xlu0 %2604, %v2583
  %v2606 = vpop.permute.xlu0 %2605
  %2609 = vset.pattern.permute.xlu0 0
  %2610 = vperm.xlu0 %2609, %v2584
  %v2611 = vpop.permute.xlu0 %2610
  %2614 = vset.pattern.permute.xlu0 0
  %2615 = vperm.xlu0 %2614, %v2585
  %v2616 = vpop.permute.xlu0 %2615
  %2619 = vset.pattern.permute.xlu0 0
  %2620 = vperm.xlu0 %2619, %v2586
  %v2621 = vpop.permute.xlu0 %2620
  %2624 = vset.pattern.permute.xlu0 0
  %2625 = vperm.xlu0 %2624, %v2587
  %v2626 = vpop.permute.xlu0 %2625
  %v2628 = vmul.f32 %v2516, %v2591
  %v2629 = vmul.f32 %v2517, %v2596
  %v2630 = vmul.f32 %v2518, %v2601
  %v2631 = vmul.f32 %v2519, %v2606
  %v2632 = vmul.f32 %v2520, %v2611
  %v2633 = vmul.f32 %v2521, %v2616
  %v2634 = vmul.f32 %v2522, %v2621
  %v2635 = vmul.f32 %v2523, %v2626
  %2637 = vset.pattern.permute.xlu0 1
  %2638 = vperm.xlu0 %2637, %v2556
  %v2639 = vpop.permute.xlu0 %2638
  %2642 = vset.pattern.permute.xlu0 1
  %2643 = vperm.xlu0 %2642, %v2557
  %v2644 = vpop.permute.xlu0 %2643
  %2647 = vset.pattern.permute.xlu0 1
  %2648 = vperm.xlu0 %2647, %v2558
  %v2649 = vpop.permute.xlu0 %2648
  %2652 = vset.pattern.permute.xlu0 1
  %2653 = vperm.xlu0 %2652, %v2559
  %v2654 = vpop.permute.xlu0 %2653
  %2657 = vset.pattern.permute.xlu0 1
  %2658 = vperm.xlu0 %2657, %v2560
  %v2659 = vpop.permute.xlu0 %2658
  %2662 = vset.pattern.permute.xlu0 1
  %2663 = vperm.xlu0 %2662, %v2561
  %v2664 = vpop.permute.xlu0 %2663
  %2667 = vset.pattern.permute.xlu0 1
  %2668 = vperm.xlu0 %2667, %v2562
  %v2669 = vpop.permute.xlu0 %2668
  %2672 = vset.pattern.permute.xlu0 1
  %2673 = vperm.xlu0 %2672, %v2563
  %v2674 = vpop.permute.xlu0 %2673
  %v2676 = vadd.f32 %v2628, %v2639
  %v2677 = vadd.f32 %v2629, %v2644
  %v2678 = vadd.f32 %v2630, %v2649
  %v2679 = vadd.f32 %v2631, %v2654
  %v2680 = vadd.f32 %v2632, %v2659
  %v2681 = vadd.f32 %v2633, %v2664
  %v2682 = vadd.f32 %v2634, %v2669
  %v2683 = vadd.f32 %v2635, %v2674
  %v2684 = vxor.u32 %v2676, 2147483648
  %v2685 = vxor.u32 %v2677, 2147483648
  %v2686 = vxor.u32 %v2678, 2147483648
  %v2687 = vxor.u32 %v2679, 2147483648
  %v2688 = vxor.u32 %v2680, 2147483648
  %v2689 = vxor.u32 %v2681, 2147483648
  %v2690 = vxor.u32 %v2682, 2147483648
  %v2691 = vxor.u32 %v2683, 2147483648
  %v2692 = vmul.f32 %v2684, 1.442695
  %v2693 = vpow.pop %v2692
  %v2694 = vmul.f32 %v2685, 1.442695
  %v2695 = vpow.pop %v2694
  %v2696 = vmul.f32 %v2686, 1.442695
  %v2697 = vpow.pop %v2696
  %v2698 = vmul.f32 %v2687, 1.442695
  %v2699 = vpow.pop %v2698
  %v2700 = vmul.f32 %v2688, 1.442695
  %v2701 = vpow.pop %v2700
  %v2702 = vmul.f32 %v2689, 1.442695
  %v2703 = vpow.pop %v2702
  %v2704 = vmul.f32 %v2690, 1.442695
  %v2705 = vpow.pop %v2704
  %v2706 = vmul.f32 %v2691, 1.442695
  %v2707 = vpow.pop %v2706
  %v2708 = vadd.f32 %v2693, 1.0
  %v2709 = vadd.f32 %v2695, 1.0
  %v2710 = vadd.f32 %v2697, 1.0
  %v2711 = vadd.f32 %v2699, 1.0
  %v2712 = vadd.f32 %v2701, 1.0
  %v2713 = vadd.f32 %v2703, 1.0
  %v2714 = vadd.f32 %v2705, 1.0
  %v2715 = vadd.f32 %v2707, 1.0
  %v2716 = vrcp.pop %v2708
  %v2717 = vmul.f32 1.0, %v2716
  %v2718 = vrcp.pop %v2709
  %v2719 = vmul.f32 1.0, %v2718
  %v2720 = vrcp.pop %v2710
  %v2721 = vmul.f32 1.0, %v2720
  %v2722 = vrcp.pop %v2711
  %v2723 = vmul.f32 1.0, %v2722
  %v2724 = vrcp.pop %v2712
  %v2725 = vmul.f32 1.0, %v2724
  %v2726 = vrcp.pop %v2713
  %v2727 = vmul.f32 1.0, %v2726
  %v2728 = vrcp.pop %v2714
  %v2729 = vmul.f32 1.0, %v2728
  %v2730 = vrcp.pop %v2715
  %v2731 = vmul.f32 1.0, %v2730
  %v2732 = vmul.f32 %v2676, %v2717
  %v2733 = vmul.f32 %v2677, %v2719
  %v2734 = vmul.f32 %v2678, %v2721
  %v2735 = vmul.f32 %v2679, %v2723
  %v2736 = vmul.f32 %v2680, %v2725
  %v2737 = vmul.f32 %v2681, %v2727
  %v2738 = vmul.f32 %v2682, %v2729
  %v2739 = vmul.f32 %v2683, %v2731
  %2740 = vst [vmem:[%s3] sm:$0xff] %v2732
  %2741 = vst [vmem:[%s3 + $0x8] sm:$0xff] %v2733
  %2742 = vst [vmem:[%s3 + $0x10] sm:$0xff] %v2734
  %2743 = vst [vmem:[%s3 + $0x18] sm:$0xff] %v2735
  %2744 = vst [vmem:[%s3 + $0x20] sm:$0xff] %v2736
  %2745 = vst [vmem:[%s3 + $0x28] sm:$0xff] %v2737
  %2746 = vst [vmem:[%s3 + $0x30] sm:$0xff] %v2738
  %2747 = vst [vmem:[%s3 + $0x38] sm:$0xff] %v2739
  // Predicated region
  $region14: #{cnn1d_low_forward.1} parent=0 // pred_check
    _
  $region15: #{cnn1d_low_forward.1} parent=0 // pred_check_branch
    %2749 = sbr.rel (0) target = $region17
  $region16: #{cnn1d_low_forward.1} parent=0 // pred_region
    _
  $region17: #{cnn1d_low_forward.1} parent=0 // pred_fallthru
    _
  // Predicated region
  $region18: #{cnn1d_low_forward.1} parent=0 // pred_check
    _
  $region19: #{cnn1d_low_forward.1} parent=0 // pred_check_branch
    %2751 = sbr.rel (0) target = $region21
  $region20: #{cnn1d_low_forward.1} parent=0 // pred_region
    _
  $region21: #{cnn1d_low_forward.1} parent=0 // pred_fallthru
    _

</llo_original>
